<compile_context>
chip_gen: v7x
topology: tpu7x:2x2x1
jax: 0.10.0
libtpu: 0.0.40
codegen_flags: <defaults>
</compile_context>

<pallas_src>
import functools

import jax
import jax.numpy as jnp
from jax.experimental import pallas as pl
from jax.experimental.pallas import tpu as pltpu


def _attention_kernel(x_ref, wq_ref, wkv_ref, wp_ref, bp_ref, o_ref,
                      *, num_heads, scale):
    # Per grid step (block_b batch elements):
    #   x_ref  : (Bt, N, C)  f32
    #   wq_ref : (C, C)   bf16     wkv_ref: (C, 2C) bf16
    #   wp_ref : (C, C)   bf16     bp_ref : (1, C)  f32
    #   o_ref  : (Bt, N, C)
    Bt, N, C = x_ref.shape
    hd = C // num_heads

    # Flatten batch*tokens so the MXU sees Bt*N rows per projection matmul.
    x2 = x_ref[...].reshape(Bt * N, C).astype(jnp.bfloat16)

    # q / kv projections (bf16 operands, f32 accumulation on the MXU).
    q = jnp.dot(x2, wq_ref[...],
                preferred_element_type=jnp.float32)            # (Bt*N, C)
    kv = jnp.dot(x2, wkv_ref[...],
                 preferred_element_type=jnp.float32)           # (Bt*N, 2C)

    # Fold the softmax scale into q once (cheaper than scaling NxN per head).
    q3 = (q * scale).reshape(Bt, N, C)
    k3 = kv[:, :C].reshape(Bt, N, C)
    v3 = kv[:, C:].reshape(Bt, N, C)

    # Per-head attention (static unroll; batched 3-D einsums over Bt,
    # no XLU transposes).
    head_outs = []
    for h in range(num_heads):
        sl = slice(h * hd, (h + 1) * hd)
        qh = q3[:, :, sl].astype(jnp.bfloat16)                 # (Bt, N, hd)
        kh = k3[:, :, sl].astype(jnp.bfloat16)                 # (Bt, N, hd)
        vh = v3[:, :, sl].astype(jnp.bfloat16)                 # (Bt, N, hd)

        s = jnp.einsum('bnd,bmd->bnm', qh, kh,
                       preferred_element_type=jnp.float32)     # (Bt, N, N)
        s = s - jnp.max(s, axis=-1, keepdims=True)
        p = jnp.exp(s)                                         # EUP
        inv = pl.reciprocal(jnp.sum(p, axis=-1, keepdims=True), approx=True)
        p = p * inv                                            # softmax (f32)

        oh = jnp.einsum('bnm,bmd->bnd', p.astype(jnp.bfloat16), vh,
                        preferred_element_type=jnp.float32)    # (Bt, N, hd)
        head_outs.append(oh)

    # Concatenate heads back to channels (== transpose(1,2).reshape(B,N,C)).
    o = jnp.concatenate(head_outs, axis=-1).reshape(Bt * N, C)

    # Output projection (with bias) -- single big MXU matmul, lane-dense store.
    out = jnp.dot(o.astype(jnp.bfloat16), wp_ref[...],
                  preferred_element_type=jnp.float32) + bp_ref[...]
    o_ref[...] = out.reshape(Bt, N, C).astype(o_ref.dtype)


def attention_pallas(x, wq, wkv, wproj, bproj, H, W, *, num_heads, scale,
                     block_b=None):
    # H, W are only needed by the sr_ratio>1 / linear=True branches (unused
    # with the module defaults implemented here).
    del H, W
    B, N, C = x.shape
    assert C % num_heads == 0
    assert wq.shape == (C, C) and wkv.shape == (C, 2 * C)
    assert wproj.shape == (C, C) and bproj.shape == (1, C)

    if block_b is None:
        # Smallest divisor of B that feeds the MXU >= 256 rows per step; if
        # none (small B*N), take all of B so M is as large as possible.
        block_b = B
        for d in range(1, B + 1):
            if B % d == 0 and d * N >= 256:
                block_b = d
                break
        # Keep the f32 per-head score / intermediate footprint modest
        # (<= ~16 MiB) so big B*N stays within VMEM on every generation.
        def _inter_bytes(bb):
            return (bb * N * 4 * C + 2 * bb * N * N) * 4
        while block_b > 1 and block_b % 2 == 0 and _inter_bytes(block_b) > (16 << 20):
            block_b //= 2
    assert B % block_b == 0
    n_steps = B // block_b

    # Cast constant weights to bf16 once on the host side (half the DMA bytes,
    # no per-step casts); bias stays f32 and is added to the f32 accumulator.
    wq_b = wq.astype(jnp.bfloat16)
    wkv_b = wkv.astype(jnp.bfloat16)
    wproj_b = wproj.astype(jnp.bfloat16)
    bproj_f = bproj.astype(jnp.float32)

    # Scoped-VMEM budget: double-buffered I/O blocks + (double-buffered)
    # weights + worst-case f32 intermediates, 2x headroom, clamped so it never
    # exceeds any generation's usable VMEM.
    f32, bf16 = 4, 2
    io_bytes = 2 * 2 * (block_b * N * C) * f32                  # x + out, 2-buf
    wt_bytes = 2 * ((C * C + C * 2 * C + C * C) * bf16 + C * f32)
    inter_bytes = (block_b * N * 4 * C + 2 * block_b * N * N) * f32
    vmem_budget = int(min(max(2 * (io_bytes + wt_bytes + inter_bytes),
                              4 << 20), 40 << 20))

    kernel = functools.partial(_attention_kernel,
                               num_heads=num_heads, scale=scale)

    return pl.pallas_call(
        kernel,
        out_shape=jax.ShapeDtypeStruct((B, N, C), x.dtype),
        grid_spec=pltpu.PrefetchScalarGridSpec(
            num_scalar_prefetch=0,
            grid=(n_steps,),
            in_specs=[
                pl.BlockSpec((block_b, N, C), lambda b: (b, 0, 0)),
                pl.BlockSpec((C, C), lambda b: (0, 0)),
                pl.BlockSpec((C, 2 * C), lambda b: (0, 0)),
                pl.BlockSpec((C, C), lambda b: (0, 0)),
                pl.BlockSpec((1, C), lambda b: (0, 0)),
            ],
            out_specs=pl.BlockSpec((block_b, N, C), lambda b: (b, 0, 0)),
        ),
        compiler_params=pltpu.CompilerParams(
            dimension_semantics=("parallel",),
            vmem_limit_bytes=vmem_budget),
    )(x, wq_b, wkv_b, wproj_b, bproj_f)


def attention_reference(x, wq, wkv, wproj, bproj, num_heads, scale):
    """Pure-JAX (f32) reference mirroring the PyTorch forward."""
    B, N, C = x.shape
    hd = C // num_heads
    q = (x @ wq).reshape(B, N, num_heads, hd).transpose(0, 2, 1, 3)
    kv = (x @ wkv).reshape(B, N, 2, num_heads, hd).transpose(2, 0, 3, 1, 4)
    k, v = kv[0], kv[1]
    attn = (q @ jnp.swapaxes(k, -2, -1)) * scale
    attn = jax.nn.softmax(attn, axis=-1)
    out = (attn @ v).transpose(0, 2, 1, 3).reshape(B, N, C)
    return out @ wproj + bproj


if __name__ == "__main__":
    # Small shapes consistent with the module: tokens of an H x W feature map.
    B, H, W = 2, 8, 8
    N = H * W                       # 64 tokens
    dim, num_heads = 128, 8         # head_dim = 16; C lane-dense (128)
    head_dim = dim // num_heads
    scale = head_dim ** (-0.5)      # qk_scale=None default

    key = jax.random.PRNGKey(0)
    kx, kq, kkv, kp = jax.random.split(key, 4)

    x = jax.random.normal(kx, (B, N, dim), jnp.float32)

    # Parameters follow _init_weights (trunc_normal std=0.02, zero bias);
    # stored as (in, out) so the kernel computes x @ W. qkv_bias=False.
    wq = 0.02 * jax.random.normal(kq, (dim, dim), jnp.float32)
    wkv = 0.02 * jax.random.normal(kkv, (dim, 2 * dim), jnp.float32)
    wproj = 0.02 * jax.random.normal(kp, (dim, dim), jnp.float32)
    bproj = jnp.zeros((1, dim), jnp.float32)

    out = attention_pallas(x, wq, wkv, wproj, bproj, H, W,
                           num_heads=num_heads, scale=scale)
    out = jax.block_until_ready(out)

    ref = attention_reference(x, wq, wkv, wproj, bproj, num_heads, scale)
    assert out.shape == (B, N, dim)
    # bf16 MXU operands (f32 accumulation) vs f32 reference -> relaxed tol.
    assert jnp.allclose(out, ref, atol=2e-3, rtol=2e-2), (
        f"max abs err = {jnp.max(jnp.abs(out - ref))}")

    print("KERNEL_OK")
</pallas_src>

<mosaic_0001>
module attributes {stable_mosaic.version = 11 : i64} {
  func.func @_attention_kernel(%arg0: i32, %arg1: memref<2x64x128xf32, #tpu.memory_space<vmem>>, %arg2: memref<128x128xbf16, #tpu.memory_space<vmem>>, %arg3: memref<128x256xbf16, #tpu.memory_space<vmem>>, %arg4: memref<128x128xbf16, #tpu.memory_space<vmem>>, %arg5: memref<1x128xf32, #tpu.memory_space<vmem>>, %arg6: memref<2x64x128xf32, #tpu.memory_space<vmem>>) attributes {dimension_semantics = [#tpu.dimension_semantics<parallel>], iteration_bounds = array<i64: 1>, scalar_prefetch = 0 : i64, scratch_operands = 0 : i64, tpu.core_type = #tpu.core_type<tc>, window_params = [{transform_indices = @transform_0, window_bounds = array<i64: 2, 64, 128>}, {pipeline_mode = #tpu.pipeline_mode<synchronous>, transform_indices = @transform_1, window_bounds = array<i64: 128, 128>}, {pipeline_mode = #tpu.pipeline_mode<synchronous>, transform_indices = @transform_2, window_bounds = array<i64: 128, 256>}, {pipeline_mode = #tpu.pipeline_mode<synchronous>, transform_indices = @transform_3, window_bounds = array<i64: 128, 128>}, {pipeline_mode = #tpu.pipeline_mode<synchronous>, transform_indices = @transform_4, window_bounds = array<i64: 1, 128>}, {transform_indices = @transform_5, window_bounds = array<i64: 2, 64, 128>}]} {
    %c0 = arith.constant 0 : index
    %c0_0 = arith.constant 0 : index
    %c0_1 = arith.constant 0 : index
    %0 = vector.load %arg1[%c0, %c0_0, %c0_1] : memref<2x64x128xf32, #tpu.memory_space<vmem>>, vector<2x64x128xf32>
    %1 = vector.shape_cast %0 : vector<2x64x128xf32> to vector<128x128xf32>
    %2 = arith.truncf %1 : vector<128x128xf32> to vector<128x128xbf16>
    %c0_2 = arith.constant 0 : index
    %c0_3 = arith.constant 0 : index
    %3 = vector.load %arg2[%c0_2, %c0_3] : memref<128x128xbf16, #tpu.memory_space<vmem>>, vector<128x128xbf16>
    %cst = arith.constant dense<0.000000e+00> : vector<128x128xf32>
    %4 = tpu.matmul %2, %3, %cst {dimension_numbers = #tpu.dot_dimension_numbers<[1], [0], [0], [1], [0, 0, 1, 1], [], []>} : vector<128x128xbf16>, vector<128x128xbf16>, vector<128x128xf32> -> vector<128x128xf32>
    %c0_4 = arith.constant 0 : index
    %c0_5 = arith.constant 0 : index
    %5 = vector.load %arg3[%c0_4, %c0_5] : memref<128x256xbf16, #tpu.memory_space<vmem>>, vector<128x256xbf16>
    %cst_6 = arith.constant dense<0.000000e+00> : vector<128x256xf32>
    %6 = tpu.matmul %2, %5, %cst_6 {dimension_numbers = #tpu.dot_dimension_numbers<[1], [0], [0], [1], [0, 0, 1, 1], [], []>} : vector<128x128xbf16>, vector<128x256xbf16>, vector<128x256xf32> -> vector<128x256xf32>
    %cst_7 = arith.constant 2.500000e-01 : f32
    %7 = vector.broadcast %cst_7 : f32 to vector<128x128xf32>
    %8 = arith.mulf %4, %7 : vector<128x128xf32>
    %9 = vector.shape_cast %8 : vector<128x128xf32> to vector<2x64x128xf32>
    %10 = vector.extract_strided_slice %6 {offsets = [0, 0], sizes = [128, 128], strides = [1, 1]} : vector<128x256xf32> to vector<128x128xf32>
    %11 = vector.shape_cast %10 : vector<128x128xf32> to vector<2x64x128xf32>
    %12 = vector.extract_strided_slice %6 {offsets = [0, 128], sizes = [128, 128], strides = [1, 1]} : vector<128x256xf32> to vector<128x128xf32>
    %13 = vector.shape_cast %12 : vector<128x128xf32> to vector<2x64x128xf32>
    %14 = vector.extract_strided_slice %9 {offsets = [0, 0, 0], sizes = [2, 64, 16], strides = [1, 1, 1]} : vector<2x64x128xf32> to vector<2x64x16xf32>
    %15 = arith.truncf %14 : vector<2x64x16xf32> to vector<2x64x16xbf16>
    %16 = vector.extract_strided_slice %11 {offsets = [0, 0, 0], sizes = [2, 64, 16], strides = [1, 1, 1]} : vector<2x64x128xf32> to vector<2x64x16xf32>
    %17 = arith.truncf %16 : vector<2x64x16xf32> to vector<2x64x16xbf16>
    %18 = vector.extract_strided_slice %13 {offsets = [0, 0, 0], sizes = [2, 64, 16], strides = [1, 1, 1]} : vector<2x64x128xf32> to vector<2x64x16xf32>
    %19 = arith.truncf %18 : vector<2x64x16xf32> to vector<2x64x16xbf16>
    "tpu.trace_start"() <{level = 10 : i32, message = "bnd,bmd->bnm"}> : () -> ()
    %cst_8 = arith.constant dense<0.000000e+00> : vector<2x64x64xf32>
    %20 = tpu.matmul %15, %17, %cst_8 {dimension_numbers = #tpu.dot_dimension_numbers<[2], [2], [1], [1], [0, 0, 0, 1, 1, 1], [0], [0]>} : vector<2x64x16xbf16>, vector<2x64x16xbf16>, vector<2x64x64xf32> -> vector<2x64x64xf32>
    "tpu.trace_stop"() : () -> ()
    %cst_9 = arith.constant dense<0xFF800000> : vector<2x64xf32>
    %21 = vector.multi_reduction <maximumf>, %20, %cst_9 [2] : vector<2x64x64xf32> to vector<2x64xf32>
    %22 = vector.shape_cast %21 : vector<2x64xf32> to vector<2x64x1xf32>
    %23 = vector.broadcast %22 : vector<2x64x1xf32> to vector<2x64x64xf32>
    %24 = arith.subf %20, %23 : vector<2x64x64xf32>
    %25 = math.exp %24 : vector<2x64x64xf32>
    %cst_10 = arith.constant dense<0.000000e+00> : vector<2x64xf32>
    %26 = vector.multi_reduction <add>, %25, %cst_10 [2] : vector<2x64x64xf32> to vector<2x64xf32>
    %27 = vector.shape_cast %26 : vector<2x64xf32> to vector<2x64x1xf32>
    %28 = tpu.reciprocal %27 {approx = true} : vector<2x64x1xf32> -> vector<2x64x1xf32>
    %29 = vector.broadcast %28 : vector<2x64x1xf32> to vector<2x64x64xf32>
    %30 = arith.mulf %25, %29 : vector<2x64x64xf32>
    %31 = arith.truncf %30 : vector<2x64x64xf32> to vector<2x64x64xbf16>
    "tpu.trace_start"() <{level = 10 : i32, message = "bnm,bmd->bnd"}> : () -> ()
    %cst_11 = arith.constant dense<0.000000e+00> : vector<2x64x16xf32>
    %32 = tpu.matmul %31, %19, %cst_11 {dimension_numbers = #tpu.dot_dimension_numbers<[2], [1], [1], [2], [0, 0, 0, 1, 1, 2], [0], [0]>} : vector<2x64x64xbf16>, vector<2x64x16xbf16>, vector<2x64x16xf32> -> vector<2x64x16xf32>
    "tpu.trace_stop"() : () -> ()
    %33 = vector.extract_strided_slice %9 {offsets = [0, 0, 16], sizes = [2, 64, 16], strides = [1, 1, 1]} : vector<2x64x128xf32> to vector<2x64x16xf32>
    %34 = arith.truncf %33 : vector<2x64x16xf32> to vector<2x64x16xbf16>
    %35 = vector.extract_strided_slice %11 {offsets = [0, 0, 16], sizes = [2, 64, 16], strides = [1, 1, 1]} : vector<2x64x128xf32> to vector<2x64x16xf32>
    %36 = arith.truncf %35 : vector<2x64x16xf32> to vector<2x64x16xbf16>
    %37 = vector.extract_strided_slice %13 {offsets = [0, 0, 16], sizes = [2, 64, 16], strides = [1, 1, 1]} : vector<2x64x128xf32> to vector<2x64x16xf32>
    %38 = arith.truncf %37 : vector<2x64x16xf32> to vector<2x64x16xbf16>
    "tpu.trace_start"() <{level = 10 : i32, message = "bnd,bmd->bnm"}> : () -> ()
    %cst_12 = arith.constant dense<0.000000e+00> : vector<2x64x64xf32>
    %39 = tpu.matmul %34, %36, %cst_12 {dimension_numbers = #tpu.dot_dimension_numbers<[2], [2], [1], [1], [0, 0, 0, 1, 1, 1], [0], [0]>} : vector<2x64x16xbf16>, vector<2x64x16xbf16>, vector<2x64x64xf32> -> vector<2x64x64xf32>
    "tpu.trace_stop"() : () -> ()
    %cst_13 = arith.constant dense<0xFF800000> : vector<2x64xf32>
    %40 = vector.multi_reduction <maximumf>, %39, %cst_13 [2] : vector<2x64x64xf32> to vector<2x64xf32>
    %41 = vector.shape_cast %40 : vector<2x64xf32> to vector<2x64x1xf32>
    %42 = vector.broadcast %41 : vector<2x64x1xf32> to vector<2x64x64xf32>
    %43 = arith.subf %39, %42 : vector<2x64x64xf32>
    %44 = math.exp %43 : vector<2x64x64xf32>
    %cst_14 = arith.constant dense<0.000000e+00> : vector<2x64xf32>
    %45 = vector.multi_reduction <add>, %44, %cst_14 [2] : vector<2x64x64xf32> to vector<2x64xf32>
    %46 = vector.shape_cast %45 : vector<2x64xf32> to vector<2x64x1xf32>
    %47 = tpu.reciprocal %46 {approx = true} : vector<2x64x1xf32> -> vector<2x64x1xf32>
    %48 = vector.broadcast %47 : vector<2x64x1xf32> to vector<2x64x64xf32>
    %49 = arith.mulf %44, %48 : vector<2x64x64xf32>
    %50 = arith.truncf %49 : vector<2x64x64xf32> to vector<2x64x64xbf16>
    "tpu.trace_start"() <{level = 10 : i32, message = "bnm,bmd->bnd"}> : () -> ()
    %cst_15 = arith.constant dense<0.000000e+00> : vector<2x64x16xf32>
    %51 = tpu.matmul %50, %38, %cst_15 {dimension_numbers = #tpu.dot_dimension_numbers<[2], [1], [1], [2], [0, 0, 0, 1, 1, 2], [0], [0]>} : vector<2x64x64xbf16>, vector<2x64x16xbf16>, vector<2x64x16xf32> -> vector<2x64x16xf32>
    "tpu.trace_stop"() : () -> ()
    %52 = vector.extract_strided_slice %9 {offsets = [0, 0, 32], sizes = [2, 64, 16], strides = [1, 1, 1]} : vector<2x64x128xf32> to vector<2x64x16xf32>
    %53 = arith.truncf %52 : vector<2x64x16xf32> to vector<2x64x16xbf16>
    %54 = vector.extract_strided_slice %11 {offsets = [0, 0, 32], sizes = [2, 64, 16], strides = [1, 1, 1]} : vector<2x64x128xf32> to vector<2x64x16xf32>
    %55 = arith.truncf %54 : vector<2x64x16xf32> to vector<2x64x16xbf16>
    %56 = vector.extract_strided_slice %13 {offsets = [0, 0, 32], sizes = [2, 64, 16], strides = [1, 1, 1]} : vector<2x64x128xf32> to vector<2x64x16xf32>
    %57 = arith.truncf %56 : vector<2x64x16xf32> to vector<2x64x16xbf16>
    "tpu.trace_start"() <{level = 10 : i32, message = "bnd,bmd->bnm"}> : () -> ()
    %cst_16 = arith.constant dense<0.000000e+00> : vector<2x64x64xf32>
    %58 = tpu.matmul %53, %55, %cst_16 {dimension_numbers = #tpu.dot_dimension_numbers<[2], [2], [1], [1], [0, 0, 0, 1, 1, 1], [0], [0]>} : vector<2x64x16xbf16>, vector<2x64x16xbf16>, vector<2x64x64xf32> -> vector<2x64x64xf32>
    "tpu.trace_stop"() : () -> ()
    %cst_17 = arith.constant dense<0xFF800000> : vector<2x64xf32>
    %59 = vector.multi_reduction <maximumf>, %58, %cst_17 [2] : vector<2x64x64xf32> to vector<2x64xf32>
    %60 = vector.shape_cast %59 : vector<2x64xf32> to vector<2x64x1xf32>
    %61 = vector.broadcast %60 : vector<2x64x1xf32> to vector<2x64x64xf32>
    %62 = arith.subf %58, %61 : vector<2x64x64xf32>
    %63 = math.exp %62 : vector<2x64x64xf32>
    %cst_18 = arith.constant dense<0.000000e+00> : vector<2x64xf32>
    %64 = vector.multi_reduction <add>, %63, %cst_18 [2] : vector<2x64x64xf32> to vector<2x64xf32>
    %65 = vector.shape_cast %64 : vector<2x64xf32> to vector<2x64x1xf32>
    %66 = tpu.reciprocal %65 {approx = true} : vector<2x64x1xf32> -> vector<2x64x1xf32>
    %67 = vector.broadcast %66 : vector<2x64x1xf32> to vector<2x64x64xf32>
    %68 = arith.mulf %63, %67 : vector<2x64x64xf32>
    %69 = arith.truncf %68 : vector<2x64x64xf32> to vector<2x64x64xbf16>
    "tpu.trace_start"() <{level = 10 : i32, message = "bnm,bmd->bnd"}> : () -> ()
    %cst_19 = arith.constant dense<0.000000e+00> : vector<2x64x16xf32>
    %70 = tpu.matmul %69, %57, %cst_19 {dimension_numbers = #tpu.dot_dimension_numbers<[2], [1], [1], [2], [0, 0, 0, 1, 1, 2], [0], [0]>} : vector<2x64x64xbf16>, vector<2x64x16xbf16>, vector<2x64x16xf32> -> vector<2x64x16xf32>
    "tpu.trace_stop"() : () -> ()
    %71 = vector.extract_strided_slice %9 {offsets = [0, 0, 48], sizes = [2, 64, 16], strides = [1, 1, 1]} : vector<2x64x128xf32> to vector<2x64x16xf32>
    %72 = arith.truncf %71 : vector<2x64x16xf32> to vector<2x64x16xbf16>
    %73 = vector.extract_strided_slice %11 {offsets = [0, 0, 48], sizes = [2, 64, 16], strides = [1, 1, 1]} : vector<2x64x128xf32> to vector<2x64x16xf32>
    %74 = arith.truncf %73 : vector<2x64x16xf32> to vector<2x64x16xbf16>
    %75 = vector.extract_strided_slice %13 {offsets = [0, 0, 48], sizes = [2, 64, 16], strides = [1, 1, 1]} : vector<2x64x128xf32> to vector<2x64x16xf32>
    %76 = arith.truncf %75 : vector<2x64x16xf32> to vector<2x64x16xbf16>
    "tpu.trace_start"() <{level = 10 : i32, message = "bnd,bmd->bnm"}> : () -> ()
    %cst_20 = arith.constant dense<0.000000e+00> : vector<2x64x64xf32>
    %77 = tpu.matmul %72, %74, %cst_20 {dimension_numbers = #tpu.dot_dimension_numbers<[2], [2], [1], [1], [0, 0, 0, 1, 1, 1], [0], [0]>} : vector<2x64x16xbf16>, vector<2x64x16xbf16>, vector<2x64x64xf32> -> vector<2x64x64xf32>
    "tpu.trace_stop"() : () -> ()
    %cst_21 = arith.constant dense<0xFF800000> : vector<2x64xf32>
    %78 = vector.multi_reduction <maximumf>, %77, %cst_21 [2] : vector<2x64x64xf32> to vector<2x64xf32>
    %79 = vector.shape_cast %78 : vector<2x64xf32> to vector<2x64x1xf32>
    %80 = vector.broadcast %79 : vector<2x64x1xf32> to vector<2x64x64xf32>
    %81 = arith.subf %77, %80 : vector<2x64x64xf32>
    %82 = math.exp %81 : vector<2x64x64xf32>
    %cst_22 = arith.constant dense<0.000000e+00> : vector<2x64xf32>
    %83 = vector.multi_reduction <add>, %82, %cst_22 [2] : vector<2x64x64xf32> to vector<2x64xf32>
    %84 = vector.shape_cast %83 : vector<2x64xf32> to vector<2x64x1xf32>
    %85 = tpu.reciprocal %84 {approx = true} : vector<2x64x1xf32> -> vector<2x64x1xf32>
    %86 = vector.broadcast %85 : vector<2x64x1xf32> to vector<2x64x64xf32>
    %87 = arith.mulf %82, %86 : vector<2x64x64xf32>
    %88 = arith.truncf %87 : vector<2x64x64xf32> to vector<2x64x64xbf16>
    "tpu.trace_start"() <{level = 10 : i32, message = "bnm,bmd->bnd"}> : () -> ()
    %cst_23 = arith.constant dense<0.000000e+00> : vector<2x64x16xf32>
    %89 = tpu.matmul %88, %76, %cst_23 {dimension_numbers = #tpu.dot_dimension_numbers<[2], [1], [1], [2], [0, 0, 0, 1, 1, 2], [0], [0]>} : vector<2x64x64xbf16>, vector<2x64x16xbf16>, vector<2x64x16xf32> -> vector<2x64x16xf32>
    "tpu.trace_stop"() : () -> ()
    %90 = vector.extract_strided_slice %9 {offsets = [0, 0, 64], sizes = [2, 64, 16], strides = [1, 1, 1]} : vector<2x64x128xf32> to vector<2x64x16xf32>
    %91 = arith.truncf %90 : vector<2x64x16xf32> to vector<2x64x16xbf16>
    %92 = vector.extract_strided_slice %11 {offsets = [0, 0, 64], sizes = [2, 64, 16], strides = [1, 1, 1]} : vector<2x64x128xf32> to vector<2x64x16xf32>
    %93 = arith.truncf %92 : vector<2x64x16xf32> to vector<2x64x16xbf16>
    %94 = vector.extract_strided_slice %13 {offsets = [0, 0, 64], sizes = [2, 64, 16], strides = [1, 1, 1]} : vector<2x64x128xf32> to vector<2x64x16xf32>
    %95 = arith.truncf %94 : vector<2x64x16xf32> to vector<2x64x16xbf16>
    "tpu.trace_start"() <{level = 10 : i32, message = "bnd,bmd->bnm"}> : () -> ()
    %cst_24 = arith.constant dense<0.000000e+00> : vector<2x64x64xf32>
    %96 = tpu.matmul %91, %93, %cst_24 {dimension_numbers = #tpu.dot_dimension_numbers<[2], [2], [1], [1], [0, 0, 0, 1, 1, 1], [0], [0]>} : vector<2x64x16xbf16>, vector<2x64x16xbf16>, vector<2x64x64xf32> -> vector<2x64x64xf32>
    "tpu.trace_stop"() : () -> ()
    %cst_25 = arith.constant dense<0xFF800000> : vector<2x64xf32>
    %97 = vector.multi_reduction <maximumf>, %96, %cst_25 [2] : vector<2x64x64xf32> to vector<2x64xf32>
    %98 = vector.shape_cast %97 : vector<2x64xf32> to vector<2x64x1xf32>
    %99 = vector.broadcast %98 : vector<2x64x1xf32> to vector<2x64x64xf32>
    %100 = arith.subf %96, %99 : vector<2x64x64xf32>
    %101 = math.exp %100 : vector<2x64x64xf32>
    %cst_26 = arith.constant dense<0.000000e+00> : vector<2x64xf32>
    %102 = vector.multi_reduction <add>, %101, %cst_26 [2] : vector<2x64x64xf32> to vector<2x64xf32>
    %103 = vector.shape_cast %102 : vector<2x64xf32> to vector<2x64x1xf32>
    %104 = tpu.reciprocal %103 {approx = true} : vector<2x64x1xf32> -> vector<2x64x1xf32>
    %105 = vector.broadcast %104 : vector<2x64x1xf32> to vector<2x64x64xf32>
    %106 = arith.mulf %101, %105 : vector<2x64x64xf32>
    %107 = arith.truncf %106 : vector<2x64x64xf32> to vector<2x64x64xbf16>
    "tpu.trace_start"() <{level = 10 : i32, message = "bnm,bmd->bnd"}> : () -> ()
    %cst_27 = arith.constant dense<0.000000e+00> : vector<2x64x16xf32>
    %108 = tpu.matmul %107, %95, %cst_27 {dimension_numbers = #tpu.dot_dimension_numbers<[2], [1], [1], [2], [0, 0, 0, 1, 1, 2], [0], [0]>} : vector<2x64x64xbf16>, vector<2x64x16xbf16>, vector<2x64x16xf32> -> vector<2x64x16xf32>
    "tpu.trace_stop"() : () -> ()
    %109 = vector.extract_strided_slice %9 {offsets = [0, 0, 80], sizes = [2, 64, 16], strides = [1, 1, 1]} : vector<2x64x128xf32> to vector<2x64x16xf32>
    %110 = arith.truncf %109 : vector<2x64x16xf32> to vector<2x64x16xbf16>
    %111 = vector.extract_strided_slice %11 {offsets = [0, 0, 80], sizes = [2, 64, 16], strides = [1, 1, 1]} : vector<2x64x128xf32> to vector<2x64x16xf32>
    %112 = arith.truncf %111 : vector<2x64x16xf32> to vector<2x64x16xbf16>
    %113 = vector.extract_strided_slice %13 {offsets = [0, 0, 80], sizes = [2, 64, 16], strides = [1, 1, 1]} : vector<2x64x128xf32> to vector<2x64x16xf32>
    %114 = arith.truncf %113 : vector<2x64x16xf32> to vector<2x64x16xbf16>
    "tpu.trace_start"() <{level = 10 : i32, message = "bnd,bmd->bnm"}> : () -> ()
    %cst_28 = arith.constant dense<0.000000e+00> : vector<2x64x64xf32>
    %115 = tpu.matmul %110, %112, %cst_28 {dimension_numbers = #tpu.dot_dimension_numbers<[2], [2], [1], [1], [0, 0, 0, 1, 1, 1], [0], [0]>} : vector<2x64x16xbf16>, vector<2x64x16xbf16>, vector<2x64x64xf32> -> vector<2x64x64xf32>
    "tpu.trace_stop"() : () -> ()
    %cst_29 = arith.constant dense<0xFF800000> : vector<2x64xf32>
    %116 = vector.multi_reduction <maximumf>, %115, %cst_29 [2] : vector<2x64x64xf32> to vector<2x64xf32>
    %117 = vector.shape_cast %116 : vector<2x64xf32> to vector<2x64x1xf32>
    %118 = vector.broadcast %117 : vector<2x64x1xf32> to vector<2x64x64xf32>
    %119 = arith.subf %115, %118 : vector<2x64x64xf32>
    %120 = math.exp %119 : vector<2x64x64xf32>
    %cst_30 = arith.constant dense<0.000000e+00> : vector<2x64xf32>
    %121 = vector.multi_reduction <add>, %120, %cst_30 [2] : vector<2x64x64xf32> to vector<2x64xf32>
    %122 = vector.shape_cast %121 : vector<2x64xf32> to vector<2x64x1xf32>
    %123 = tpu.reciprocal %122 {approx = true} : vector<2x64x1xf32> -> vector<2x64x1xf32>
    %124 = vector.broadcast %123 : vector<2x64x1xf32> to vector<2x64x64xf32>
    %125 = arith.mulf %120, %124 : vector<2x64x64xf32>
    %126 = arith.truncf %125 : vector<2x64x64xf32> to vector<2x64x64xbf16>
    "tpu.trace_start"() <{level = 10 : i32, message = "bnm,bmd->bnd"}> : () -> ()
    %cst_31 = arith.constant dense<0.000000e+00> : vector<2x64x16xf32>
    %127 = tpu.matmul %126, %114, %cst_31 {dimension_numbers = #tpu.dot_dimension_numbers<[2], [1], [1], [2], [0, 0, 0, 1, 1, 2], [0], [0]>} : vector<2x64x64xbf16>, vector<2x64x16xbf16>, vector<2x64x16xf32> -> vector<2x64x16xf32>
    "tpu.trace_stop"() : () -> ()
    %128 = vector.extract_strided_slice %9 {offsets = [0, 0, 96], sizes = [2, 64, 16], strides = [1, 1, 1]} : vector<2x64x128xf32> to vector<2x64x16xf32>
    %129 = arith.truncf %128 : vector<2x64x16xf32> to vector<2x64x16xbf16>
    %130 = vector.extract_strided_slice %11 {offsets = [0, 0, 96], sizes = [2, 64, 16], strides = [1, 1, 1]} : vector<2x64x128xf32> to vector<2x64x16xf32>
    %131 = arith.truncf %130 : vector<2x64x16xf32> to vector<2x64x16xbf16>
    %132 = vector.extract_strided_slice %13 {offsets = [0, 0, 96], sizes = [2, 64, 16], strides = [1, 1, 1]} : vector<2x64x128xf32> to vector<2x64x16xf32>
    %133 = arith.truncf %132 : vector<2x64x16xf32> to vector<2x64x16xbf16>
    "tpu.trace_start"() <{level = 10 : i32, message = "bnd,bmd->bnm"}> : () -> ()
    %cst_32 = arith.constant dense<0.000000e+00> : vector<2x64x64xf32>
    %134 = tpu.matmul %129, %131, %cst_32 {dimension_numbers = #tpu.dot_dimension_numbers<[2], [2], [1], [1], [0, 0, 0, 1, 1, 1], [0], [0]>} : vector<2x64x16xbf16>, vector<2x64x16xbf16>, vector<2x64x64xf32> -> vector<2x64x64xf32>
    "tpu.trace_stop"() : () -> ()
    %cst_33 = arith.constant dense<0xFF800000> : vector<2x64xf32>
    %135 = vector.multi_reduction <maximumf>, %134, %cst_33 [2] : vector<2x64x64xf32> to vector<2x64xf32>
    %136 = vector.shape_cast %135 : vector<2x64xf32> to vector<2x64x1xf32>
    %137 = vector.broadcast %136 : vector<2x64x1xf32> to vector<2x64x64xf32>
    %138 = arith.subf %134, %137 : vector<2x64x64xf32>
    %139 = math.exp %138 : vector<2x64x64xf32>
    %cst_34 = arith.constant dense<0.000000e+00> : vector<2x64xf32>
    %140 = vector.multi_reduction <add>, %139, %cst_34 [2] : vector<2x64x64xf32> to vector<2x64xf32>
    %141 = vector.shape_cast %140 : vector<2x64xf32> to vector<2x64x1xf32>
    %142 = tpu.reciprocal %141 {approx = true} : vector<2x64x1xf32> -> vector<2x64x1xf32>
    %143 = vector.broadcast %142 : vector<2x64x1xf32> to vector<2x64x64xf32>
    %144 = arith.mulf %139, %143 : vector<2x64x64xf32>
    %145 = arith.truncf %144 : vector<2x64x64xf32> to vector<2x64x64xbf16>
    "tpu.trace_start"() <{level = 10 : i32, message = "bnm,bmd->bnd"}> : () -> ()
    %cst_35 = arith.constant dense<0.000000e+00> : vector<2x64x16xf32>
    %146 = tpu.matmul %145, %133, %cst_35 {dimension_numbers = #tpu.dot_dimension_numbers<[2], [1], [1], [2], [0, 0, 0, 1, 1, 2], [0], [0]>} : vector<2x64x64xbf16>, vector<2x64x16xbf16>, vector<2x64x16xf32> -> vector<2x64x16xf32>
    "tpu.trace_stop"() : () -> ()
    %147 = vector.extract_strided_slice %9 {offsets = [0, 0, 112], sizes = [2, 64, 16], strides = [1, 1, 1]} : vector<2x64x128xf32> to vector<2x64x16xf32>
    %148 = arith.truncf %147 : vector<2x64x16xf32> to vector<2x64x16xbf16>
    %149 = vector.extract_strided_slice %11 {offsets = [0, 0, 112], sizes = [2, 64, 16], strides = [1, 1, 1]} : vector<2x64x128xf32> to vector<2x64x16xf32>
    %150 = arith.truncf %149 : vector<2x64x16xf32> to vector<2x64x16xbf16>
    %151 = vector.extract_strided_slice %13 {offsets = [0, 0, 112], sizes = [2, 64, 16], strides = [1, 1, 1]} : vector<2x64x128xf32> to vector<2x64x16xf32>
    %152 = arith.truncf %151 : vector<2x64x16xf32> to vector<2x64x16xbf16>
    "tpu.trace_start"() <{level = 10 : i32, message = "bnd,bmd->bnm"}> : () -> ()
    %cst_36 = arith.constant dense<0.000000e+00> : vector<2x64x64xf32>
    %153 = tpu.matmul %148, %150, %cst_36 {dimension_numbers = #tpu.dot_dimension_numbers<[2], [2], [1], [1], [0, 0, 0, 1, 1, 1], [0], [0]>} : vector<2x64x16xbf16>, vector<2x64x16xbf16>, vector<2x64x64xf32> -> vector<2x64x64xf32>
    "tpu.trace_stop"() : () -> ()
    %cst_37 = arith.constant dense<0xFF800000> : vector<2x64xf32>
    %154 = vector.multi_reduction <maximumf>, %153, %cst_37 [2] : vector<2x64x64xf32> to vector<2x64xf32>
    %155 = vector.shape_cast %154 : vector<2x64xf32> to vector<2x64x1xf32>
    %156 = vector.broadcast %155 : vector<2x64x1xf32> to vector<2x64x64xf32>
    %157 = arith.subf %153, %156 : vector<2x64x64xf32>
    %158 = math.exp %157 : vector<2x64x64xf32>
    %cst_38 = arith.constant dense<0.000000e+00> : vector<2x64xf32>
    %159 = vector.multi_reduction <add>, %158, %cst_38 [2] : vector<2x64x64xf32> to vector<2x64xf32>
    %160 = vector.shape_cast %159 : vector<2x64xf32> to vector<2x64x1xf32>
    %161 = tpu.reciprocal %160 {approx = true} : vector<2x64x1xf32> -> vector<2x64x1xf32>
    %162 = vector.broadcast %161 : vector<2x64x1xf32> to vector<2x64x64xf32>
    %163 = arith.mulf %158, %162 : vector<2x64x64xf32>
    %164 = arith.truncf %163 : vector<2x64x64xf32> to vector<2x64x64xbf16>
    "tpu.trace_start"() <{level = 10 : i32, message = "bnm,bmd->bnd"}> : () -> ()
    %cst_39 = arith.constant dense<0.000000e+00> : vector<2x64x16xf32>
    %165 = tpu.matmul %164, %152, %cst_39 {dimension_numbers = #tpu.dot_dimension_numbers<[2], [1], [1], [2], [0, 0, 0, 1, 1, 2], [0], [0]>} : vector<2x64x64xbf16>, vector<2x64x16xbf16>, vector<2x64x16xf32> -> vector<2x64x16xf32>
    "tpu.trace_stop"() : () -> ()
    %166 = tpu.concatenate %32, %51, %70, %89, %108, %127, %146, %165 in 2 : vector<2x64x16xf32>, vector<2x64x16xf32>, vector<2x64x16xf32>, vector<2x64x16xf32>, vector<2x64x16xf32>, vector<2x64x16xf32>, vector<2x64x16xf32>, vector<2x64x16xf32> -> vector<2x64x128xf32>
    %167 = vector.shape_cast %166 : vector<2x64x128xf32> to vector<128x128xf32>
    %168 = arith.truncf %167 : vector<128x128xf32> to vector<128x128xbf16>
    %c0_40 = arith.constant 0 : index
    %c0_41 = arith.constant 0 : index
    %169 = vector.load %arg4[%c0_40, %c0_41] : memref<128x128xbf16, #tpu.memory_space<vmem>>, vector<128x128xbf16>
    %cst_42 = arith.constant dense<0.000000e+00> : vector<128x128xf32>
    %170 = tpu.matmul %168, %169, %cst_42 {dimension_numbers = #tpu.dot_dimension_numbers<[1], [0], [0], [1], [0, 0, 1, 1], [], []>} : vector<128x128xbf16>, vector<128x128xbf16>, vector<128x128xf32> -> vector<128x128xf32>
    %c0_43 = arith.constant 0 : index
    %c0_44 = arith.constant 0 : index
    %171 = vector.load %arg5[%c0_43, %c0_44] : memref<1x128xf32, #tpu.memory_space<vmem>>, vector<1x128xf32>
    %172 = vector.broadcast %171 : vector<1x128xf32> to vector<128x128xf32>
    %173 = arith.addf %170, %172 : vector<128x128xf32>
    %174 = vector.shape_cast %173 : vector<128x128xf32> to vector<2x64x128xf32>
    %c0_45 = arith.constant 0 : index
    %c0_46 = arith.constant 0 : index
    %c0_47 = arith.constant 0 : index
    %175 = vector.load %arg6[%c0_45, %c0_46, %c0_47] : memref<2x64x128xf32, #tpu.memory_space<vmem>>, vector<2x64x128xf32>
    tpu.vector_store %arg6[%c0_45, %c0_46, %c0_47], %174 {strides = array<i32>} : memref<2x64x128xf32, #tpu.memory_space<vmem>>, vector<2x64x128xf32>,
    return
  }
  func.func @transform_0(%arg0: i32) -> (i32, i32, i32) {
    %c0_i32 = arith.constant 0 : i32
    %c0_i32_0 = arith.constant 0 : i32
    %c0_i32_1 = arith.constant 0 : i32
    return %arg0, %c0_i32, %c0_i32_0 : i32, i32, i32
  }
  func.func @transform_1(%arg0: i32) -> (i32, i32) {
    %c0_i32 = arith.constant 0 : i32
    %c0_i32_0 = arith.constant 0 : i32
    %c0_i32_1 = arith.constant 0 : i32
    return %c0_i32, %c0_i32_0 : i32, i32
  }
  func.func @transform_2(%arg0: i32) -> (i32, i32) {
    %c0_i32 = arith.constant 0 : i32
    %c0_i32_0 = arith.constant 0 : i32
    %c0_i32_1 = arith.constant 0 : i32
    return %c0_i32, %c0_i32_0 : i32, i32
  }
  func.func @transform_3(%arg0: i32) -> (i32, i32) {
    %c0_i32 = arith.constant 0 : i32
    %c0_i32_0 = arith.constant 0 : i32
    %c0_i32_1 = arith.constant 0 : i32
    return %c0_i32, %c0_i32_0 : i32, i32
  }
  func.func @transform_4(%arg0: i32) -> (i32, i32) {
    %c0_i32 = arith.constant 0 : i32
    %c0_i32_0 = arith.constant 0 : i32
    %c0_i32_1 = arith.constant 0 : i32
    return %c0_i32, %c0_i32_0 : i32, i32
  }
  func.func @transform_5(%arg0: i32) -> (i32, i32, i32) {
    %c0_i32 = arith.constant 0 : i32
    %c0_i32_0 = arith.constant 0 : i32
    %c0_i32_1 = arith.constant 0 : i32
    return %arg0, %c0_i32, %c0_i32_0 : i32, i32, i32
  }
}

</mosaic_0001>

<llo_original>
// kernel: tpu_custom_call.1
$region0: #{tpu_custom_call.1}
  #allocation0 [shape = 'u32[]', space=smem, size = 0x4, offset = 0x4, fixed_abs, tag = 'smem constant byte address 0x4 - core index']
  #allocation1 [shape = 'u32[144,128]{1,0:T(1,128)}', space=vmem, size = 0x12000, scoped, tag = 'internal scratch']
  %s0 = inlined_call_operand.hbm [shape: f32[2,64,128], index: 0, kind: input, shape index: {}]
  %s1 = inlined_call_operand.hbm [shape: bf16[128,128], index: 1, kind: input, shape index: {}]
  %s2 = inlined_call_operand.hbm [shape: bf16[128,256], index: 2, kind: input, shape index: {}]
  %s3 = inlined_call_operand.hbm [shape: bf16[128,128], index: 3, kind: input, shape index: {}]
  %s4 = inlined_call_operand.vmem [shape: f32[1,128], index: 4, kind: input, shape index: {}]
  %s5 = inlined_call_operand.hbm [shape: f32[2,64,128], index: 5, kind: output, shape index: {}]
  %s6 = sld [smem:[#allocation0]]
  $region46: #{tpu_custom_call.1} parent=0
    _
  %s8 = ssub.s32 1, %s6
  %s9 = scalar_select 0, %s8, %s6
  $region1: #{tpu_custom_call.1} parent=0
    #allocation2 [shape = 'u8[65536]{0}', space=vmem, size = 0x10000, scoped, tag = 'input window, operand 0, single buffered']
    #allocation3 [shape = 's32[1]{0}', space=sflag, size = 0x4, scoped, tag = 'scoped memory for tpu_custom_call.1']
    #allocation4 [shape = 's32[1]{0}', space=sflag, size = 0x4, scoped, tag = 'scoped memory for tpu_custom_call.1']
    #allocation5 [shape = 'u8[32768]{0}', space=vmem, size = 0x8000, scoped, tag = 'input window, operand 1, single buffered']
    #allocation6 [shape = 's32[1]{0}', space=sflag, size = 0x4, scoped, tag = 'scoped memory for tpu_custom_call.1']
    #allocation7 [shape = 'u8[65536]{0}', space=vmem, size = 0x10000, scoped, tag = 'input window, operand 2, single buffered']
    #allocation8 [shape = 'u8[32768]{0}', space=vmem, size = 0x8000, scoped, tag = 'input window, operand 3, single buffered']
    #allocation9 [shape = 's32[1]{0}', space=sflag, size = 0x4, scoped, tag = 'scoped memory for tpu_custom_call.1']
    #allocation10 [shape = 'u8[65536]{0}', space=vmem, size = 0x10000, scoped, tag = 'output window, operand 0, single buffered']
    %10 = vsyncpa [#allocation3], 0
    %11 = vsyncpa [#allocation6], 0
    %12 = vsyncpa [#allocation9], 0
    %13 = vsyncpa [#allocation4], 0
    // Predicated region
    $region2: #{tpu_custom_call.1} parent=1 // pred_check
      _
    $region3: #{tpu_custom_call.1} parent=1 // pred_check_branch
      %15 = sbr.rel (0) target = $region5
    $region4: #{tpu_custom_call.1} parent=1 // pred_region
      %s17 = ssub.s32 2048, 2048
      %18 = vsyncadd [#allocation3], %s17
      %s19 = sshll.u32 [#allocation2], 4
      %s20 = int_to_ptr.vmem [resolvable:$true] %s19
      %25 = dma.hbm_to_vmem [thread:$0]  %s0, 2048, %s20, [#allocation3], 128, 128, 8
    $region5: #{tpu_custom_call.1} parent=1 // pred_fallthru
      _
    // Predicated region
    $region6: #{tpu_custom_call.1} parent=1 // pred_check
      _
    $region7: #{tpu_custom_call.1} parent=1 // pred_check_branch
      %27 = sbr.rel (0) target = $region9
    $region8: #{tpu_custom_call.1} parent=1 // pred_region
      %s29 = ssub.s32 1024, 1024
      %30 = vsyncadd [#allocation6], %s29
      %s31 = sshll.u32 [#allocation5], 4
      %s32 = int_to_ptr.vmem [resolvable:$true] %s31
      %37 = dma.hbm_to_vmem [thread:$0]  %s1, 1024, %s32, [#allocation6], 64, 64, 4
    $region9: #{tpu_custom_call.1} parent=1 // pred_fallthru
      _
    // Predicated region
    $region10: #{tpu_custom_call.1} parent=1 // pred_check
      _
    $region11: #{tpu_custom_call.1} parent=1 // pred_check_branch
      %39 = sbr.rel (0) target = $region13
    $region12: #{tpu_custom_call.1} parent=1 // pred_region
      %s41 = ssub.s32 2048, 2048
      %42 = vsyncadd [#allocation6], %s41
      %s43 = sshll.u32 [#allocation7], 4
      %s44 = int_to_ptr.vmem [resolvable:$true] %s43
      %49 = dma.hbm_to_vmem [thread:$0]  %s2, 2048, %s44, [#allocation6], 128, 128, 8
    $region13: #{tpu_custom_call.1} parent=1 // pred_fallthru
      _
    // Predicated region
    $region14: #{tpu_custom_call.1} parent=1 // pred_check
      _
    $region15: #{tpu_custom_call.1} parent=1 // pred_check_branch
      %51 = sbr.rel (0) target = $region17
    $region16: #{tpu_custom_call.1} parent=1 // pred_region
      %s53 = ssub.s32 1024, 1024
      %54 = vsyncadd [#allocation9], %s53
      %s55 = sshll.u32 [#allocation8], 4
      %s56 = int_to_ptr.vmem [resolvable:$true] %s55
      %61 = dma.hbm_to_vmem [thread:$0]  %s3, 1024, %s56, [#allocation9], 64, 64, 4
    $region17: #{tpu_custom_call.1} parent=1 // pred_fallthru
      _
    // Predicated region
    $region18: #{tpu_custom_call.1} parent=1 // pred_check
      _
    $region19: #{tpu_custom_call.1} parent=1 // pred_check_branch
      %63 = sbr.rel (0) target = $region21
    $region20: #{tpu_custom_call.1} parent=1 // pred_region
      _
    $region21: #{tpu_custom_call.1} parent=1 // pred_fallthru
      _
    // Predicated region
    $region22: #{tpu_custom_call.1} parent=1 // pred_check
      _
    $region23: #{tpu_custom_call.1} parent=1 // pred_check_branch
      %65 = sbr.rel (0) target = $region25
    $region24: #{tpu_custom_call.1} parent=1 // pred_region
      %66 = dma.done [#allocation3], 2048
    $region25: #{tpu_custom_call.1} parent=1 // pred_fallthru
      _
    // Predicated region
    $region26: #{tpu_custom_call.1} parent=1 // pred_check
      _
    $region27: #{tpu_custom_call.1} parent=1 // pred_check_branch
      %68 = sbr.rel (0) target = $region29
    $region28: #{tpu_custom_call.1} parent=1 // pred_region
      %69 = dma.done [#allocation6], 1024
    $region29: #{tpu_custom_call.1} parent=1 // pred_fallthru
      _
    // Predicated region
    $region30: #{tpu_custom_call.1} parent=1 // pred_check
      _
    $region31: #{tpu_custom_call.1} parent=1 // pred_check_branch
      %71 = sbr.rel (0) target = $region33
    $region32: #{tpu_custom_call.1} parent=1 // pred_region
      %72 = dma.done [#allocation6], 2048
    $region33: #{tpu_custom_call.1} parent=1 // pred_fallthru
      _
    // Predicated region
    $region34: #{tpu_custom_call.1} parent=1 // pred_check
      _
    $region35: #{tpu_custom_call.1} parent=1 // pred_check_branch
      %74 = sbr.rel (0) target = $region37
    $region36: #{tpu_custom_call.1} parent=1 // pred_region
      %75 = dma.done [#allocation9], 1024
    $region37: #{tpu_custom_call.1} parent=1 // pred_fallthru
      _
    %v77 = vld [vmem:[#allocation2] sm:$0xff]
    %v78 = vld [vmem:[#allocation2 + $0x8] sm:$0xff]
    %v79 = vld [vmem:[#allocation2 + $0x10] sm:$0xff]
    %v80 = vld [vmem:[#allocation2 + $0x18] sm:$0xff]
    %v81 = vld [vmem:[#allocation2 + $0x20] sm:$0xff]
    %v82 = vld [vmem:[#allocation2 + $0x28] sm:$0xff]
    %v83 = vld [vmem:[#allocation2 + $0x30] sm:$0xff]
    %v84 = vld [vmem:[#allocation2 + $0x38] sm:$0xff]
    %v85 = vld [vmem:[#allocation2 + $0x40] sm:$0xff]
    %v86 = vld [vmem:[#allocation2 + $0x48] sm:$0xff]
    %v87 = vld [vmem:[#allocation2 + $0x50] sm:$0xff]
    %v88 = vld [vmem:[#allocation2 + $0x58] sm:$0xff]
    %v89 = vld [vmem:[#allocation2 + $0x60] sm:$0xff]
    %v90 = vld [vmem:[#allocation2 + $0x68] sm:$0xff]
    %v91 = vld [vmem:[#allocation2 + $0x70] sm:$0xff]
    %v92 = vld [vmem:[#allocation2 + $0x78] sm:$0xff]
    %v93 = vpack.c.bf16 %v78, %v77
    %v94 = vpack.c.bf16 %v80, %v79
    %v95 = vpack.c.bf16 %v82, %v81
    %v96 = vpack.c.bf16 %v84, %v83
    %v97 = vpack.c.bf16 %v86, %v85
    %v98 = vpack.c.bf16 %v88, %v87
    %v99 = vpack.c.bf16 %v90, %v89
    %v100 = vpack.c.bf16 %v92, %v91
    %v101 = vld [vmem:[#allocation5] sm:$0xf]
    %v102 = vld [vmem:[#allocation5 + $0x4] sm:$0xf]
    %v103 = vld [vmem:[#allocation5 + $0x8] sm:$0xf]
    %v104 = vld [vmem:[#allocation5 + $0xc] sm:$0xf]
    %v105 = vld [vmem:[#allocation5 + $0x10] sm:$0xf]
    %v106 = vld [vmem:[#allocation5 + $0x14] sm:$0xf]
    %v107 = vld [vmem:[#allocation5 + $0x18] sm:$0xf]
    %v108 = vld [vmem:[#allocation5 + $0x1c] sm:$0xf]
    %v109 = vld [vmem:[#allocation5 + $0x20] sm:$0xf]
    %v110 = vld [vmem:[#allocation5 + $0x24] sm:$0xf]
    %v111 = vld [vmem:[#allocation5 + $0x28] sm:$0xf]
    %v112 = vld [vmem:[#allocation5 + $0x2c] sm:$0xf]
    %v113 = vld [vmem:[#allocation5 + $0x30] sm:$0xf]
    %v114 = vld [vmem:[#allocation5 + $0x34] sm:$0xf]
    %v115 = vld [vmem:[#allocation5 + $0x38] sm:$0xf]
    %v116 = vld [vmem:[#allocation5 + $0x3c] sm:$0xf]
    %v133 = vunpack.c.l.b16 %v101
    %v134 = vunpack.c.l.b16 %v102
    %v135 = vunpack.c.l.b16 %v103
    %v136 = vunpack.c.l.b16 %v104
    %v137 = vunpack.c.l.b16 %v105
    %v138 = vunpack.c.l.b16 %v106
    %v139 = vunpack.c.l.b16 %v107
    %v140 = vunpack.c.l.b16 %v108
    %v141 = vunpack.c.l.b16 %v109
    %v142 = vunpack.c.l.b16 %v110
    %v143 = vunpack.c.l.b16 %v111
    %v144 = vunpack.c.l.b16 %v112
    %v145 = vunpack.c.l.b16 %v113
    %v146 = vunpack.c.l.b16 %v114
    %v147 = vunpack.c.l.b16 %v115
    %v148 = vunpack.c.l.b16 %v116
    %v149 = vpack.c.b16 %v134, %v133
    %v150 = vpack.c.b16 %v136, %v135
    %v151 = vpack.c.b16 %v138, %v137
    %v152 = vpack.c.b16 %v140, %v139
    %v153 = vpack.c.b16 %v142, %v141
    %v154 = vpack.c.b16 %v144, %v143
    %v155 = vpack.c.b16 %v146, %v145
    %v156 = vpack.c.b16 %v148, %v147
    %165 = vmatprep.subr.bf16.mxu0 0
    %166 = vmatpush1.bf16.msra.mxu0 %v149
    %167 = vmatprep.subr.bf16.mxu0 0
    %168 = vmatpush1.bf16.msra.mxu0 %v150
    %169 = vmatprep.subr.bf16.mxu0 0
    %170 = vmatpush1.bf16.msra.mxu0 %v151
    %171 = vmatprep.subr.bf16.mxu0 0
    %172 = vmatpush1.bf16.msra.mxu0 %v152
    %173 = vmatprep.subr.bf16.mxu0 0
    %174 = vmatpush1.bf16.msra.mxu0 %v153
    %175 = vmatprep.subr.bf16.mxu0 0
    %176 = vmatpush1.bf16.msra.mxu0 %v154
    %177 = vmatprep.subr.bf16.mxu0 0
    %178 = vmatpush1.bf16.msra.mxu0 %v155
    %179 = vmatprep.subr.bf16.mxu0 0
    %180 = vmatpush1.bf16.msra.mxu0 %v156
    %181 = vmatprep.subr.bf16.mxu0 0
    %182 = vmatpush1.bf16.msra.mxu0 0
    %183 = vmatprep.subr.bf16.mxu0 0
    %184 = vmatpush1.bf16.msra.mxu0 0
    %185 = vmatprep.subr.bf16.mxu0 0
    %186 = vmatpush1.bf16.msra.mxu0 0
    %187 = vmatprep.subr.bf16.mxu0 0
    %188 = vmatpush1.bf16.msra.mxu0 0
    %189 = vmatprep.subr.bf16.mxu0 0
    %190 = vmatpush1.bf16.msra.mxu0 0
    %191 = vmatprep.subr.bf16.mxu0 0
    %192 = vmatpush1.bf16.msra.mxu0 0
    %193 = vmatprep.subr.bf16.mxu0 0
    %194 = vmatpush1.bf16.msra.mxu0 0
    %195 = vmatprep.subr.bf16.mxu0 0
    %196 = vmatpush1.bf16.msra.mxu0 0
    %197 = vmatprep.mubr.bf16.mxu0 0
    %198 = vmatmul.mubr.bf16.gmra.mrb[0].mxu0 %v93
    %v199 = vpop.f32.mrb[0].mxu0
    %v200 = vadd.f32 0.0, %v199
    %v201 = vpop.f32.mrb[0].mxu0
    %v202 = vpop.f32.mrb[0].mxu0
    %v203 = vadd.f32 0.0, %v202
    %v204 = vpop.f32.mrb[0].mxu0
    %205 = vmatprep.mubr.bf16.mxu0 0
    %206 = vmatmul.mubr.bf16.gmra.mrb[0].mxu0 %v94
    %v207 = vpop.f32.mrb[0].mxu0
    %v208 = vadd.f32 0.0, %v207
    %v209 = vpop.f32.mrb[0].mxu0
    %v210 = vpop.f32.mrb[0].mxu0
    %v211 = vadd.f32 0.0, %v210
    %v212 = vpop.f32.mrb[0].mxu0
    %213 = vmatprep.mubr.bf16.mxu0 0
    %214 = vmatmul.mubr.bf16.gmra.mrb[0].mxu0 %v95
    %v215 = vpop.f32.mrb[0].mxu0
    %v216 = vadd.f32 0.0, %v215
    %v217 = vpop.f32.mrb[0].mxu0
    %v218 = vpop.f32.mrb[0].mxu0
    %v219 = vadd.f32 0.0, %v218
    %v220 = vpop.f32.mrb[0].mxu0
    %221 = vmatprep.mubr.bf16.mxu0 0
    %222 = vmatmul.mubr.bf16.gmra.mrb[0].mxu0 %v96
    %v223 = vpop.f32.mrb[0].mxu0
    %v224 = vadd.f32 0.0, %v223
    %v225 = vpop.f32.mrb[0].mxu0
    %v226 = vpop.f32.mrb[0].mxu0
    %v227 = vadd.f32 0.0, %v226
    %v228 = vpop.f32.mrb[0].mxu0
    %229 = vmatprep.mubr.bf16.mxu0 0
    %230 = vmatmul.mubr.bf16.gmra.mrb[0].mxu0 %v97
    %v231 = vpop.f32.mrb[0].mxu0
    %v232 = vadd.f32 0.0, %v231
    %v233 = vpop.f32.mrb[0].mxu0
    %v234 = vpop.f32.mrb[0].mxu0
    %v235 = vadd.f32 0.0, %v234
    %v236 = vpop.f32.mrb[0].mxu0
    %237 = vmatprep.mubr.bf16.mxu0 0
    %238 = vmatmul.mubr.bf16.gmra.mrb[0].mxu0 %v98
    %v239 = vpop.f32.mrb[0].mxu0
    %v240 = vadd.f32 0.0, %v239
    %v241 = vpop.f32.mrb[0].mxu0
    %v242 = vpop.f32.mrb[0].mxu0
    %v243 = vadd.f32 0.0, %v242
    %v244 = vpop.f32.mrb[0].mxu0
    %245 = vmatprep.mubr.bf16.mxu0 0
    %246 = vmatmul.mubr.bf16.gmra.mrb[0].mxu0 %v99
    %v247 = vpop.f32.mrb[0].mxu0
    %v248 = vadd.f32 0.0, %v247
    %v249 = vpop.f32.mrb[0].mxu0
    %v250 = vpop.f32.mrb[0].mxu0
    %v251 = vadd.f32 0.0, %v250
    %v252 = vpop.f32.mrb[0].mxu0
    %253 = vmatprep.mubr.bf16.mxu0 0
    %254 = vmatmul.mubr.bf16.gmra.mrb[0].mxu0 %v100
    %v255 = vpop.f32.mrb[0].mxu0
    %v256 = vadd.f32 0.0, %v255
    %v257 = vpop.f32.mrb[0].mxu0
    %v258 = vpop.f32.mrb[0].mxu0
    %v259 = vadd.f32 0.0, %v258
    %v260 = vpop.f32.mrb[0].mxu0
    %261 = vdwg.mxu0
    %v262 = vld [vmem:[#allocation7] sm:$0xff]
    %v263 = vld [vmem:[#allocation7 + $0x8] sm:$0xff]
    %v264 = vld [vmem:[#allocation7 + $0x10] sm:$0xff]
    %v265 = vld [vmem:[#allocation7 + $0x18] sm:$0xff]
    %v266 = vld [vmem:[#allocation7 + $0x20] sm:$0xff]
    %v267 = vld [vmem:[#allocation7 + $0x28] sm:$0xff]
    %v268 = vld [vmem:[#allocation7 + $0x30] sm:$0xff]
    %v269 = vld [vmem:[#allocation7 + $0x38] sm:$0xff]
    %v270 = vld [vmem:[#allocation7 + $0x40] sm:$0xff]
    %v271 = vld [vmem:[#allocation7 + $0x48] sm:$0xff]
    %v272 = vld [vmem:[#allocation7 + $0x50] sm:$0xff]
    %v273 = vld [vmem:[#allocation7 + $0x58] sm:$0xff]
    %v274 = vld [vmem:[#allocation7 + $0x60] sm:$0xff]
    %v275 = vld [vmem:[#allocation7 + $0x68] sm:$0xff]
    %v276 = vld [vmem:[#allocation7 + $0x70] sm:$0xff]
    %v277 = vld [vmem:[#allocation7 + $0x78] sm:$0xff]
    %v294 = vunpack.c.l.b16 %v262
    %v295 = vunpack.c.h.b16 %v262
    %v296 = vunpack.c.l.b16 %v263
    %v297 = vunpack.c.h.b16 %v263
    %v298 = vunpack.c.l.b16 %v264
    %v299 = vunpack.c.h.b16 %v264
    %v300 = vunpack.c.l.b16 %v265
    %v301 = vunpack.c.h.b16 %v265
    %v302 = vunpack.c.l.b16 %v266
    %v303 = vunpack.c.h.b16 %v266
    %v304 = vunpack.c.l.b16 %v267
    %v305 = vunpack.c.h.b16 %v267
    %v306 = vunpack.c.l.b16 %v268
    %v307 = vunpack.c.h.b16 %v268
    %v308 = vunpack.c.l.b16 %v269
    %v309 = vunpack.c.h.b16 %v269
    %v310 = vunpack.c.l.b16 %v270
    %v311 = vunpack.c.h.b16 %v270
    %v312 = vunpack.c.l.b16 %v271
    %v313 = vunpack.c.h.b16 %v271
    %v314 = vunpack.c.l.b16 %v272
    %v315 = vunpack.c.h.b16 %v272
    %v316 = vunpack.c.l.b16 %v273
    %v317 = vunpack.c.h.b16 %v273
    %v318 = vunpack.c.l.b16 %v274
    %v319 = vunpack.c.h.b16 %v274
    %v320 = vunpack.c.l.b16 %v275
    %v321 = vunpack.c.h.b16 %v275
    %v322 = vunpack.c.l.b16 %v276
    %v323 = vunpack.c.h.b16 %v276
    %v324 = vunpack.c.l.b16 %v277
    %v325 = vunpack.c.h.b16 %v277
    %v326 = vpack.c.b16 %v296, %v294
    %v327 = vpack.c.b16 %v297, %v295
    %v328 = vpack.c.b16 %v300, %v298
    %v329 = vpack.c.b16 %v301, %v299
    %v330 = vpack.c.b16 %v304, %v302
    %v331 = vpack.c.b16 %v305, %v303
    %v332 = vpack.c.b16 %v308, %v306
    %v333 = vpack.c.b16 %v309, %v307
    %v334 = vpack.c.b16 %v312, %v310
    %v335 = vpack.c.b16 %v313, %v311
    %v336 = vpack.c.b16 %v316, %v314
    %v337 = vpack.c.b16 %v317, %v315
    %v338 = vpack.c.b16 %v320, %v318
    %v339 = vpack.c.b16 %v321, %v319
    %v340 = vpack.c.b16 %v324, %v322
    %v341 = vpack.c.b16 %v325, %v323
    %358 = vmatprep.subr.bf16.mxu0 %v327
    %359 = vmatpush1.bf16.msra.mxu0 %v326
    %360 = vmatprep.subr.bf16.mxu0 %v329
    %361 = vmatpush1.bf16.msra.mxu0 %v328
    %362 = vmatprep.subr.bf16.mxu0 %v331
    %363 = vmatpush1.bf16.msra.mxu0 %v330
    %364 = vmatprep.subr.bf16.mxu0 %v333
    %365 = vmatpush1.bf16.msra.mxu0 %v332
    %366 = vmatprep.subr.bf16.mxu0 %v335
    %367 = vmatpush1.bf16.msra.mxu0 %v334
    %368 = vmatprep.subr.bf16.mxu0 %v337
    %369 = vmatpush1.bf16.msra.mxu0 %v336
    %370 = vmatprep.subr.bf16.mxu0 %v339
    %371 = vmatpush1.bf16.msra.mxu0 %v338
    %372 = vmatprep.subr.bf16.mxu0 %v341
    %373 = vmatpush1.bf16.msra.mxu0 %v340
    %374 = vmatprep.subr.bf16.mxu0 0
    %375 = vmatpush1.bf16.msra.mxu0 0
    %376 = vmatprep.subr.bf16.mxu0 0
    %377 = vmatpush1.bf16.msra.mxu0 0
    %378 = vmatprep.subr.bf16.mxu0 0
    %379 = vmatpush1.bf16.msra.mxu0 0
    %380 = vmatprep.subr.bf16.mxu0 0
    %381 = vmatpush1.bf16.msra.mxu0 0
    %382 = vmatprep.subr.bf16.mxu0 0
    %383 = vmatpush1.bf16.msra.mxu0 0
    %384 = vmatprep.subr.bf16.mxu0 0
    %385 = vmatpush1.bf16.msra.mxu0 0
    %386 = vmatprep.subr.bf16.mxu0 0
    %387 = vmatpush1.bf16.msra.mxu0 0
    %388 = vmatprep.subr.bf16.mxu0 0
    %389 = vmatpush1.bf16.msra.mxu0 0
    %390 = vmatprep.mubr.bf16.mxu0 0
    %391 = vmatmul.mubr.bf16.gmra.mrb[0].mxu0 %v93
    %v392 = vpop.f32.mrb[0].mxu0
    %v393 = vadd.f32 0.0, %v392
    %v394 = vpop.f32.mrb[0].mxu0
    %v395 = vadd.f32 0.0, %v394
    %v396 = vpop.f32.mrb[0].mxu0
    %v397 = vadd.f32 0.0, %v396
    %v398 = vpop.f32.mrb[0].mxu0
    %v399 = vadd.f32 0.0, %v398
    %400 = vmatprep.mubr.bf16.mxu0 0
    %401 = vmatmul.mubr.bf16.gmra.mrb[0].mxu0 %v94
    %v402 = vpop.f32.mrb[0].mxu0
    %v403 = vadd.f32 0.0, %v402
    %v404 = vpop.f32.mrb[0].mxu0
    %v405 = vadd.f32 0.0, %v404
    %v406 = vpop.f32.mrb[0].mxu0
    %v407 = vadd.f32 0.0, %v406
    %v408 = vpop.f32.mrb[0].mxu0
    %v409 = vadd.f32 0.0, %v408
    %410 = vmatprep.mubr.bf16.mxu0 0
    %411 = vmatmul.mubr.bf16.gmra.mrb[0].mxu0 %v95
    %v412 = vpop.f32.mrb[0].mxu0
    %v413 = vadd.f32 0.0, %v412
    %v414 = vpop.f32.mrb[0].mxu0
    %v415 = vadd.f32 0.0, %v414
    %v416 = vpop.f32.mrb[0].mxu0
    %v417 = vadd.f32 0.0, %v416
    %v418 = vpop.f32.mrb[0].mxu0
    %v419 = vadd.f32 0.0, %v418
    %420 = vmatprep.mubr.bf16.mxu0 0
    %421 = vmatmul.mubr.bf16.gmra.mrb[0].mxu0 %v96
    %v422 = vpop.f32.mrb[0].mxu0
    %v423 = vadd.f32 0.0, %v422
    %v424 = vpop.f32.mrb[0].mxu0
    %v425 = vadd.f32 0.0, %v424
    %v426 = vpop.f32.mrb[0].mxu0
    %v427 = vadd.f32 0.0, %v426
    %v428 = vpop.f32.mrb[0].mxu0
    %v429 = vadd.f32 0.0, %v428
    %430 = vmatprep.mubr.bf16.mxu0 0
    %431 = vmatmul.mubr.bf16.gmra.mrb[0].mxu0 %v97
    %v432 = vpop.f32.mrb[0].mxu0
    %v433 = vadd.f32 0.0, %v432
    %v434 = vpop.f32.mrb[0].mxu0
    %v435 = vadd.f32 0.0, %v434
    %v436 = vpop.f32.mrb[0].mxu0
    %v437 = vadd.f32 0.0, %v436
    %v438 = vpop.f32.mrb[0].mxu0
    %v439 = vadd.f32 0.0, %v438
    %440 = vmatprep.mubr.bf16.mxu0 0
    %441 = vmatmul.mubr.bf16.gmra.mrb[0].mxu0 %v98
    %v442 = vpop.f32.mrb[0].mxu0
    %v443 = vadd.f32 0.0, %v442
    %v444 = vpop.f32.mrb[0].mxu0
    %v445 = vadd.f32 0.0, %v444
    %v446 = vpop.f32.mrb[0].mxu0
    %v447 = vadd.f32 0.0, %v446
    %v448 = vpop.f32.mrb[0].mxu0
    %v449 = vadd.f32 0.0, %v448
    %450 = vmatprep.mubr.bf16.mxu0 0
    %451 = vmatmul.mubr.bf16.gmra.mrb[0].mxu0 %v99
    %v452 = vpop.f32.mrb[0].mxu0
    %v453 = vadd.f32 0.0, %v452
    %v454 = vpop.f32.mrb[0].mxu0
    %v455 = vadd.f32 0.0, %v454
    %v456 = vpop.f32.mrb[0].mxu0
    %v457 = vadd.f32 0.0, %v456
    %v458 = vpop.f32.mrb[0].mxu0
    %v459 = vadd.f32 0.0, %v458
    %460 = vmatprep.mubr.bf16.mxu0 0
    %461 = vmatmul.mubr.bf16.gmra.mrb[0].mxu0 %v100
    %v462 = vpop.f32.mrb[0].mxu0
    %v463 = vadd.f32 0.0, %v462
    %v464 = vpop.f32.mrb[0].mxu0
    %v465 = vadd.f32 0.0, %v464
    %v466 = vpop.f32.mrb[0].mxu0
    %v467 = vadd.f32 0.0, %v466
    %v468 = vpop.f32.mrb[0].mxu0
    %v469 = vadd.f32 0.0, %v468
    %470 = vdwg.mxu0
    %v471 = vmul.f32 %v200, 0.25
    %v472 = vmul.f32 %v203, 0.25
    %v473 = vmul.f32 %v208, 0.25
    %v474 = vmul.f32 %v211, 0.25
    %v475 = vmul.f32 %v216, 0.25
    %v476 = vmul.f32 %v219, 0.25
    %v477 = vmul.f32 %v224, 0.25
    %v478 = vmul.f32 %v227, 0.25
    %v479 = vmul.f32 %v232, 0.25
    %v480 = vmul.f32 %v235, 0.25
    %v481 = vmul.f32 %v240, 0.25
    %v482 = vmul.f32 %v243, 0.25
    %v483 = vmul.f32 %v248, 0.25
    %v484 = vmul.f32 %v251, 0.25
    %v485 = vmul.f32 %v256, 0.25
    %v486 = vmul.f32 %v259, 0.25
    %v487 = vpack.c.bf16 %v472, %v471
    %v488 = vpack.c.bf16 %v474, %v473
    %v489 = vpack.c.bf16 %v476, %v475
    %v490 = vpack.c.bf16 %v478, %v477
    %v491 = vpack.c.bf16 %v480, %v479
    %v492 = vpack.c.bf16 %v482, %v481
    %v493 = vpack.c.bf16 %v484, %v483
    %v494 = vpack.c.bf16 %v486, %v485
    %v495 = vpack.c.bf16 %v397, %v393
    %v496 = vpack.c.bf16 %v407, %v403
    %v497 = vpack.c.bf16 %v417, %v413
    %v498 = vpack.c.bf16 %v427, %v423
    %v499 = vpack.c.bf16 %v437, %v433
    %v500 = vpack.c.bf16 %v447, %v443
    %v501 = vpack.c.bf16 %v457, %v453
    %v502 = vpack.c.bf16 %v467, %v463
    %v503 = vpack.c.bf16 %v399, %v395
    %v504 = vpack.c.bf16 %v409, %v405
    %v505 = vpack.c.bf16 %v419, %v415
    %v506 = vpack.c.bf16 %v429, %v425
    %v507 = vpack.c.bf16 %v439, %v435
    %v508 = vpack.c.bf16 %v449, %v445
    %v509 = vpack.c.bf16 %v459, %v455
    %v510 = vpack.c.bf16 %v469, %v465
    %vm511 = vcmask 130048
    %v513 = vsel %vm511, %v487, 0
    %v516 = vsel %vm511, %v488, 0
    %v519 = vsel %vm511, %v489, 0
    %v522 = vsel %vm511, %v490, 0
    %v525 = vsel %vm511, %v495, 0
    %v528 = vsel %vm511, %v496, 0
    %v531 = vsel %vm511, %v497, 0
    %v534 = vsel %vm511, %v498, 0
    %536 = vmatprep.subr.bf16.mxu0 0
    %537 = vmatpush1.bf16.xpose.msra.mxu0 %v525
    %538 = vmatprep.subr.bf16.mxu0 0
    %539 = vmatpush1.bf16.xpose.msra.mxu0 %v528
    %540 = vmatprep.subr.bf16.mxu0 0
    %541 = vmatpush1.bf16.xpose.msra.mxu0 %v531
    %542 = vmatprep.subr.bf16.mxu0 0
    %543 = vmatpush1.bf16.xpose.msra.mxu0 %v534
    %544 = vmatprep.subr.bf16.mxu0 0
    %545 = vmatpush1.bf16.xpose.msra.mxu0 0
    %546 = vmatprep.subr.bf16.mxu0 0
    %547 = vmatpush1.bf16.xpose.msra.mxu0 0
    %548 = vmatprep.subr.bf16.mxu0 0
    %549 = vmatpush1.bf16.xpose.msra.mxu0 0
    %550 = vmatprep.subr.bf16.mxu0 0
    %551 = vmatpush1.bf16.xpose.msra.mxu0 0
    %552 = vmatprep.subr.bf16.mxu0 0
    %553 = vmatpush1.bf16.xpose.msra.mxu0 0
    %554 = vmatprep.subr.bf16.mxu0 0
    %555 = vmatpush1.bf16.xpose.msra.mxu0 0
    %556 = vmatprep.subr.bf16.mxu0 0
    %557 = vmatpush1.bf16.xpose.msra.mxu0 0
    %558 = vmatprep.subr.bf16.mxu0 0
    %559 = vmatpush1.bf16.xpose.msra.mxu0 0
    %560 = vmatprep.subr.bf16.mxu0 0
    %561 = vmatpush1.bf16.xpose.msra.mxu0 0
    %562 = vmatprep.subr.bf16.mxu0 0
    %563 = vmatpush1.bf16.xpose.msra.mxu0 0
    %564 = vmatprep.subr.bf16.mxu0 0
    %565 = vmatpush1.bf16.xpose.msra.mxu0 0
    %566 = vmatprep.subr.bf16.mxu0 0
    %567 = vmatpush1.bf16.xpose.msra.mxu0 0
    %568 = vmatprep.mubr.bf16.mxu0 0
    %569 = vmatmul.mubr.bf16.gmra.mrb[0].mxu0 %v513
    %v570 = vpop.f32.mrb[0].mxu0
    %v571 = vadd.f32 0.0, %v570
    %v572 = vpop.f32.mrb[0].mxu0
    %v573 = vpop.f32.mrb[0].mxu0
    %v574 = vadd.f32 0.0, %v573
    %v575 = vpop.f32.mrb[0].mxu0
    %576 = vmatprep.mubr.bf16.mxu0 0
    %577 = vmatmul.mubr.bf16.gmra.mrb[0].mxu0 %v516
    %v578 = vpop.f32.mrb[0].mxu0
    %v579 = vadd.f32 0.0, %v578
    %v580 = vpop.f32.mrb[0].mxu0
    %v581 = vpop.f32.mrb[0].mxu0
    %v582 = vadd.f32 0.0, %v581
    %v583 = vpop.f32.mrb[0].mxu0
    %584 = vmatprep.mubr.bf16.mxu0 0
    %585 = vmatmul.mubr.bf16.gmra.mrb[0].mxu0 %v519
    %v586 = vpop.f32.mrb[0].mxu0
    %v587 = vadd.f32 0.0, %v586
    %v588 = vpop.f32.mrb[0].mxu0
    %v589 = vpop.f32.mrb[0].mxu0
    %v590 = vadd.f32 0.0, %v589
    %v591 = vpop.f32.mrb[0].mxu0
    %592 = vmatprep.mubr.bf16.mxu0 0
    %593 = vmatmul.mubr.bf16.gmra.mrb[0].mxu0 %v522
    %v594 = vpop.f32.mrb[0].mxu0
    %v595 = vadd.f32 0.0, %v594
    %v596 = vpop.f32.mrb[0].mxu0
    %v597 = vpop.f32.mrb[0].mxu0
    %v598 = vadd.f32 0.0, %v597
    %v599 = vpop.f32.mrb[0].mxu0
    %600 = vdwg.mxu0
    %v602 = vsel %vm511, %v491, 0
    %v605 = vsel %vm511, %v492, 0
    %v608 = vsel %vm511, %v493, 0
    %v611 = vsel %vm511, %v494, 0
    %v614 = vsel %vm511, %v499, 0
    %v617 = vsel %vm511, %v500, 0
    %v620 = vsel %vm511, %v501, 0
    %v623 = vsel %vm511, %v502, 0
    %625 = vmatprep.subr.bf16.mxu0 0
    %626 = vmatpush1.bf16.xpose.msra.mxu0 %v614
    %627 = vmatprep.subr.bf16.mxu0 0
    %628 = vmatpush1.bf16.xpose.msra.mxu0 %v617
    %629 = vmatprep.subr.bf16.mxu0 0
    %630 = vmatpush1.bf16.xpose.msra.mxu0 %v620
    %631 = vmatprep.subr.bf16.mxu0 0
    %632 = vmatpush1.bf16.xpose.msra.mxu0 %v623
    %633 = vmatprep.subr.bf16.mxu0 0
    %634 = vmatpush1.bf16.xpose.msra.mxu0 0
    %635 = vmatprep.subr.bf16.mxu0 0
    %636 = vmatpush1.bf16.xpose.msra.mxu0 0
    %637 = vmatprep.subr.bf16.mxu0 0
    %638 = vmatpush1.bf16.xpose.msra.mxu0 0
    %639 = vmatprep.subr.bf16.mxu0 0
    %640 = vmatpush1.bf16.xpose.msra.mxu0 0
    %641 = vmatprep.subr.bf16.mxu0 0
    %642 = vmatpush1.bf16.xpose.msra.mxu0 0
    %643 = vmatprep.subr.bf16.mxu0 0
    %644 = vmatpush1.bf16.xpose.msra.mxu0 0
    %645 = vmatprep.subr.bf16.mxu0 0
    %646 = vmatpush1.bf16.xpose.msra.mxu0 0
    %647 = vmatprep.subr.bf16.mxu0 0
    %648 = vmatpush1.bf16.xpose.msra.mxu0 0
    %649 = vmatprep.subr.bf16.mxu0 0
    %650 = vmatpush1.bf16.xpose.msra.mxu0 0
    %651 = vmatprep.subr.bf16.mxu0 0
    %652 = vmatpush1.bf16.xpose.msra.mxu0 0
    %653 = vmatprep.subr.bf16.mxu0 0
    %654 = vmatpush1.bf16.xpose.msra.mxu0 0
    %655 = vmatprep.subr.bf16.mxu0 0
    %656 = vmatpush1.bf16.xpose.msra.mxu0 0
    %657 = vmatprep.mubr.bf16.mxu0 0
    %658 = vmatmul.mubr.bf16.gmra.mrb[0].mxu0 %v602
    %v659 = vpop.f32.mrb[0].mxu0
    %v660 = vadd.f32 0.0, %v659
    %v661 = vpop.f32.mrb[0].mxu0
    %v662 = vpop.f32.mrb[0].mxu0
    %v663 = vadd.f32 0.0, %v662
    %v664 = vpop.f32.mrb[0].mxu0
    %665 = vmatprep.mubr.bf16.mxu0 0
    %666 = vmatmul.mubr.bf16.gmra.mrb[0].mxu0 %v605
    %v667 = vpop.f32.mrb[0].mxu0
    %v668 = vadd.f32 0.0, %v667
    %v669 = vpop.f32.mrb[0].mxu0
    %v670 = vpop.f32.mrb[0].mxu0
    %v671 = vadd.f32 0.0, %v670
    %v672 = vpop.f32.mrb[0].mxu0
    %673 = vmatprep.mubr.bf16.mxu0 0
    %674 = vmatmul.mubr.bf16.gmra.mrb[0].mxu0 %v608
    %v675 = vpop.f32.mrb[0].mxu0
    %v676 = vadd.f32 0.0, %v675
    %v677 = vpop.f32.mrb[0].mxu0
    %v678 = vpop.f32.mrb[0].mxu0
    %v679 = vadd.f32 0.0, %v678
    %v680 = vpop.f32.mrb[0].mxu0
    %681 = vmatprep.mubr.bf16.mxu0 0
    %682 = vmatmul.mubr.bf16.gmra.mrb[0].mxu0 %v611
    %v683 = vpop.f32.mrb[0].mxu0
    %v684 = vadd.f32 0.0, %v683
    %v685 = vpop.f32.mrb[0].mxu0
    %v686 = vpop.f32.mrb[0].mxu0
    %v687 = vadd.f32 0.0, %v686
    %v688 = vpop.f32.mrb[0].mxu0
    %689 = vdwg.mxu0
    %vm690 = vcmask 523264
    %v691 = vsel %vm690, %v571, -inf
    %692 = vmax.xlane.f32.xlu0 %v691
    %v693 = vpop.xlane.xlu0 %692
    %v694 = vsel %vm690, %v574, -inf
    %695 = vmax.xlane.f32.xlu0 %v694
    %v696 = vpop.xlane.xlu0 %695
    %v697 = vsel %vm690, %v579, -inf
    %698 = vmax.xlane.f32.xlu0 %v697
    %v699 = vpop.xlane.xlu0 %698
    %v700 = vsel %vm690, %v582, -inf
    %701 = vmax.xlane.f32.xlu0 %v700
    %v702 = vpop.xlane.xlu0 %701
    %v703 = vsel %vm690, %v587, -inf
    %704 = vmax.xlane.f32.xlu0 %v703
    %v705 = vpop.xlane.xlu0 %704
    %v706 = vsel %vm690, %v590, -inf
    %707 = vmax.xlane.f32.xlu0 %v706
    %v708 = vpop.xlane.xlu0 %707
    %v709 = vsel %vm690, %v595, -inf
    %710 = vmax.xlane.f32.xlu0 %v709
    %v711 = vpop.xlane.xlu0 %710
    %v712 = vsel %vm690, %v598, -inf
    %713 = vmax.xlane.f32.xlu0 %v712
    %v714 = vpop.xlane.xlu0 %713
    %v715 = vsel %vm690, %v660, -inf
    %716 = vmax.xlane.f32.xlu0 %v715
    %v717 = vpop.xlane.xlu0 %716
    %v718 = vsel %vm690, %v663, -inf
    %719 = vmax.xlane.f32.xlu0 %v718
    %v720 = vpop.xlane.xlu0 %719
    %v721 = vsel %vm690, %v668, -inf
    %722 = vmax.xlane.f32.xlu0 %v721
    %v723 = vpop.xlane.xlu0 %722
    %v724 = vsel %vm690, %v671, -inf
    %725 = vmax.xlane.f32.xlu0 %v724
    %v726 = vpop.xlane.xlu0 %725
    %v727 = vsel %vm690, %v676, -inf
    %728 = vmax.xlane.f32.xlu0 %v727
    %v729 = vpop.xlane.xlu0 %728
    %v730 = vsel %vm690, %v679, -inf
    %731 = vmax.xlane.f32.xlu0 %v730
    %v732 = vpop.xlane.xlu0 %731
    %v733 = vsel %vm690, %v684, -inf
    %734 = vmax.xlane.f32.xlu0 %v733
    %v735 = vpop.xlane.xlu0 %734
    %v736 = vsel %vm690, %v687, -inf
    %737 = vmax.xlane.f32.xlu0 %v736
    %v738 = vpop.xlane.xlu0 %737
    %v739 = vsub.f32 %v571, %v693
    %v740 = vsub.f32 %v574, %v696
    %v741 = vsub.f32 %v579, %v699
    %v742 = vsub.f32 %v582, %v702
    %v743 = vsub.f32 %v587, %v705
    %v744 = vsub.f32 %v590, %v708
    %v745 = vsub.f32 %v595, %v711
    %v746 = vsub.f32 %v598, %v714
    %v747 = vsub.f32 %v660, %v717
    %v748 = vsub.f32 %v663, %v720
    %v749 = vsub.f32 %v668, %v723
    %v750 = vsub.f32 %v671, %v726
    %v751 = vsub.f32 %v676, %v729
    %v752 = vsub.f32 %v679, %v732
    %v753 = vsub.f32 %v684, %v735
    %v754 = vsub.f32 %v687, %v738
    %v755 = vmul.f32 %v739, 1.442695
    %v756 = vpow.pop %v755
    %v757 = vmul.f32 %v740, 1.442695
    %v758 = vpow.pop %v757
    %v759 = vmul.f32 %v741, 1.442695
    %v760 = vpow.pop %v759
    %v761 = vmul.f32 %v742, 1.442695
    %v762 = vpow.pop %v761
    %v763 = vmul.f32 %v743, 1.442695
    %v764 = vpow.pop %v763
    %v765 = vmul.f32 %v744, 1.442695
    %v766 = vpow.pop %v765
    %v767 = vmul.f32 %v745, 1.442695
    %v768 = vpow.pop %v767
    %v769 = vmul.f32 %v746, 1.442695
    %v770 = vpow.pop %v769
    %v771 = vmul.f32 %v747, 1.442695
    %v772 = vpow.pop %v771
    %v773 = vmul.f32 %v748, 1.442695
    %v774 = vpow.pop %v773
    %v775 = vmul.f32 %v749, 1.442695
    %v776 = vpow.pop %v775
    %v777 = vmul.f32 %v750, 1.442695
    %v778 = vpow.pop %v777
    %v779 = vmul.f32 %v751, 1.442695
    %v780 = vpow.pop %v779
    %v781 = vmul.f32 %v752, 1.442695
    %v782 = vpow.pop %v781
    %v783 = vmul.f32 %v753, 1.442695
    %v784 = vpow.pop %v783
    %v785 = vmul.f32 %v754, 1.442695
    %v786 = vpow.pop %v785
    %v787 = vsel %vm690, %v756, 0.0
    %788 = vadd.xlane.f32.xlu0 %v787
    %v789 = vpop.xlane.xlu0 %788
    %v790 = vsel %vm690, %v758, 0.0
    %791 = vadd.xlane.f32.xlu0 %v790
    %v792 = vpop.xlane.xlu0 %791
    %v793 = vsel %vm690, %v760, 0.0
    %794 = vadd.xlane.f32.xlu0 %v793
    %v795 = vpop.xlane.xlu0 %794
    %v796 = vsel %vm690, %v762, 0.0
    %797 = vadd.xlane.f32.xlu0 %v796
    %v798 = vpop.xlane.xlu0 %797
    %v799 = vsel %vm690, %v764, 0.0
    %800 = vadd.xlane.f32.xlu0 %v799
    %v801 = vpop.xlane.xlu0 %800
    %v802 = vsel %vm690, %v766, 0.0
    %803 = vadd.xlane.f32.xlu0 %v802
    %v804 = vpop.xlane.xlu0 %803
    %v805 = vsel %vm690, %v768, 0.0
    %806 = vadd.xlane.f32.xlu0 %v805
    %v807 = vpop.xlane.xlu0 %806
    %v808 = vsel %vm690, %v770, 0.0
    %809 = vadd.xlane.f32.xlu0 %v808
    %v810 = vpop.xlane.xlu0 %809
    %v811 = vsel %vm690, %v772, 0.0
    %812 = vadd.xlane.f32.xlu0 %v811
    %v813 = vpop.xlane.xlu0 %812
    %v814 = vsel %vm690, %v774, 0.0
    %815 = vadd.xlane.f32.xlu0 %v814
    %v816 = vpop.xlane.xlu0 %815
    %v817 = vsel %vm690, %v776, 0.0
    %818 = vadd.xlane.f32.xlu0 %v817
    %v819 = vpop.xlane.xlu0 %818
    %v820 = vsel %vm690, %v778, 0.0
    %821 = vadd.xlane.f32.xlu0 %v820
    %v822 = vpop.xlane.xlu0 %821
    %v823 = vsel %vm690, %v780, 0.0
    %824 = vadd.xlane.f32.xlu0 %v823
    %v825 = vpop.xlane.xlu0 %824
    %v826 = vsel %vm690, %v782, 0.0
    %827 = vadd.xlane.f32.xlu0 %v826
    %v828 = vpop.xlane.xlu0 %827
    %v829 = vsel %vm690, %v784, 0.0
    %830 = vadd.xlane.f32.xlu0 %v829
    %v831 = vpop.xlane.xlu0 %830
    %v832 = vsel %vm690, %v786, 0.0
    %833 = vadd.xlane.f32.xlu0 %v832
    %v834 = vpop.xlane.xlu0 %833
    %v835 = vrcp.pop %v789
    %v836 = vrcp.pop %v792
    %v837 = vrcp.pop %v795
    %v838 = vrcp.pop %v798
    %v839 = vrcp.pop %v801
    %v840 = vrcp.pop %v804
    %v841 = vrcp.pop %v807
    %v842 = vrcp.pop %v810
    %v843 = vrcp.pop %v813
    %v844 = vrcp.pop %v816
    %v845 = vrcp.pop %v819
    %v846 = vrcp.pop %v822
    %v847 = vrcp.pop %v825
    %v848 = vrcp.pop %v828
    %v849 = vrcp.pop %v831
    %v850 = vrcp.pop %v834
    %v851 = vmul.f32 %v756, %v835
    %v852 = vmul.f32 %v758, %v836
    %v853 = vmul.f32 %v760, %v837
    %v854 = vmul.f32 %v762, %v838
    %v855 = vmul.f32 %v764, %v839
    %v856 = vmul.f32 %v766, %v840
    %v857 = vmul.f32 %v768, %v841
    %v858 = vmul.f32 %v770, %v842
    %v859 = vmul.f32 %v772, %v843
    %v860 = vmul.f32 %v774, %v844
    %v861 = vmul.f32 %v776, %v845
    %v862 = vmul.f32 %v778, %v846
    %v863 = vmul.f32 %v780, %v847
    %v864 = vmul.f32 %v782, %v848
    %v865 = vmul.f32 %v784, %v849
    %v866 = vmul.f32 %v786, %v850
    %v867 = vpack.c.bf16 %v852, %v851
    %v868 = vpack.c.bf16 %v854, %v853
    %v869 = vpack.c.bf16 %v856, %v855
    %v870 = vpack.c.bf16 %v858, %v857
    %v871 = vpack.c.bf16 %v860, %v859
    %v872 = vpack.c.bf16 %v862, %v861
    %v873 = vpack.c.bf16 %v864, %v863
    %v874 = vpack.c.bf16 %v866, %v865
    %v876 = vsel %vm690, %v867, 0
    %v879 = vsel %vm690, %v868, 0
    %v882 = vsel %vm690, %v869, 0
    %v885 = vsel %vm690, %v870, 0
    %887 = vmatprep.subr.bf16.mxu0 0
    %888 = vmatpush1.bf16.msra.mxu0 %v503
    %889 = vmatprep.subr.bf16.mxu0 0
    %890 = vmatpush1.bf16.msra.mxu0 %v504
    %891 = vmatprep.subr.bf16.mxu0 0
    %892 = vmatpush1.bf16.msra.mxu0 %v505
    %893 = vmatprep.subr.bf16.mxu0 0
    %894 = vmatpush1.bf16.msra.mxu0 %v506
    %895 = vmatprep.subr.bf16.mxu0 0
    %896 = vmatpush1.bf16.msra.mxu0 0
    %897 = vmatprep.subr.bf16.mxu0 0
    %898 = vmatpush1.bf16.msra.mxu0 0
    %899 = vmatprep.subr.bf16.mxu0 0
    %900 = vmatpush1.bf16.msra.mxu0 0
    %901 = vmatprep.subr.bf16.mxu0 0
    %902 = vmatpush1.bf16.msra.mxu0 0
    %903 = vmatprep.subr.bf16.mxu0 0
    %904 = vmatpush1.bf16.msra.mxu0 0
    %905 = vmatprep.subr.bf16.mxu0 0
    %906 = vmatpush1.bf16.msra.mxu0 0
    %907 = vmatprep.subr.bf16.mxu0 0
    %908 = vmatpush1.bf16.msra.mxu0 0
    %909 = vmatprep.subr.bf16.mxu0 0
    %910 = vmatpush1.bf16.msra.mxu0 0
    %911 = vmatprep.subr.bf16.mxu0 0
    %912 = vmatpush1.bf16.msra.mxu0 0
    %913 = vmatprep.subr.bf16.mxu0 0
    %914 = vmatpush1.bf16.msra.mxu0 0
    %915 = vmatprep.subr.bf16.mxu0 0
    %916 = vmatpush1.bf16.msra.mxu0 0
    %917 = vmatprep.subr.bf16.mxu0 0
    %918 = vmatpush1.bf16.msra.mxu0 0
    %919 = vmatprep.mubr.bf16.mxu0 0
    %920 = vmatmul.mubr.bf16.gmra.mrb[0].mxu0 %v876
    %v921 = vpop.f32.mrb[0].mxu0
    %v922 = vadd.f32 0.0, %v921
    %v923 = vpop.f32.mrb[0].mxu0
    %v924 = vpop.f32.mrb[0].mxu0
    %v925 = vadd.f32 0.0, %v924
    %v926 = vpop.f32.mrb[0].mxu0
    %927 = vmatprep.mubr.bf16.mxu0 0
    %928 = vmatmul.mubr.bf16.gmra.mrb[0].mxu0 %v879
    %v929 = vpop.f32.mrb[0].mxu0
    %v930 = vadd.f32 0.0, %v929
    %v931 = vpop.f32.mrb[0].mxu0
    %v932 = vpop.f32.mrb[0].mxu0
    %v933 = vadd.f32 0.0, %v932
    %v934 = vpop.f32.mrb[0].mxu0
    %935 = vmatprep.mubr.bf16.mxu0 0
    %936 = vmatmul.mubr.bf16.gmra.mrb[0].mxu0 %v882
    %v937 = vpop.f32.mrb[0].mxu0
    %v938 = vadd.f32 0.0, %v937
    %v939 = vpop.f32.mrb[0].mxu0
    %v940 = vpop.f32.mrb[0].mxu0
    %v941 = vadd.f32 0.0, %v940
    %v942 = vpop.f32.mrb[0].mxu0
    %943 = vmatprep.mubr.bf16.mxu0 0
    %944 = vmatmul.mubr.bf16.gmra.mrb[0].mxu0 %v885
    %v945 = vpop.f32.mrb[0].mxu0
    %v946 = vadd.f32 0.0, %v945
    %v947 = vpop.f32.mrb[0].mxu0
    %v948 = vpop.f32.mrb[0].mxu0
    %v949 = vadd.f32 0.0, %v948
    %v950 = vpop.f32.mrb[0].mxu0
    %951 = vdwg.mxu0
    %v953 = vsel %vm690, %v871, 0
    %v956 = vsel %vm690, %v872, 0
    %v959 = vsel %vm690, %v873, 0
    %v962 = vsel %vm690, %v874, 0
    %964 = vmatprep.subr.bf16.mxu0 0
    %965 = vmatpush1.bf16.msra.mxu0 %v507
    %966 = vmatprep.subr.bf16.mxu0 0
    %967 = vmatpush1.bf16.msra.mxu0 %v508
    %968 = vmatprep.subr.bf16.mxu0 0
    %969 = vmatpush1.bf16.msra.mxu0 %v509
    %970 = vmatprep.subr.bf16.mxu0 0
    %971 = vmatpush1.bf16.msra.mxu0 %v510
    %972 = vmatprep.subr.bf16.mxu0 0
    %973 = vmatpush1.bf16.msra.mxu0 0
    %974 = vmatprep.subr.bf16.mxu0 0
    %975 = vmatpush1.bf16.msra.mxu0 0
    %976 = vmatprep.subr.bf16.mxu0 0
    %977 = vmatpush1.bf16.msra.mxu0 0
    %978 = vmatprep.subr.bf16.mxu0 0
    %979 = vmatpush1.bf16.msra.mxu0 0
    %980 = vmatprep.subr.bf16.mxu0 0
    %981 = vmatpush1.bf16.msra.mxu0 0
    %982 = vmatprep.subr.bf16.mxu0 0
    %983 = vmatpush1.bf16.msra.mxu0 0
    %984 = vmatprep.subr.bf16.mxu0 0
    %985 = vmatpush1.bf16.msra.mxu0 0
    %986 = vmatprep.subr.bf16.mxu0 0
    %987 = vmatpush1.bf16.msra.mxu0 0
    %988 = vmatprep.subr.bf16.mxu0 0
    %989 = vmatpush1.bf16.msra.mxu0 0
    %990 = vmatprep.subr.bf16.mxu0 0
    %991 = vmatpush1.bf16.msra.mxu0 0
    %992 = vmatprep.subr.bf16.mxu0 0
    %993 = vmatpush1.bf16.msra.mxu0 0
    %994 = vmatprep.subr.bf16.mxu0 0
    %995 = vmatpush1.bf16.msra.mxu0 0
    %996 = vmatprep.mubr.bf16.mxu0 0
    %997 = vmatmul.mubr.bf16.gmra.mrb[0].mxu0 %v953
    %v998 = vpop.f32.mrb[0].mxu0
    %v999 = vadd.f32 0.0, %v998
    %v1000 = vpop.f32.mrb[0].mxu0
    %v1001 = vpop.f32.mrb[0].mxu0
    %v1002 = vadd.f32 0.0, %v1001
    %v1003 = vpop.f32.mrb[0].mxu0
    %1004 = vmatprep.mubr.bf16.mxu0 0
    %1005 = vmatmul.mubr.bf16.gmra.mrb[0].mxu0 %v956
    %v1006 = vpop.f32.mrb[0].mxu0
    %v1007 = vadd.f32 0.0, %v1006
    %v1008 = vpop.f32.mrb[0].mxu0
    %v1009 = vpop.f32.mrb[0].mxu0
    %v1010 = vadd.f32 0.0, %v1009
    %v1011 = vpop.f32.mrb[0].mxu0
    %1012 = vmatprep.mubr.bf16.mxu0 0
    %1013 = vmatmul.mubr.bf16.gmra.mrb[0].mxu0 %v959
    %v1014 = vpop.f32.mrb[0].mxu0
    %v1015 = vadd.f32 0.0, %v1014
    %v1016 = vpop.f32.mrb[0].mxu0
    %v1017 = vpop.f32.mrb[0].mxu0
    %v1018 = vadd.f32 0.0, %v1017
    %v1019 = vpop.f32.mrb[0].mxu0
    %1020 = vmatprep.mubr.bf16.mxu0 0
    %1021 = vmatmul.mubr.bf16.gmra.mrb[0].mxu0 %v962
    %v1022 = vpop.f32.mrb[0].mxu0
    %v1023 = vadd.f32 0.0, %v1022
    %v1024 = vpop.f32.mrb[0].mxu0
    %v1025 = vpop.f32.mrb[0].mxu0
    %v1026 = vadd.f32 0.0, %v1025
    %v1027 = vpop.f32.mrb[0].mxu0
    %1028 = vdwg.mxu0
    %1033 = vrot.lane.b32.xlu0 %v487, 112
    %v1034 = vpop.permute.xlu0 %1033
    %1035 = vrot.lane.b32.xlu0 %v488, 112
    %v1036 = vpop.permute.xlu0 %1035
    %1037 = vrot.lane.b32.xlu0 %v489, 112
    %v1038 = vpop.permute.xlu0 %1037
    %1039 = vrot.lane.b32.xlu0 %v490, 112
    %v1040 = vpop.permute.xlu0 %1039
    %1045 = vrot.lane.b32.xlu0 %v495, 112
    %v1046 = vpop.permute.xlu0 %1045
    %1047 = vrot.lane.b32.xlu0 %v496, 112
    %v1048 = vpop.permute.xlu0 %1047
    %1049 = vrot.lane.b32.xlu0 %v497, 112
    %v1050 = vpop.permute.xlu0 %1049
    %1051 = vrot.lane.b32.xlu0 %v498, 112
    %v1052 = vpop.permute.xlu0 %1051
    %v1054 = vsel %vm511, %v1034, 0
    %v1057 = vsel %vm511, %v1036, 0
    %v1060 = vsel %vm511, %v1038, 0
    %v1063 = vsel %vm511, %v1040, 0
    %v1066 = vsel %vm511, %v1046, 0
    %v1069 = vsel %vm511, %v1048, 0
    %v1072 = vsel %vm511, %v1050, 0
    %v1075 = vsel %vm511, %v1052, 0
    %1077 = vmatprep.subr.bf16.mxu0 0
    %1078 = vmatpush1.bf16.xpose.msra.mxu0 %v1066
    %1079 = vmatprep.subr.bf16.mxu0 0
    %1080 = vmatpush1.bf16.xpose.msra.mxu0 %v1069
    %1081 = vmatprep.subr.bf16.mxu0 0
    %1082 = vmatpush1.bf16.xpose.msra.mxu0 %v1072
    %1083 = vmatprep.subr.bf16.mxu0 0
    %1084 = vmatpush1.bf16.xpose.msra.mxu0 %v1075
    %1085 = vmatprep.subr.bf16.mxu0 0
    %1086 = vmatpush1.bf16.xpose.msra.mxu0 0
    %1087 = vmatprep.subr.bf16.mxu0 0
    %1088 = vmatpush1.bf16.xpose.msra.mxu0 0
    %1089 = vmatprep.subr.bf16.mxu0 0
    %1090 = vmatpush1.bf16.xpose.msra.mxu0 0
    %1091 = vmatprep.subr.bf16.mxu0 0
    %1092 = vmatpush1.bf16.xpose.msra.mxu0 0
    %1093 = vmatprep.subr.bf16.mxu0 0
    %1094 = vmatpush1.bf16.xpose.msra.mxu0 0
    %1095 = vmatprep.subr.bf16.mxu0 0
    %1096 = vmatpush1.bf16.xpose.msra.mxu0 0
    %1097 = vmatprep.subr.bf16.mxu0 0
    %1098 = vmatpush1.bf16.xpose.msra.mxu0 0
    %1099 = vmatprep.subr.bf16.mxu0 0
    %1100 = vmatpush1.bf16.xpose.msra.mxu0 0
    %1101 = vmatprep.subr.bf16.mxu0 0
    %1102 = vmatpush1.bf16.xpose.msra.mxu0 0
    %1103 = vmatprep.subr.bf16.mxu0 0
    %1104 = vmatpush1.bf16.xpose.msra.mxu0 0
    %1105 = vmatprep.subr.bf16.mxu0 0
    %1106 = vmatpush1.bf16.xpose.msra.mxu0 0
    %1107 = vmatprep.subr.bf16.mxu0 0
    %1108 = vmatpush1.bf16.xpose.msra.mxu0 0
    %1109 = vmatprep.mubr.bf16.mxu0 0
    %1110 = vmatmul.mubr.bf16.gmra.mrb[0].mxu0 %v1054
    %v1111 = vpop.f32.mrb[0].mxu0
    %v1112 = vadd.f32 0.0, %v1111
    %v1113 = vpop.f32.mrb[0].mxu0
    %v1114 = vpop.f32.mrb[0].mxu0
    %v1115 = vadd.f32 0.0, %v1114
    %v1116 = vpop.f32.mrb[0].mxu0
    %1117 = vmatprep.mubr.bf16.mxu0 0
    %1118 = vmatmul.mubr.bf16.gmra.mrb[0].mxu0 %v1057
    %v1119 = vpop.f32.mrb[0].mxu0
    %v1120 = vadd.f32 0.0, %v1119
    %v1121 = vpop.f32.mrb[0].mxu0
    %v1122 = vpop.f32.mrb[0].mxu0
    %v1123 = vadd.f32 0.0, %v1122
    %v1124 = vpop.f32.mrb[0].mxu0
    %1125 = vmatprep.mubr.bf16.mxu0 0
    %1126 = vmatmul.mubr.bf16.gmra.mrb[0].mxu0 %v1060
    %v1127 = vpop.f32.mrb[0].mxu0
    %v1128 = vadd.f32 0.0, %v1127
    %v1129 = vpop.f32.mrb[0].mxu0
    %v1130 = vpop.f32.mrb[0].mxu0
    %v1131 = vadd.f32 0.0, %v1130
    %v1132 = vpop.f32.mrb[0].mxu0
    %1133 = vmatprep.mubr.bf16.mxu0 0
    %1134 = vmatmul.mubr.bf16.gmra.mrb[0].mxu0 %v1063
    %v1135 = vpop.f32.mrb[0].mxu0
    %v1136 = vadd.f32 0.0, %v1135
    %v1137 = vpop.f32.mrb[0].mxu0
    %v1138 = vpop.f32.mrb[0].mxu0
    %v1139 = vadd.f32 0.0, %v1138
    %v1140 = vpop.f32.mrb[0].mxu0
    %1141 = vdwg.mxu0
    %1146 = vrot.lane.b32.xlu0 %v491, 112
    %v1147 = vpop.permute.xlu0 %1146
    %1148 = vrot.lane.b32.xlu0 %v492, 112
    %v1149 = vpop.permute.xlu0 %1148
    %1150 = vrot.lane.b32.xlu0 %v493, 112
    %v1151 = vpop.permute.xlu0 %1150
    %1152 = vrot.lane.b32.xlu0 %v494, 112
    %v1153 = vpop.permute.xlu0 %1152
    %1158 = vrot.lane.b32.xlu0 %v499, 112
    %v1159 = vpop.permute.xlu0 %1158
    %1160 = vrot.lane.b32.xlu0 %v500, 112
    %v1161 = vpop.permute.xlu0 %1160
    %1162 = vrot.lane.b32.xlu0 %v501, 112
    %v1163 = vpop.permute.xlu0 %1162
    %1164 = vrot.lane.b32.xlu0 %v502, 112
    %v1165 = vpop.permute.xlu0 %1164
    %v1167 = vsel %vm511, %v1147, 0
    %v1170 = vsel %vm511, %v1149, 0
    %v1173 = vsel %vm511, %v1151, 0
    %v1176 = vsel %vm511, %v1153, 0
    %v1179 = vsel %vm511, %v1159, 0
    %v1182 = vsel %vm511, %v1161, 0
    %v1185 = vsel %vm511, %v1163, 0
    %v1188 = vsel %vm511, %v1165, 0
    %1190 = vmatprep.subr.bf16.mxu0 0
    %1191 = vmatpush1.bf16.xpose.msra.mxu0 %v1179
    %1192 = vmatprep.subr.bf16.mxu0 0
    %1193 = vmatpush1.bf16.xpose.msra.mxu0 %v1182
    %1194 = vmatprep.subr.bf16.mxu0 0
    %1195 = vmatpush1.bf16.xpose.msra.mxu0 %v1185
    %1196 = vmatprep.subr.bf16.mxu0 0
    %1197 = vmatpush1.bf16.xpose.msra.mxu0 %v1188
    %1198 = vmatprep.subr.bf16.mxu0 0
    %1199 = vmatpush1.bf16.xpose.msra.mxu0 0
    %1200 = vmatprep.subr.bf16.mxu0 0
    %1201 = vmatpush1.bf16.xpose.msra.mxu0 0
    %1202 = vmatprep.subr.bf16.mxu0 0
    %1203 = vmatpush1.bf16.xpose.msra.mxu0 0
    %1204 = vmatprep.subr.bf16.mxu0 0
    %1205 = vmatpush1.bf16.xpose.msra.mxu0 0
    %1206 = vmatprep.subr.bf16.mxu0 0
    %1207 = vmatpush1.bf16.xpose.msra.mxu0 0
    %1208 = vmatprep.subr.bf16.mxu0 0
    %1209 = vmatpush1.bf16.xpose.msra.mxu0 0
    %1210 = vmatprep.subr.bf16.mxu0 0
    %1211 = vmatpush1.bf16.xpose.msra.mxu0 0
    %1212 = vmatprep.subr.bf16.mxu0 0
    %1213 = vmatpush1.bf16.xpose.msra.mxu0 0
    %1214 = vmatprep.subr.bf16.mxu0 0
    %1215 = vmatpush1.bf16.xpose.msra.mxu0 0
    %1216 = vmatprep.subr.bf16.mxu0 0
    %1217 = vmatpush1.bf16.xpose.msra.mxu0 0
    %1218 = vmatprep.subr.bf16.mxu0 0
    %1219 = vmatpush1.bf16.xpose.msra.mxu0 0
    %1220 = vmatprep.subr.bf16.mxu0 0
    %1221 = vmatpush1.bf16.xpose.msra.mxu0 0
    %1222 = vmatprep.mubr.bf16.mxu0 0
    %1223 = vmatmul.mubr.bf16.gmra.mrb[0].mxu0 %v1167
    %v1224 = vpop.f32.mrb[0].mxu0
    %v1225 = vadd.f32 0.0, %v1224
    %v1226 = vpop.f32.mrb[0].mxu0
    %v1227 = vpop.f32.mrb[0].mxu0
    %v1228 = vadd.f32 0.0, %v1227
    %v1229 = vpop.f32.mrb[0].mxu0
    %1230 = vmatprep.mubr.bf16.mxu0 0
    %1231 = vmatmul.mubr.bf16.gmra.mrb[0].mxu0 %v1170
    %v1232 = vpop.f32.mrb[0].mxu0
    %v1233 = vadd.f32 0.0, %v1232
    %v1234 = vpop.f32.mrb[0].mxu0
    %v1235 = vpop.f32.mrb[0].mxu0
    %v1236 = vadd.f32 0.0, %v1235
    %v1237 = vpop.f32.mrb[0].mxu0
    %1238 = vmatprep.mubr.bf16.mxu0 0
    %1239 = vmatmul.mubr.bf16.gmra.mrb[0].mxu0 %v1173
    %v1240 = vpop.f32.mrb[0].mxu0
    %v1241 = vadd.f32 0.0, %v1240
    %v1242 = vpop.f32.mrb[0].mxu0
    %v1243 = vpop.f32.mrb[0].mxu0
    %v1244 = vadd.f32 0.0, %v1243
    %v1245 = vpop.f32.mrb[0].mxu0
    %1246 = vmatprep.mubr.bf16.mxu0 0
    %1247 = vmatmul.mubr.bf16.gmra.mrb[0].mxu0 %v1176
    %v1248 = vpop.f32.mrb[0].mxu0
    %v1249 = vadd.f32 0.0, %v1248
    %v1250 = vpop.f32.mrb[0].mxu0
    %v1251 = vpop.f32.mrb[0].mxu0
    %v1252 = vadd.f32 0.0, %v1251
    %v1253 = vpop.f32.mrb[0].mxu0
    %1254 = vdwg.mxu0
    %v1255 = vsel %vm690, %v1112, -inf
    %1256 = vmax.xlane.f32.xlu0 %v1255
    %v1257 = vpop.xlane.xlu0 %1256
    %v1258 = vsel %vm690, %v1115, -inf
    %1259 = vmax.xlane.f32.xlu0 %v1258
    %v1260 = vpop.xlane.xlu0 %1259
    %v1261 = vsel %vm690, %v1120, -inf
    %1262 = vmax.xlane.f32.xlu0 %v1261
    %v1263 = vpop.xlane.xlu0 %1262
    %v1264 = vsel %vm690, %v1123, -inf
    %1265 = vmax.xlane.f32.xlu0 %v1264
    %v1266 = vpop.xlane.xlu0 %1265
    %v1267 = vsel %vm690, %v1128, -inf
    %1268 = vmax.xlane.f32.xlu0 %v1267
    %v1269 = vpop.xlane.xlu0 %1268
    %v1270 = vsel %vm690, %v1131, -inf
    %1271 = vmax.xlane.f32.xlu0 %v1270
    %v1272 = vpop.xlane.xlu0 %1271
    %v1273 = vsel %vm690, %v1136, -inf
    %1274 = vmax.xlane.f32.xlu0 %v1273
    %v1275 = vpop.xlane.xlu0 %1274
    %v1276 = vsel %vm690, %v1139, -inf
    %1277 = vmax.xlane.f32.xlu0 %v1276
    %v1278 = vpop.xlane.xlu0 %1277
    %v1279 = vsel %vm690, %v1225, -inf
    %1280 = vmax.xlane.f32.xlu0 %v1279
    %v1281 = vpop.xlane.xlu0 %1280
    %v1282 = vsel %vm690, %v1228, -inf
    %1283 = vmax.xlane.f32.xlu0 %v1282
    %v1284 = vpop.xlane.xlu0 %1283
    %v1285 = vsel %vm690, %v1233, -inf
    %1286 = vmax.xlane.f32.xlu0 %v1285
    %v1287 = vpop.xlane.xlu0 %1286
    %v1288 = vsel %vm690, %v1236, -inf
    %1289 = vmax.xlane.f32.xlu0 %v1288
    %v1290 = vpop.xlane.xlu0 %1289
    %v1291 = vsel %vm690, %v1241, -inf
    %1292 = vmax.xlane.f32.xlu0 %v1291
    %v1293 = vpop.xlane.xlu0 %1292
    %v1294 = vsel %vm690, %v1244, -inf
    %1295 = vmax.xlane.f32.xlu0 %v1294
    %v1296 = vpop.xlane.xlu0 %1295
    %v1297 = vsel %vm690, %v1249, -inf
    %1298 = vmax.xlane.f32.xlu0 %v1297
    %v1299 = vpop.xlane.xlu0 %1298
    %v1300 = vsel %vm690, %v1252, -inf
    %1301 = vmax.xlane.f32.xlu0 %v1300
    %v1302 = vpop.xlane.xlu0 %1301
    %v1303 = vsub.f32 %v1112, %v1257
    %v1304 = vsub.f32 %v1115, %v1260
    %v1305 = vsub.f32 %v1120, %v1263
    %v1306 = vsub.f32 %v1123, %v1266
    %v1307 = vsub.f32 %v1128, %v1269
    %v1308 = vsub.f32 %v1131, %v1272
    %v1309 = vsub.f32 %v1136, %v1275
    %v1310 = vsub.f32 %v1139, %v1278
    %v1311 = vsub.f32 %v1225, %v1281
    %v1312 = vsub.f32 %v1228, %v1284
    %v1313 = vsub.f32 %v1233, %v1287
    %v1314 = vsub.f32 %v1236, %v1290
    %v1315 = vsub.f32 %v1241, %v1293
    %v1316 = vsub.f32 %v1244, %v1296
    %v1317 = vsub.f32 %v1249, %v1299
    %v1318 = vsub.f32 %v1252, %v1302
    %v1319 = vmul.f32 %v1303, 1.442695
    %v1320 = vpow.pop %v1319
    %v1321 = vmul.f32 %v1304, 1.442695
    %v1322 = vpow.pop %v1321
    %v1323 = vmul.f32 %v1305, 1.442695
    %v1324 = vpow.pop %v1323
    %v1325 = vmul.f32 %v1306, 1.442695
    %v1326 = vpow.pop %v1325
    %v1327 = vmul.f32 %v1307, 1.442695
    %v1328 = vpow.pop %v1327
    %v1329 = vmul.f32 %v1308, 1.442695
    %v1330 = vpow.pop %v1329
    %v1331 = vmul.f32 %v1309, 1.442695
    %v1332 = vpow.pop %v1331
    %v1333 = vmul.f32 %v1310, 1.442695
    %v1334 = vpow.pop %v1333
    %v1335 = vmul.f32 %v1311, 1.442695
    %v1336 = vpow.pop %v1335
    %v1337 = vmul.f32 %v1312, 1.442695
    %v1338 = vpow.pop %v1337
    %v1339 = vmul.f32 %v1313, 1.442695
    %v1340 = vpow.pop %v1339
    %v1341 = vmul.f32 %v1314, 1.442695
    %v1342 = vpow.pop %v1341
    %v1343 = vmul.f32 %v1315, 1.442695
    %v1344 = vpow.pop %v1343
    %v1345 = vmul.f32 %v1316, 1.442695
    %v1346 = vpow.pop %v1345
    %v1347 = vmul.f32 %v1317, 1.442695
    %v1348 = vpow.pop %v1347
    %v1349 = vmul.f32 %v1318, 1.442695
    %v1350 = vpow.pop %v1349
    %v1351 = vsel %vm690, %v1320, 0.0
    %1352 = vadd.xlane.f32.xlu0 %v1351
    %v1353 = vpop.xlane.xlu0 %1352
    %v1354 = vsel %vm690, %v1322, 0.0
    %1355 = vadd.xlane.f32.xlu0 %v1354
    %v1356 = vpop.xlane.xlu0 %1355
    %v1357 = vsel %vm690, %v1324, 0.0
    %1358 = vadd.xlane.f32.xlu0 %v1357
    %v1359 = vpop.xlane.xlu0 %1358
    %v1360 = vsel %vm690, %v1326, 0.0
    %1361 = vadd.xlane.f32.xlu0 %v1360
    %v1362 = vpop.xlane.xlu0 %1361
    %v1363 = vsel %vm690, %v1328, 0.0
    %1364 = vadd.xlane.f32.xlu0 %v1363
    %v1365 = vpop.xlane.xlu0 %1364
    %v1366 = vsel %vm690, %v1330, 0.0
    %1367 = vadd.xlane.f32.xlu0 %v1366
    %v1368 = vpop.xlane.xlu0 %1367
    %v1369 = vsel %vm690, %v1332, 0.0
    %1370 = vadd.xlane.f32.xlu0 %v1369
    %v1371 = vpop.xlane.xlu0 %1370
    %v1372 = vsel %vm690, %v1334, 0.0
    %1373 = vadd.xlane.f32.xlu0 %v1372
    %v1374 = vpop.xlane.xlu0 %1373
    %v1375 = vsel %vm690, %v1336, 0.0
    %1376 = vadd.xlane.f32.xlu0 %v1375
    %v1377 = vpop.xlane.xlu0 %1376
    %v1378 = vsel %vm690, %v1338, 0.0
    %1379 = vadd.xlane.f32.xlu0 %v1378
    %v1380 = vpop.xlane.xlu0 %1379
    %v1381 = vsel %vm690, %v1340, 0.0
    %1382 = vadd.xlane.f32.xlu0 %v1381
    %v1383 = vpop.xlane.xlu0 %1382
    %v1384 = vsel %vm690, %v1342, 0.0
    %1385 = vadd.xlane.f32.xlu0 %v1384
    %v1386 = vpop.xlane.xlu0 %1385
    %v1387 = vsel %vm690, %v1344, 0.0
    %1388 = vadd.xlane.f32.xlu0 %v1387
    %v1389 = vpop.xlane.xlu0 %1388
    %v1390 = vsel %vm690, %v1346, 0.0
    %1391 = vadd.xlane.f32.xlu0 %v1390
    %v1392 = vpop.xlane.xlu0 %1391
    %v1393 = vsel %vm690, %v1348, 0.0
    %1394 = vadd.xlane.f32.xlu0 %v1393
    %v1395 = vpop.xlane.xlu0 %1394
    %v1396 = vsel %vm690, %v1350, 0.0
    %1397 = vadd.xlane.f32.xlu0 %v1396
    %v1398 = vpop.xlane.xlu0 %1397
    %v1399 = vrcp.pop %v1353
    %v1400 = vrcp.pop %v1356
    %v1401 = vrcp.pop %v1359
    %v1402 = vrcp.pop %v1362
    %v1403 = vrcp.pop %v1365
    %v1404 = vrcp.pop %v1368
    %v1405 = vrcp.pop %v1371
    %v1406 = vrcp.pop %v1374
    %v1407 = vrcp.pop %v1377
    %v1408 = vrcp.pop %v1380
    %v1409 = vrcp.pop %v1383
    %v1410 = vrcp.pop %v1386
    %v1411 = vrcp.pop %v1389
    %v1412 = vrcp.pop %v1392
    %v1413 = vrcp.pop %v1395
    %v1414 = vrcp.pop %v1398
    %v1415 = vmul.f32 %v1320, %v1399
    %v1416 = vmul.f32 %v1322, %v1400
    %v1417 = vmul.f32 %v1324, %v1401
    %v1418 = vmul.f32 %v1326, %v1402
    %v1419 = vmul.f32 %v1328, %v1403
    %v1420 = vmul.f32 %v1330, %v1404
    %v1421 = vmul.f32 %v1332, %v1405
    %v1422 = vmul.f32 %v1334, %v1406
    %v1423 = vmul.f32 %v1336, %v1407
    %v1424 = vmul.f32 %v1338, %v1408
    %v1425 = vmul.f32 %v1340, %v1409
    %v1426 = vmul.f32 %v1342, %v1410
    %v1427 = vmul.f32 %v1344, %v1411
    %v1428 = vmul.f32 %v1346, %v1412
    %v1429 = vmul.f32 %v1348, %v1413
    %v1430 = vmul.f32 %v1350, %v1414
    %v1431 = vpack.c.bf16 %v1416, %v1415
    %v1432 = vpack.c.bf16 %v1418, %v1417
    %v1433 = vpack.c.bf16 %v1420, %v1419
    %v1434 = vpack.c.bf16 %v1422, %v1421
    %v1435 = vpack.c.bf16 %v1424, %v1423
    %v1436 = vpack.c.bf16 %v1426, %v1425
    %v1437 = vpack.c.bf16 %v1428, %v1427
    %v1438 = vpack.c.bf16 %v1430, %v1429
    %1443 = vrot.lane.b32.xlu0 %v503, 112
    %v1444 = vpop.permute.xlu0 %1443
    %1445 = vrot.lane.b32.xlu0 %v504, 112
    %v1446 = vpop.permute.xlu0 %1445
    %1447 = vrot.lane.b32.xlu0 %v505, 112
    %v1448 = vpop.permute.xlu0 %1447
    %1449 = vrot.lane.b32.xlu0 %v506, 112
    %v1450 = vpop.permute.xlu0 %1449
    %v1456 = vsel %vm690, %v1431, 0
    %v1459 = vsel %vm690, %v1432, 0
    %v1462 = vsel %vm690, %v1433, 0
    %v1465 = vsel %vm690, %v1434, 0
    %1467 = vmatprep.subr.bf16.mxu0 0
    %1468 = vmatpush1.bf16.msra.mxu0 %v1444
    %1469 = vmatprep.subr.bf16.mxu0 0
    %1470 = vmatpush1.bf16.msra.mxu0 %v1446
    %1471 = vmatprep.subr.bf16.mxu0 0
    %1472 = vmatpush1.bf16.msra.mxu0 %v1448
    %1473 = vmatprep.subr.bf16.mxu0 0
    %1474 = vmatpush1.bf16.msra.mxu0 %v1450
    %1475 = vmatprep.subr.bf16.mxu0 0
    %1476 = vmatpush1.bf16.msra.mxu0 0
    %1477 = vmatprep.subr.bf16.mxu0 0
    %1478 = vmatpush1.bf16.msra.mxu0 0
    %1479 = vmatprep.subr.bf16.mxu0 0
    %1480 = vmatpush1.bf16.msra.mxu0 0
    %1481 = vmatprep.subr.bf16.mxu0 0
    %1482 = vmatpush1.bf16.msra.mxu0 0
    %1483 = vmatprep.subr.bf16.mxu0 0
    %1484 = vmatpush1.bf16.msra.mxu0 0
    %1485 = vmatprep.subr.bf16.mxu0 0
    %1486 = vmatpush1.bf16.msra.mxu0 0
    %1487 = vmatprep.subr.bf16.mxu0 0
    %1488 = vmatpush1.bf16.msra.mxu0 0
    %1489 = vmatprep.subr.bf16.mxu0 0
    %1490 = vmatpush1.bf16.msra.mxu0 0
    %1491 = vmatprep.subr.bf16.mxu0 0
    %1492 = vmatpush1.bf16.msra.mxu0 0
    %1493 = vmatprep.subr.bf16.mxu0 0
    %1494 = vmatpush1.bf16.msra.mxu0 0
    %1495 = vmatprep.subr.bf16.mxu0 0
    %1496 = vmatpush1.bf16.msra.mxu0 0
    %1497 = vmatprep.subr.bf16.mxu0 0
    %1498 = vmatpush1.bf16.msra.mxu0 0
    %1499 = vmatprep.mubr.bf16.mxu0 0
    %1500 = vmatmul.mubr.bf16.gmra.mrb[0].mxu0 %v1456
    %v1501 = vpop.f32.mrb[0].mxu0
    %v1502 = vadd.f32 0.0, %v1501
    %v1503 = vpop.f32.mrb[0].mxu0
    %v1504 = vpop.f32.mrb[0].mxu0
    %v1505 = vadd.f32 0.0, %v1504
    %v1506 = vpop.f32.mrb[0].mxu0
    %1507 = vmatprep.mubr.bf16.mxu0 0
    %1508 = vmatmul.mubr.bf16.gmra.mrb[0].mxu0 %v1459
    %v1509 = vpop.f32.mrb[0].mxu0
    %v1510 = vadd.f32 0.0, %v1509
    %v1511 = vpop.f32.mrb[0].mxu0
    %v1512 = vpop.f32.mrb[0].mxu0
    %v1513 = vadd.f32 0.0, %v1512
    %v1514 = vpop.f32.mrb[0].mxu0
    %1515 = vmatprep.mubr.bf16.mxu0 0
    %1516 = vmatmul.mubr.bf16.gmra.mrb[0].mxu0 %v1462
    %v1517 = vpop.f32.mrb[0].mxu0
    %v1518 = vadd.f32 0.0, %v1517
    %v1519 = vpop.f32.mrb[0].mxu0
    %v1520 = vpop.f32.mrb[0].mxu0
    %v1521 = vadd.f32 0.0, %v1520
    %v1522 = vpop.f32.mrb[0].mxu0
    %1523 = vmatprep.mubr.bf16.mxu0 0
    %1524 = vmatmul.mubr.bf16.gmra.mrb[0].mxu0 %v1465
    %v1525 = vpop.f32.mrb[0].mxu0
    %v1526 = vadd.f32 0.0, %v1525
    %v1527 = vpop.f32.mrb[0].mxu0
    %v1528 = vpop.f32.mrb[0].mxu0
    %v1529 = vadd.f32 0.0, %v1528
    %v1530 = vpop.f32.mrb[0].mxu0
    %1531 = vdwg.mxu0
    %1536 = vrot.lane.b32.xlu0 %v507, 112
    %v1537 = vpop.permute.xlu0 %1536
    %1538 = vrot.lane.b32.xlu0 %v508, 112
    %v1539 = vpop.permute.xlu0 %1538
    %1540 = vrot.lane.b32.xlu0 %v509, 112
    %v1541 = vpop.permute.xlu0 %1540
    %1542 = vrot.lane.b32.xlu0 %v510, 112
    %v1543 = vpop.permute.xlu0 %1542
    %v1549 = vsel %vm690, %v1435, 0
    %v1552 = vsel %vm690, %v1436, 0
    %v1555 = vsel %vm690, %v1437, 0
    %v1558 = vsel %vm690, %v1438, 0
    %1560 = vmatprep.subr.bf16.mxu0 0
    %1561 = vmatpush1.bf16.msra.mxu0 %v1537
    %1562 = vmatprep.subr.bf16.mxu0 0
    %1563 = vmatpush1.bf16.msra.mxu0 %v1539
    %1564 = vmatprep.subr.bf16.mxu0 0
    %1565 = vmatpush1.bf16.msra.mxu0 %v1541
    %1566 = vmatprep.subr.bf16.mxu0 0
    %1567 = vmatpush1.bf16.msra.mxu0 %v1543
    %1568 = vmatprep.subr.bf16.mxu0 0
    %1569 = vmatpush1.bf16.msra.mxu0 0
    %1570 = vmatprep.subr.bf16.mxu0 0
    %1571 = vmatpush1.bf16.msra.mxu0 0
    %1572 = vmatprep.subr.bf16.mxu0 0
    %1573 = vmatpush1.bf16.msra.mxu0 0
    %1574 = vmatprep.subr.bf16.mxu0 0
    %1575 = vmatpush1.bf16.msra.mxu0 0
    %1576 = vmatprep.subr.bf16.mxu0 0
    %1577 = vmatpush1.bf16.msra.mxu0 0
    %1578 = vmatprep.subr.bf16.mxu0 0
    %1579 = vmatpush1.bf16.msra.mxu0 0
    %1580 = vmatprep.subr.bf16.mxu0 0
    %1581 = vmatpush1.bf16.msra.mxu0 0
    %1582 = vmatprep.subr.bf16.mxu0 0
    %1583 = vmatpush1.bf16.msra.mxu0 0
    %1584 = vmatprep.subr.bf16.mxu0 0
    %1585 = vmatpush1.bf16.msra.mxu0 0
    %1586 = vmatprep.subr.bf16.mxu0 0
    %1587 = vmatpush1.bf16.msra.mxu0 0
    %1588 = vmatprep.subr.bf16.mxu0 0
    %1589 = vmatpush1.bf16.msra.mxu0 0
    %1590 = vmatprep.subr.bf16.mxu0 0
    %1591 = vmatpush1.bf16.msra.mxu0 0
    %1592 = vmatprep.mubr.bf16.mxu0 0
    %1593 = vmatmul.mubr.bf16.gmra.mrb[0].mxu0 %v1549
    %v1594 = vpop.f32.mrb[0].mxu0
    %v1595 = vadd.f32 0.0, %v1594
    %v1596 = vpop.f32.mrb[0].mxu0
    %v1597 = vpop.f32.mrb[0].mxu0
    %v1598 = vadd.f32 0.0, %v1597
    %v1599 = vpop.f32.mrb[0].mxu0
    %1600 = vmatprep.mubr.bf16.mxu0 0
    %1601 = vmatmul.mubr.bf16.gmra.mrb[0].mxu0 %v1552
    %v1602 = vpop.f32.mrb[0].mxu0
    %v1603 = vadd.f32 0.0, %v1602
    %v1604 = vpop.f32.mrb[0].mxu0
    %v1605 = vpop.f32.mrb[0].mxu0
    %v1606 = vadd.f32 0.0, %v1605
    %v1607 = vpop.f32.mrb[0].mxu0
    %1608 = vmatprep.mubr.bf16.mxu0 0
    %1609 = vmatmul.mubr.bf16.gmra.mrb[0].mxu0 %v1555
    %v1610 = vpop.f32.mrb[0].mxu0
    %v1611 = vadd.f32 0.0, %v1610
    %v1612 = vpop.f32.mrb[0].mxu0
    %v1613 = vpop.f32.mrb[0].mxu0
    %v1614 = vadd.f32 0.0, %v1613
    %v1615 = vpop.f32.mrb[0].mxu0
    %1616 = vmatprep.mubr.bf16.mxu0 0
    %1617 = vmatmul.mubr.bf16.gmra.mrb[0].mxu0 %v1558
    %v1618 = vpop.f32.mrb[0].mxu0
    %v1619 = vadd.f32 0.0, %v1618
    %v1620 = vpop.f32.mrb[0].mxu0
    %v1621 = vpop.f32.mrb[0].mxu0
    %v1622 = vadd.f32 0.0, %v1621
    %v1623 = vpop.f32.mrb[0].mxu0
    %1624 = vdwg.mxu0
    %1625 = vrot.lane.b32.xlu0 %v487, 96
    %v1626 = vpop.permute.xlu0 %1625
    %1627 = vrot.lane.b32.xlu0 %v488, 96
    %v1628 = vpop.permute.xlu0 %1627
    %1629 = vrot.lane.b32.xlu0 %v489, 96
    %v1630 = vpop.permute.xlu0 %1629
    %1631 = vrot.lane.b32.xlu0 %v490, 96
    %v1632 = vpop.permute.xlu0 %1631
    %1633 = vrot.lane.b32.xlu0 %v495, 96
    %v1634 = vpop.permute.xlu0 %1633
    %1635 = vrot.lane.b32.xlu0 %v496, 96
    %v1636 = vpop.permute.xlu0 %1635
    %1637 = vrot.lane.b32.xlu0 %v497, 96
    %v1638 = vpop.permute.xlu0 %1637
    %1639 = vrot.lane.b32.xlu0 %v498, 96
    %v1640 = vpop.permute.xlu0 %1639
    %v1642 = vsel %vm511, %v1626, 0
    %v1645 = vsel %vm511, %v1628, 0
    %v1648 = vsel %vm511, %v1630, 0
    %v1651 = vsel %vm511, %v1632, 0
    %v1654 = vsel %vm511, %v1634, 0
    %v1657 = vsel %vm511, %v1636, 0
    %v1660 = vsel %vm511, %v1638, 0
    %v1663 = vsel %vm511, %v1640, 0
    %1665 = vmatprep.subr.bf16.mxu0 0
    %1666 = vmatpush1.bf16.xpose.msra.mxu0 %v1654
    %1667 = vmatprep.subr.bf16.mxu0 0
    %1668 = vmatpush1.bf16.xpose.msra.mxu0 %v1657
    %1669 = vmatprep.subr.bf16.mxu0 0
    %1670 = vmatpush1.bf16.xpose.msra.mxu0 %v1660
    %1671 = vmatprep.subr.bf16.mxu0 0
    %1672 = vmatpush1.bf16.xpose.msra.mxu0 %v1663
    %1673 = vmatprep.subr.bf16.mxu0 0
    %1674 = vmatpush1.bf16.xpose.msra.mxu0 0
    %1675 = vmatprep.subr.bf16.mxu0 0
    %1676 = vmatpush1.bf16.xpose.msra.mxu0 0
    %1677 = vmatprep.subr.bf16.mxu0 0
    %1678 = vmatpush1.bf16.xpose.msra.mxu0 0
    %1679 = vmatprep.subr.bf16.mxu0 0
    %1680 = vmatpush1.bf16.xpose.msra.mxu0 0
    %1681 = vmatprep.subr.bf16.mxu0 0
    %1682 = vmatpush1.bf16.xpose.msra.mxu0 0
    %1683 = vmatprep.subr.bf16.mxu0 0
    %1684 = vmatpush1.bf16.xpose.msra.mxu0 0
    %1685 = vmatprep.subr.bf16.mxu0 0
    %1686 = vmatpush1.bf16.xpose.msra.mxu0 0
    %1687 = vmatprep.subr.bf16.mxu0 0
    %1688 = vmatpush1.bf16.xpose.msra.mxu0 0
    %1689 = vmatprep.subr.bf16.mxu0 0
    %1690 = vmatpush1.bf16.xpose.msra.mxu0 0
    %1691 = vmatprep.subr.bf16.mxu0 0
    %1692 = vmatpush1.bf16.xpose.msra.mxu0 0
    %1693 = vmatprep.subr.bf16.mxu0 0
    %1694 = vmatpush1.bf16.xpose.msra.mxu0 0
    %1695 = vmatprep.subr.bf16.mxu0 0
    %1696 = vmatpush1.bf16.xpose.msra.mxu0 0
    %1697 = vmatprep.mubr.bf16.mxu0 0
    %1698 = vmatmul.mubr.bf16.gmra.mrb[0].mxu0 %v1642
    %v1699 = vpop.f32.mrb[0].mxu0
    %v1700 = vadd.f32 0.0, %v1699
    %v1701 = vpop.f32.mrb[0].mxu0
    %v1702 = vpop.f32.mrb[0].mxu0
    %v1703 = vadd.f32 0.0, %v1702
    %v1704 = vpop.f32.mrb[0].mxu0
    %1705 = vmatprep.mubr.bf16.mxu0 0
    %1706 = vmatmul.mubr.bf16.gmra.mrb[0].mxu0 %v1645
    %v1707 = vpop.f32.mrb[0].mxu0
    %v1708 = vadd.f32 0.0, %v1707
    %v1709 = vpop.f32.mrb[0].mxu0
    %v1710 = vpop.f32.mrb[0].mxu0
    %v1711 = vadd.f32 0.0, %v1710
    %v1712 = vpop.f32.mrb[0].mxu0
    %1713 = vmatprep.mubr.bf16.mxu0 0
    %1714 = vmatmul.mubr.bf16.gmra.mrb[0].mxu0 %v1648
    %v1715 = vpop.f32.mrb[0].mxu0
    %v1716 = vadd.f32 0.0, %v1715
    %v1717 = vpop.f32.mrb[0].mxu0
    %v1718 = vpop.f32.mrb[0].mxu0
    %v1719 = vadd.f32 0.0, %v1718
    %v1720 = vpop.f32.mrb[0].mxu0
    %1721 = vmatprep.mubr.bf16.mxu0 0
    %1722 = vmatmul.mubr.bf16.gmra.mrb[0].mxu0 %v1651
    %v1723 = vpop.f32.mrb[0].mxu0
    %v1724 = vadd.f32 0.0, %v1723
    %v1725 = vpop.f32.mrb[0].mxu0
    %v1726 = vpop.f32.mrb[0].mxu0
    %v1727 = vadd.f32 0.0, %v1726
    %v1728 = vpop.f32.mrb[0].mxu0
    %1729 = vdwg.mxu0
    %1730 = vrot.lane.b32.xlu0 %v491, 96
    %v1731 = vpop.permute.xlu0 %1730
    %1732 = vrot.lane.b32.xlu0 %v492, 96
    %v1733 = vpop.permute.xlu0 %1732
    %1734 = vrot.lane.b32.xlu0 %v493, 96
    %v1735 = vpop.permute.xlu0 %1734
    %1736 = vrot.lane.b32.xlu0 %v494, 96
    %v1737 = vpop.permute.xlu0 %1736
    %1738 = vrot.lane.b32.xlu0 %v499, 96
    %v1739 = vpop.permute.xlu0 %1738
    %1740 = vrot.lane.b32.xlu0 %v500, 96
    %v1741 = vpop.permute.xlu0 %1740
    %1742 = vrot.lane.b32.xlu0 %v501, 96
    %v1743 = vpop.permute.xlu0 %1742
    %1744 = vrot.lane.b32.xlu0 %v502, 96
    %v1745 = vpop.permute.xlu0 %1744
    %v1747 = vsel %vm511, %v1731, 0
    %v1750 = vsel %vm511, %v1733, 0
    %v1753 = vsel %vm511, %v1735, 0
    %v1756 = vsel %vm511, %v1737, 0
    %v1759 = vsel %vm511, %v1739, 0
    %v1762 = vsel %vm511, %v1741, 0
    %v1765 = vsel %vm511, %v1743, 0
    %v1768 = vsel %vm511, %v1745, 0
    %1770 = vmatprep.subr.bf16.mxu0 0
    %1771 = vmatpush1.bf16.xpose.msra.mxu0 %v1759
    %1772 = vmatprep.subr.bf16.mxu0 0
    %1773 = vmatpush1.bf16.xpose.msra.mxu0 %v1762
    %1774 = vmatprep.subr.bf16.mxu0 0
    %1775 = vmatpush1.bf16.xpose.msra.mxu0 %v1765
    %1776 = vmatprep.subr.bf16.mxu0 0
    %1777 = vmatpush1.bf16.xpose.msra.mxu0 %v1768
    %1778 = vmatprep.subr.bf16.mxu0 0
    %1779 = vmatpush1.bf16.xpose.msra.mxu0 0
    %1780 = vmatprep.subr.bf16.mxu0 0
    %1781 = vmatpush1.bf16.xpose.msra.mxu0 0
    %1782 = vmatprep.subr.bf16.mxu0 0
    %1783 = vmatpush1.bf16.xpose.msra.mxu0 0
    %1784 = vmatprep.subr.bf16.mxu0 0
    %1785 = vmatpush1.bf16.xpose.msra.mxu0 0
    %1786 = vmatprep.subr.bf16.mxu0 0
    %1787 = vmatpush1.bf16.xpose.msra.mxu0 0
    %1788 = vmatprep.subr.bf16.mxu0 0
    %1789 = vmatpush1.bf16.xpose.msra.mxu0 0
    %1790 = vmatprep.subr.bf16.mxu0 0
    %1791 = vmatpush1.bf16.xpose.msra.mxu0 0
    %1792 = vmatprep.subr.bf16.mxu0 0
    %1793 = vmatpush1.bf16.xpose.msra.mxu0 0
    %1794 = vmatprep.subr.bf16.mxu0 0
    %1795 = vmatpush1.bf16.xpose.msra.mxu0 0
    %1796 = vmatprep.subr.bf16.mxu0 0
    %1797 = vmatpush1.bf16.xpose.msra.mxu0 0
    %1798 = vmatprep.subr.bf16.mxu0 0
    %1799 = vmatpush1.bf16.xpose.msra.mxu0 0
    %1800 = vmatprep.subr.bf16.mxu0 0
    %1801 = vmatpush1.bf16.xpose.msra.mxu0 0
    %1802 = vmatprep.mubr.bf16.mxu0 0
    %1803 = vmatmul.mubr.bf16.gmra.mrb[0].mxu0 %v1747
    %v1804 = vpop.f32.mrb[0].mxu0
    %v1805 = vadd.f32 0.0, %v1804
    %v1806 = vpop.f32.mrb[0].mxu0
    %v1807 = vpop.f32.mrb[0].mxu0
    %v1808 = vadd.f32 0.0, %v1807
    %v1809 = vpop.f32.mrb[0].mxu0
    %1810 = vmatprep.mubr.bf16.mxu0 0
    %1811 = vmatmul.mubr.bf16.gmra.mrb[0].mxu0 %v1750
    %v1812 = vpop.f32.mrb[0].mxu0
    %v1813 = vadd.f32 0.0, %v1812
    %v1814 = vpop.f32.mrb[0].mxu0
    %v1815 = vpop.f32.mrb[0].mxu0
    %v1816 = vadd.f32 0.0, %v1815
    %v1817 = vpop.f32.mrb[0].mxu0
    %1818 = vmatprep.mubr.bf16.mxu0 0
    %1819 = vmatmul.mubr.bf16.gmra.mrb[0].mxu0 %v1753
    %v1820 = vpop.f32.mrb[0].mxu0
    %v1821 = vadd.f32 0.0, %v1820
    %v1822 = vpop.f32.mrb[0].mxu0
    %v1823 = vpop.f32.mrb[0].mxu0
    %v1824 = vadd.f32 0.0, %v1823
    %v1825 = vpop.f32.mrb[0].mxu0
    %1826 = vmatprep.mubr.bf16.mxu0 0
    %1827 = vmatmul.mubr.bf16.gmra.mrb[0].mxu0 %v1756
    %v1828 = vpop.f32.mrb[0].mxu0
    %v1829 = vadd.f32 0.0, %v1828
    %v1830 = vpop.f32.mrb[0].mxu0
    %v1831 = vpop.f32.mrb[0].mxu0
    %v1832 = vadd.f32 0.0, %v1831
    %v1833 = vpop.f32.mrb[0].mxu0
    %1834 = vdwg.mxu0
    %v1835 = vsel %vm690, %v1700, -inf
    %1836 = vmax.xlane.f32.xlu0 %v1835
    %v1837 = vpop.xlane.xlu0 %1836
    %v1838 = vsel %vm690, %v1703, -inf
    %1839 = vmax.xlane.f32.xlu0 %v1838
    %v1840 = vpop.xlane.xlu0 %1839
    %v1841 = vsel %vm690, %v1708, -inf
    %1842 = vmax.xlane.f32.xlu0 %v1841
    %v1843 = vpop.xlane.xlu0 %1842
    %v1844 = vsel %vm690, %v1711, -inf
    %1845 = vmax.xlane.f32.xlu0 %v1844
    %v1846 = vpop.xlane.xlu0 %1845
    %v1847 = vsel %vm690, %v1716, -inf
    %1848 = vmax.xlane.f32.xlu0 %v1847
    %v1849 = vpop.xlane.xlu0 %1848
    %v1850 = vsel %vm690, %v1719, -inf
    %1851 = vmax.xlane.f32.xlu0 %v1850
    %v1852 = vpop.xlane.xlu0 %1851
    %v1853 = vsel %vm690, %v1724, -inf
    %1854 = vmax.xlane.f32.xlu0 %v1853
    %v1855 = vpop.xlane.xlu0 %1854
    %v1856 = vsel %vm690, %v1727, -inf
    %1857 = vmax.xlane.f32.xlu0 %v1856
    %v1858 = vpop.xlane.xlu0 %1857
    %v1859 = vsel %vm690, %v1805, -inf
    %1860 = vmax.xlane.f32.xlu0 %v1859
    %v1861 = vpop.xlane.xlu0 %1860
    %v1862 = vsel %vm690, %v1808, -inf
    %1863 = vmax.xlane.f32.xlu0 %v1862
    %v1864 = vpop.xlane.xlu0 %1863
    %v1865 = vsel %vm690, %v1813, -inf
    %1866 = vmax.xlane.f32.xlu0 %v1865
    %v1867 = vpop.xlane.xlu0 %1866
    %v1868 = vsel %vm690, %v1816, -inf
    %1869 = vmax.xlane.f32.xlu0 %v1868
    %v1870 = vpop.xlane.xlu0 %1869
    %v1871 = vsel %vm690, %v1821, -inf
    %1872 = vmax.xlane.f32.xlu0 %v1871
    %v1873 = vpop.xlane.xlu0 %1872
    %v1874 = vsel %vm690, %v1824, -inf
    %1875 = vmax.xlane.f32.xlu0 %v1874
    %v1876 = vpop.xlane.xlu0 %1875
    %v1877 = vsel %vm690, %v1829, -inf
    %1878 = vmax.xlane.f32.xlu0 %v1877
    %v1879 = vpop.xlane.xlu0 %1878
    %v1880 = vsel %vm690, %v1832, -inf
    %1881 = vmax.xlane.f32.xlu0 %v1880
    %v1882 = vpop.xlane.xlu0 %1881
    %v1883 = vsub.f32 %v1700, %v1837
    %v1884 = vsub.f32 %v1703, %v1840
    %v1885 = vsub.f32 %v1708, %v1843
    %v1886 = vsub.f32 %v1711, %v1846
    %v1887 = vsub.f32 %v1716, %v1849
    %v1888 = vsub.f32 %v1719, %v1852
    %v1889 = vsub.f32 %v1724, %v1855
    %v1890 = vsub.f32 %v1727, %v1858
    %v1891 = vsub.f32 %v1805, %v1861
    %v1892 = vsub.f32 %v1808, %v1864
    %v1893 = vsub.f32 %v1813, %v1867
    %v1894 = vsub.f32 %v1816, %v1870
    %v1895 = vsub.f32 %v1821, %v1873
    %v1896 = vsub.f32 %v1824, %v1876
    %v1897 = vsub.f32 %v1829, %v1879
    %v1898 = vsub.f32 %v1832, %v1882
    %v1899 = vmul.f32 %v1883, 1.442695
    %v1900 = vpow.pop %v1899
    %v1901 = vmul.f32 %v1884, 1.442695
    %v1902 = vpow.pop %v1901
    %v1903 = vmul.f32 %v1885, 1.442695
    %v1904 = vpow.pop %v1903
    %v1905 = vmul.f32 %v1886, 1.442695
    %v1906 = vpow.pop %v1905
    %v1907 = vmul.f32 %v1887, 1.442695
    %v1908 = vpow.pop %v1907
    %v1909 = vmul.f32 %v1888, 1.442695
    %v1910 = vpow.pop %v1909
    %v1911 = vmul.f32 %v1889, 1.442695
    %v1912 = vpow.pop %v1911
    %v1913 = vmul.f32 %v1890, 1.442695
    %v1914 = vpow.pop %v1913
    %v1915 = vmul.f32 %v1891, 1.442695
    %v1916 = vpow.pop %v1915
    %v1917 = vmul.f32 %v1892, 1.442695
    %v1918 = vpow.pop %v1917
    %v1919 = vmul.f32 %v1893, 1.442695
    %v1920 = vpow.pop %v1919
    %v1921 = vmul.f32 %v1894, 1.442695
    %v1922 = vpow.pop %v1921
    %v1923 = vmul.f32 %v1895, 1.442695
    %v1924 = vpow.pop %v1923
    %v1925 = vmul.f32 %v1896, 1.442695
    %v1926 = vpow.pop %v1925
    %v1927 = vmul.f32 %v1897, 1.442695
    %v1928 = vpow.pop %v1927
    %v1929 = vmul.f32 %v1898, 1.442695
    %v1930 = vpow.pop %v1929
    %v1931 = vsel %vm690, %v1900, 0.0
    %1932 = vadd.xlane.f32.xlu0 %v1931
    %v1933 = vpop.xlane.xlu0 %1932
    %v1934 = vsel %vm690, %v1902, 0.0
    %1935 = vadd.xlane.f32.xlu0 %v1934
    %v1936 = vpop.xlane.xlu0 %1935
    %v1937 = vsel %vm690, %v1904, 0.0
    %1938 = vadd.xlane.f32.xlu0 %v1937
    %v1939 = vpop.xlane.xlu0 %1938
    %v1940 = vsel %vm690, %v1906, 0.0
    %1941 = vadd.xlane.f32.xlu0 %v1940
    %v1942 = vpop.xlane.xlu0 %1941
    %v1943 = vsel %vm690, %v1908, 0.0
    %1944 = vadd.xlane.f32.xlu0 %v1943
    %v1945 = vpop.xlane.xlu0 %1944
    %v1946 = vsel %vm690, %v1910, 0.0
    %1947 = vadd.xlane.f32.xlu0 %v1946
    %v1948 = vpop.xlane.xlu0 %1947
    %v1949 = vsel %vm690, %v1912, 0.0
    %1950 = vadd.xlane.f32.xlu0 %v1949
    %v1951 = vpop.xlane.xlu0 %1950
    %v1952 = vsel %vm690, %v1914, 0.0
    %1953 = vadd.xlane.f32.xlu0 %v1952
    %v1954 = vpop.xlane.xlu0 %1953
    %v1955 = vsel %vm690, %v1916, 0.0
    %1956 = vadd.xlane.f32.xlu0 %v1955
    %v1957 = vpop.xlane.xlu0 %1956
    %v1958 = vsel %vm690, %v1918, 0.0
    %1959 = vadd.xlane.f32.xlu0 %v1958
    %v1960 = vpop.xlane.xlu0 %1959
    %v1961 = vsel %vm690, %v1920, 0.0
    %1962 = vadd.xlane.f32.xlu0 %v1961
    %v1963 = vpop.xlane.xlu0 %1962
    %v1964 = vsel %vm690, %v1922, 0.0
    %1965 = vadd.xlane.f32.xlu0 %v1964
    %v1966 = vpop.xlane.xlu0 %1965
    %v1967 = vsel %vm690, %v1924, 0.0
    %1968 = vadd.xlane.f32.xlu0 %v1967
    %v1969 = vpop.xlane.xlu0 %1968
    %v1970 = vsel %vm690, %v1926, 0.0
    %1971 = vadd.xlane.f32.xlu0 %v1970
    %v1972 = vpop.xlane.xlu0 %1971
    %v1973 = vsel %vm690, %v1928, 0.0
    %1974 = vadd.xlane.f32.xlu0 %v1973
    %v1975 = vpop.xlane.xlu0 %1974
    %v1976 = vsel %vm690, %v1930, 0.0
    %1977 = vadd.xlane.f32.xlu0 %v1976
    %v1978 = vpop.xlane.xlu0 %1977
    %v1979 = vrcp.pop %v1933
    %v1980 = vrcp.pop %v1936
    %v1981 = vrcp.pop %v1939
    %v1982 = vrcp.pop %v1942
    %v1983 = vrcp.pop %v1945
    %v1984 = vrcp.pop %v1948
    %v1985 = vrcp.pop %v1951
    %v1986 = vrcp.pop %v1954
    %v1987 = vrcp.pop %v1957
    %v1988 = vrcp.pop %v1960
    %v1989 = vrcp.pop %v1963
    %v1990 = vrcp.pop %v1966
    %v1991 = vrcp.pop %v1969
    %v1992 = vrcp.pop %v1972
    %v1993 = vrcp.pop %v1975
    %v1994 = vrcp.pop %v1978
    %v1995 = vmul.f32 %v1900, %v1979
    %v1996 = vmul.f32 %v1902, %v1980
    %v1997 = vmul.f32 %v1904, %v1981
    %v1998 = vmul.f32 %v1906, %v1982
    %v1999 = vmul.f32 %v1908, %v1983
    %v2000 = vmul.f32 %v1910, %v1984
    %v2001 = vmul.f32 %v1912, %v1985
    %v2002 = vmul.f32 %v1914, %v1986
    %v2003 = vmul.f32 %v1916, %v1987
    %v2004 = vmul.f32 %v1918, %v1988
    %v2005 = vmul.f32 %v1920, %v1989
    %v2006 = vmul.f32 %v1922, %v1990
    %v2007 = vmul.f32 %v1924, %v1991
    %v2008 = vmul.f32 %v1926, %v1992
    %v2009 = vmul.f32 %v1928, %v1993
    %v2010 = vmul.f32 %v1930, %v1994
    %v2011 = vpack.c.bf16 %v1996, %v1995
    %v2012 = vpack.c.bf16 %v1998, %v1997
    %v2013 = vpack.c.bf16 %v2000, %v1999
    %v2014 = vpack.c.bf16 %v2002, %v2001
    %v2015 = vpack.c.bf16 %v2004, %v2003
    %v2016 = vpack.c.bf16 %v2006, %v2005
    %v2017 = vpack.c.bf16 %v2008, %v2007
    %v2018 = vpack.c.bf16 %v2010, %v2009
    %2019 = vrot.lane.b32.xlu0 %v503, 96
    %v2020 = vpop.permute.xlu0 %2019
    %2021 = vrot.lane.b32.xlu0 %v504, 96
    %v2022 = vpop.permute.xlu0 %2021
    %2023 = vrot.lane.b32.xlu0 %v505, 96
    %v2024 = vpop.permute.xlu0 %2023
    %2025 = vrot.lane.b32.xlu0 %v506, 96
    %v2026 = vpop.permute.xlu0 %2025
    %v2032 = vsel %vm690, %v2011, 0
    %v2035 = vsel %vm690, %v2012, 0
    %v2038 = vsel %vm690, %v2013, 0
    %v2041 = vsel %vm690, %v2014, 0
    %2043 = vmatprep.subr.bf16.mxu0 0
    %2044 = vmatpush1.bf16.msra.mxu0 %v2020
    %2045 = vmatprep.subr.bf16.mxu0 0
    %2046 = vmatpush1.bf16.msra.mxu0 %v2022
    %2047 = vmatprep.subr.bf16.mxu0 0
    %2048 = vmatpush1.bf16.msra.mxu0 %v2024
    %2049 = vmatprep.subr.bf16.mxu0 0
    %2050 = vmatpush1.bf16.msra.mxu0 %v2026
    %2051 = vmatprep.subr.bf16.mxu0 0
    %2052 = vmatpush1.bf16.msra.mxu0 0
    %2053 = vmatprep.subr.bf16.mxu0 0
    %2054 = vmatpush1.bf16.msra.mxu0 0
    %2055 = vmatprep.subr.bf16.mxu0 0
    %2056 = vmatpush1.bf16.msra.mxu0 0
    %2057 = vmatprep.subr.bf16.mxu0 0
    %2058 = vmatpush1.bf16.msra.mxu0 0
    %2059 = vmatprep.subr.bf16.mxu0 0
    %2060 = vmatpush1.bf16.msra.mxu0 0
    %2061 = vmatprep.subr.bf16.mxu0 0
    %2062 = vmatpush1.bf16.msra.mxu0 0
    %2063 = vmatprep.subr.bf16.mxu0 0
    %2064 = vmatpush1.bf16.msra.mxu0 0
    %2065 = vmatprep.subr.bf16.mxu0 0
    %2066 = vmatpush1.bf16.msra.mxu0 0
    %2067 = vmatprep.subr.bf16.mxu0 0
    %2068 = vmatpush1.bf16.msra.mxu0 0
    %2069 = vmatprep.subr.bf16.mxu0 0
    %2070 = vmatpush1.bf16.msra.mxu0 0
    %2071 = vmatprep.subr.bf16.mxu0 0
    %2072 = vmatpush1.bf16.msra.mxu0 0
    %2073 = vmatprep.subr.bf16.mxu0 0
    %2074 = vmatpush1.bf16.msra.mxu0 0
    %2075 = vmatprep.mubr.bf16.mxu0 0
    %2076 = vmatmul.mubr.bf16.gmra.mrb[0].mxu0 %v2032
    %v2077 = vpop.f32.mrb[0].mxu0
    %v2078 = vadd.f32 0.0, %v2077
    %v2079 = vpop.f32.mrb[0].mxu0
    %v2080 = vpop.f32.mrb[0].mxu0
    %v2081 = vadd.f32 0.0, %v2080
    %v2082 = vpop.f32.mrb[0].mxu0
    %2083 = vmatprep.mubr.bf16.mxu0 0
    %2084 = vmatmul.mubr.bf16.gmra.mrb[0].mxu0 %v2035
    %v2085 = vpop.f32.mrb[0].mxu0
    %v2086 = vadd.f32 0.0, %v2085
    %v2087 = vpop.f32.mrb[0].mxu0
    %v2088 = vpop.f32.mrb[0].mxu0
    %v2089 = vadd.f32 0.0, %v2088
    %v2090 = vpop.f32.mrb[0].mxu0
    %2091 = vmatprep.mubr.bf16.mxu0 0
    %2092 = vmatmul.mubr.bf16.gmra.mrb[0].mxu0 %v2038
    %v2093 = vpop.f32.mrb[0].mxu0
    %v2094 = vadd.f32 0.0, %v2093
    %v2095 = vpop.f32.mrb[0].mxu0
    %v2096 = vpop.f32.mrb[0].mxu0
    %v2097 = vadd.f32 0.0, %v2096
    %v2098 = vpop.f32.mrb[0].mxu0
    %2099 = vmatprep.mubr.bf16.mxu0 0
    %2100 = vmatmul.mubr.bf16.gmra.mrb[0].mxu0 %v2041
    %v2101 = vpop.f32.mrb[0].mxu0
    %v2102 = vadd.f32 0.0, %v2101
    %v2103 = vpop.f32.mrb[0].mxu0
    %v2104 = vpop.f32.mrb[0].mxu0
    %v2105 = vadd.f32 0.0, %v2104
    %v2106 = vpop.f32.mrb[0].mxu0
    %2107 = vdwg.mxu0
    %2108 = vrot.lane.b32.xlu0 %v507, 96
    %v2109 = vpop.permute.xlu0 %2108
    %2110 = vrot.lane.b32.xlu0 %v508, 96
    %v2111 = vpop.permute.xlu0 %2110
    %2112 = vrot.lane.b32.xlu0 %v509, 96
    %v2113 = vpop.permute.xlu0 %2112
    %2114 = vrot.lane.b32.xlu0 %v510, 96
    %v2115 = vpop.permute.xlu0 %2114
    %v2121 = vsel %vm690, %v2015, 0
    %v2124 = vsel %vm690, %v2016, 0
    %v2127 = vsel %vm690, %v2017, 0
    %v2130 = vsel %vm690, %v2018, 0
    %2132 = vmatprep.subr.bf16.mxu0 0
    %2133 = vmatpush1.bf16.msra.mxu0 %v2109
    %2134 = vmatprep.subr.bf16.mxu0 0
    %2135 = vmatpush1.bf16.msra.mxu0 %v2111
    %2136 = vmatprep.subr.bf16.mxu0 0
    %2137 = vmatpush1.bf16.msra.mxu0 %v2113
    %2138 = vmatprep.subr.bf16.mxu0 0
    %2139 = vmatpush1.bf16.msra.mxu0 %v2115
    %2140 = vmatprep.subr.bf16.mxu0 0
    %2141 = vmatpush1.bf16.msra.mxu0 0
    %2142 = vmatprep.subr.bf16.mxu0 0
    %2143 = vmatpush1.bf16.msra.mxu0 0
    %2144 = vmatprep.subr.bf16.mxu0 0
    %2145 = vmatpush1.bf16.msra.mxu0 0
    %2146 = vmatprep.subr.bf16.mxu0 0
    %2147 = vmatpush1.bf16.msra.mxu0 0
    %2148 = vmatprep.subr.bf16.mxu0 0
    %2149 = vmatpush1.bf16.msra.mxu0 0
    %2150 = vmatprep.subr.bf16.mxu0 0
    %2151 = vmatpush1.bf16.msra.mxu0 0
    %2152 = vmatprep.subr.bf16.mxu0 0
    %2153 = vmatpush1.bf16.msra.mxu0 0
    %2154 = vmatprep.subr.bf16.mxu0 0
    %2155 = vmatpush1.bf16.msra.mxu0 0
    %2156 = vmatprep.subr.bf16.mxu0 0
    %2157 = vmatpush1.bf16.msra.mxu0 0
    %2158 = vmatprep.subr.bf16.mxu0 0
    %2159 = vmatpush1.bf16.msra.mxu0 0
    %2160 = vmatprep.subr.bf16.mxu0 0
    %2161 = vmatpush1.bf16.msra.mxu0 0
    %2162 = vmatprep.subr.bf16.mxu0 0
    %2163 = vmatpush1.bf16.msra.mxu0 0
    %2164 = vmatprep.mubr.bf16.mxu0 0
    %2165 = vmatmul.mubr.bf16.gmra.mrb[0].mxu0 %v2121
    %v2166 = vpop.f32.mrb[0].mxu0
    %v2167 = vadd.f32 0.0, %v2166
    %v2168 = vpop.f32.mrb[0].mxu0
    %v2169 = vpop.f32.mrb[0].mxu0
    %v2170 = vadd.f32 0.0, %v2169
    %v2171 = vpop.f32.mrb[0].mxu0
    %2172 = vmatprep.mubr.bf16.mxu0 0
    %2173 = vmatmul.mubr.bf16.gmra.mrb[0].mxu0 %v2124
    %v2174 = vpop.f32.mrb[0].mxu0
    %v2175 = vadd.f32 0.0, %v2174
    %v2176 = vpop.f32.mrb[0].mxu0
    %v2177 = vpop.f32.mrb[0].mxu0
    %v2178 = vadd.f32 0.0, %v2177
    %v2179 = vpop.f32.mrb[0].mxu0
    %2180 = vmatprep.mubr.bf16.mxu0 0
    %2181 = vmatmul.mubr.bf16.gmra.mrb[0].mxu0 %v2127
    %v2182 = vpop.f32.mrb[0].mxu0
    %v2183 = vadd.f32 0.0, %v2182
    %v2184 = vpop.f32.mrb[0].mxu0
    %v2185 = vpop.f32.mrb[0].mxu0
    %v2186 = vadd.f32 0.0, %v2185
    %v2187 = vpop.f32.mrb[0].mxu0
    %2188 = vmatprep.mubr.bf16.mxu0 0
    %2189 = vmatmul.mubr.bf16.gmra.mrb[0].mxu0 %v2130
    %v2190 = vpop.f32.mrb[0].mxu0
    %v2191 = vadd.f32 0.0, %v2190
    %v2192 = vpop.f32.mrb[0].mxu0
    %v2193 = vpop.f32.mrb[0].mxu0
    %v2194 = vadd.f32 0.0, %v2193
    %v2195 = vpop.f32.mrb[0].mxu0
    %2196 = vdwg.mxu0
    %2197 = vrot.lane.b32.xlu0 %v487, 80
    %v2198 = vpop.permute.xlu0 %2197
    %2199 = vrot.lane.b32.xlu0 %v488, 80
    %v2200 = vpop.permute.xlu0 %2199
    %2201 = vrot.lane.b32.xlu0 %v489, 80
    %v2202 = vpop.permute.xlu0 %2201
    %2203 = vrot.lane.b32.xlu0 %v490, 80
    %v2204 = vpop.permute.xlu0 %2203
    %2205 = vrot.lane.b32.xlu0 %v495, 80
    %v2206 = vpop.permute.xlu0 %2205
    %2207 = vrot.lane.b32.xlu0 %v496, 80
    %v2208 = vpop.permute.xlu0 %2207
    %2209 = vrot.lane.b32.xlu0 %v497, 80
    %v2210 = vpop.permute.xlu0 %2209
    %2211 = vrot.lane.b32.xlu0 %v498, 80
    %v2212 = vpop.permute.xlu0 %2211
    %v2214 = vsel %vm511, %v2198, 0
    %v2217 = vsel %vm511, %v2200, 0
    %v2220 = vsel %vm511, %v2202, 0
    %v2223 = vsel %vm511, %v2204, 0
    %v2226 = vsel %vm511, %v2206, 0
    %v2229 = vsel %vm511, %v2208, 0
    %v2232 = vsel %vm511, %v2210, 0
    %v2235 = vsel %vm511, %v2212, 0
    %2237 = vmatprep.subr.bf16.mxu0 0
    %2238 = vmatpush1.bf16.xpose.msra.mxu0 %v2226
    %2239 = vmatprep.subr.bf16.mxu0 0
    %2240 = vmatpush1.bf16.xpose.msra.mxu0 %v2229
    %2241 = vmatprep.subr.bf16.mxu0 0
    %2242 = vmatpush1.bf16.xpose.msra.mxu0 %v2232
    %2243 = vmatprep.subr.bf16.mxu0 0
    %2244 = vmatpush1.bf16.xpose.msra.mxu0 %v2235
    %2245 = vmatprep.subr.bf16.mxu0 0
    %2246 = vmatpush1.bf16.xpose.msra.mxu0 0
    %2247 = vmatprep.subr.bf16.mxu0 0
    %2248 = vmatpush1.bf16.xpose.msra.mxu0 0
    %2249 = vmatprep.subr.bf16.mxu0 0
    %2250 = vmatpush1.bf16.xpose.msra.mxu0 0
    %2251 = vmatprep.subr.bf16.mxu0 0
    %2252 = vmatpush1.bf16.xpose.msra.mxu0 0
    %2253 = vmatprep.subr.bf16.mxu0 0
    %2254 = vmatpush1.bf16.xpose.msra.mxu0 0
    %2255 = vmatprep.subr.bf16.mxu0 0
    %2256 = vmatpush1.bf16.xpose.msra.mxu0 0
    %2257 = vmatprep.subr.bf16.mxu0 0
    %2258 = vmatpush1.bf16.xpose.msra.mxu0 0
    %2259 = vmatprep.subr.bf16.mxu0 0
    %2260 = vmatpush1.bf16.xpose.msra.mxu0 0
    %2261 = vmatprep.subr.bf16.mxu0 0
    %2262 = vmatpush1.bf16.xpose.msra.mxu0 0
    %2263 = vmatprep.subr.bf16.mxu0 0
    %2264 = vmatpush1.bf16.xpose.msra.mxu0 0
    %2265 = vmatprep.subr.bf16.mxu0 0
    %2266 = vmatpush1.bf16.xpose.msra.mxu0 0
    %2267 = vmatprep.subr.bf16.mxu0 0
    %2268 = vmatpush1.bf16.xpose.msra.mxu0 0
    %2269 = vmatprep.mubr.bf16.mxu0 0
    %2270 = vmatmul.mubr.bf16.gmra.mrb[0].mxu0 %v2214
    %v2271 = vpop.f32.mrb[0].mxu0
    %v2272 = vadd.f32 0.0, %v2271
    %v2273 = vpop.f32.mrb[0].mxu0
    %v2274 = vpop.f32.mrb[0].mxu0
    %v2275 = vadd.f32 0.0, %v2274
    %v2276 = vpop.f32.mrb[0].mxu0
    %2277 = vmatprep.mubr.bf16.mxu0 0
    %2278 = vmatmul.mubr.bf16.gmra.mrb[0].mxu0 %v2217
    %v2279 = vpop.f32.mrb[0].mxu0
    %v2280 = vadd.f32 0.0, %v2279
    %v2281 = vpop.f32.mrb[0].mxu0
    %v2282 = vpop.f32.mrb[0].mxu0
    %v2283 = vadd.f32 0.0, %v2282
    %v2284 = vpop.f32.mrb[0].mxu0
    %2285 = vmatprep.mubr.bf16.mxu0 0
    %2286 = vmatmul.mubr.bf16.gmra.mrb[0].mxu0 %v2220
    %v2287 = vpop.f32.mrb[0].mxu0
    %v2288 = vadd.f32 0.0, %v2287
    %v2289 = vpop.f32.mrb[0].mxu0
    %v2290 = vpop.f32.mrb[0].mxu0
    %v2291 = vadd.f32 0.0, %v2290
    %v2292 = vpop.f32.mrb[0].mxu0
    %2293 = vmatprep.mubr.bf16.mxu0 0
    %2294 = vmatmul.mubr.bf16.gmra.mrb[0].mxu0 %v2223
    %v2295 = vpop.f32.mrb[0].mxu0
    %v2296 = vadd.f32 0.0, %v2295
    %v2297 = vpop.f32.mrb[0].mxu0
    %v2298 = vpop.f32.mrb[0].mxu0
    %v2299 = vadd.f32 0.0, %v2298
    %v2300 = vpop.f32.mrb[0].mxu0
    %2301 = vdwg.mxu0
    %2302 = vrot.lane.b32.xlu0 %v491, 80
    %v2303 = vpop.permute.xlu0 %2302
    %2304 = vrot.lane.b32.xlu0 %v492, 80
    %v2305 = vpop.permute.xlu0 %2304
    %2306 = vrot.lane.b32.xlu0 %v493, 80
    %v2307 = vpop.permute.xlu0 %2306
    %2308 = vrot.lane.b32.xlu0 %v494, 80
    %v2309 = vpop.permute.xlu0 %2308
    %2310 = vrot.lane.b32.xlu0 %v499, 80
    %v2311 = vpop.permute.xlu0 %2310
    %2312 = vrot.lane.b32.xlu0 %v500, 80
    %v2313 = vpop.permute.xlu0 %2312
    %2314 = vrot.lane.b32.xlu0 %v501, 80
    %v2315 = vpop.permute.xlu0 %2314
    %2316 = vrot.lane.b32.xlu0 %v502, 80
    %v2317 = vpop.permute.xlu0 %2316
    %v2319 = vsel %vm511, %v2303, 0
    %v2322 = vsel %vm511, %v2305, 0
    %v2325 = vsel %vm511, %v2307, 0
    %v2328 = vsel %vm511, %v2309, 0
    %v2331 = vsel %vm511, %v2311, 0
    %v2334 = vsel %vm511, %v2313, 0
    %v2337 = vsel %vm511, %v2315, 0
    %v2340 = vsel %vm511, %v2317, 0
    %2342 = vmatprep.subr.bf16.mxu0 0
    %2343 = vmatpush1.bf16.xpose.msra.mxu0 %v2331
    %2344 = vmatprep.subr.bf16.mxu0 0
    %2345 = vmatpush1.bf16.xpose.msra.mxu0 %v2334
    %2346 = vmatprep.subr.bf16.mxu0 0
    %2347 = vmatpush1.bf16.xpose.msra.mxu0 %v2337
    %2348 = vmatprep.subr.bf16.mxu0 0
    %2349 = vmatpush1.bf16.xpose.msra.mxu0 %v2340
    %2350 = vmatprep.subr.bf16.mxu0 0
    %2351 = vmatpush1.bf16.xpose.msra.mxu0 0
    %2352 = vmatprep.subr.bf16.mxu0 0
    %2353 = vmatpush1.bf16.xpose.msra.mxu0 0
    %2354 = vmatprep.subr.bf16.mxu0 0
    %2355 = vmatpush1.bf16.xpose.msra.mxu0 0
    %2356 = vmatprep.subr.bf16.mxu0 0
    %2357 = vmatpush1.bf16.xpose.msra.mxu0 0
    %2358 = vmatprep.subr.bf16.mxu0 0
    %2359 = vmatpush1.bf16.xpose.msra.mxu0 0
    %2360 = vmatprep.subr.bf16.mxu0 0
    %2361 = vmatpush1.bf16.xpose.msra.mxu0 0
    %2362 = vmatprep.subr.bf16.mxu0 0
    %2363 = vmatpush1.bf16.xpose.msra.mxu0 0
    %2364 = vmatprep.subr.bf16.mxu0 0
    %2365 = vmatpush1.bf16.xpose.msra.mxu0 0
    %2366 = vmatprep.subr.bf16.mxu0 0
    %2367 = vmatpush1.bf16.xpose.msra.mxu0 0
    %2368 = vmatprep.subr.bf16.mxu0 0
    %2369 = vmatpush1.bf16.xpose.msra.mxu0 0
    %2370 = vmatprep.subr.bf16.mxu0 0
    %2371 = vmatpush1.bf16.xpose.msra.mxu0 0
    %2372 = vmatprep.subr.bf16.mxu0 0
    %2373 = vmatpush1.bf16.xpose.msra.mxu0 0
    %2374 = vmatprep.mubr.bf16.mxu0 0
    %2375 = vmatmul.mubr.bf16.gmra.mrb[0].mxu0 %v2319
    %v2376 = vpop.f32.mrb[0].mxu0
    %v2377 = vadd.f32 0.0, %v2376
    %v2378 = vpop.f32.mrb[0].mxu0
    %v2379 = vpop.f32.mrb[0].mxu0
    %v2380 = vadd.f32 0.0, %v2379
    %v2381 = vpop.f32.mrb[0].mxu0
    %2382 = vmatprep.mubr.bf16.mxu0 0
    %2383 = vmatmul.mubr.bf16.gmra.mrb[0].mxu0 %v2322
    %v2384 = vpop.f32.mrb[0].mxu0
    %v2385 = vadd.f32 0.0, %v2384
    %v2386 = vpop.f32.mrb[0].mxu0
    %v2387 = vpop.f32.mrb[0].mxu0
    %v2388 = vadd.f32 0.0, %v2387
    %v2389 = vpop.f32.mrb[0].mxu0
    %2390 = vmatprep.mubr.bf16.mxu0 0
    %2391 = vmatmul.mubr.bf16.gmra.mrb[0].mxu0 %v2325
    %v2392 = vpop.f32.mrb[0].mxu0
    %v2393 = vadd.f32 0.0, %v2392
    %v2394 = vpop.f32.mrb[0].mxu0
    %v2395 = vpop.f32.mrb[0].mxu0
    %v2396 = vadd.f32 0.0, %v2395
    %v2397 = vpop.f32.mrb[0].mxu0
    %2398 = vmatprep.mubr.bf16.mxu0 0
    %2399 = vmatmul.mubr.bf16.gmra.mrb[0].mxu0 %v2328
    %v2400 = vpop.f32.mrb[0].mxu0
    %v2401 = vadd.f32 0.0, %v2400
    %v2402 = vpop.f32.mrb[0].mxu0
    %v2403 = vpop.f32.mrb[0].mxu0
    %v2404 = vadd.f32 0.0, %v2403
    %v2405 = vpop.f32.mrb[0].mxu0
    %2406 = vdwg.mxu0
    %v2407 = vsel %vm690, %v2272, -inf
    %2408 = vmax.xlane.f32.xlu0 %v2407
    %v2409 = vpop.xlane.xlu0 %2408
    %v2410 = vsel %vm690, %v2275, -inf
    %2411 = vmax.xlane.f32.xlu0 %v2410
    %v2412 = vpop.xlane.xlu0 %2411
    %v2413 = vsel %vm690, %v2280, -inf
    %2414 = vmax.xlane.f32.xlu0 %v2413
    %v2415 = vpop.xlane.xlu0 %2414
    %v2416 = vsel %vm690, %v2283, -inf
    %2417 = vmax.xlane.f32.xlu0 %v2416
    %v2418 = vpop.xlane.xlu0 %2417
    %v2419 = vsel %vm690, %v2288, -inf
    %2420 = vmax.xlane.f32.xlu0 %v2419
    %v2421 = vpop.xlane.xlu0 %2420
    %v2422 = vsel %vm690, %v2291, -inf
    %2423 = vmax.xlane.f32.xlu0 %v2422
    %v2424 = vpop.xlane.xlu0 %2423
    %v2425 = vsel %vm690, %v2296, -inf
    %2426 = vmax.xlane.f32.xlu0 %v2425
    %v2427 = vpop.xlane.xlu0 %2426
    %v2428 = vsel %vm690, %v2299, -inf
    %2429 = vmax.xlane.f32.xlu0 %v2428
    %v2430 = vpop.xlane.xlu0 %2429
    %v2431 = vsel %vm690, %v2377, -inf
    %2432 = vmax.xlane.f32.xlu0 %v2431
    %v2433 = vpop.xlane.xlu0 %2432
    %v2434 = vsel %vm690, %v2380, -inf
    %2435 = vmax.xlane.f32.xlu0 %v2434
    %v2436 = vpop.xlane.xlu0 %2435
    %v2437 = vsel %vm690, %v2385, -inf
    %2438 = vmax.xlane.f32.xlu0 %v2437
    %v2439 = vpop.xlane.xlu0 %2438
    %v2440 = vsel %vm690, %v2388, -inf
    %2441 = vmax.xlane.f32.xlu0 %v2440
    %v2442 = vpop.xlane.xlu0 %2441
    %v2443 = vsel %vm690, %v2393, -inf
    %2444 = vmax.xlane.f32.xlu0 %v2443
    %v2445 = vpop.xlane.xlu0 %2444
    %v2446 = vsel %vm690, %v2396, -inf
    %2447 = vmax.xlane.f32.xlu0 %v2446
    %v2448 = vpop.xlane.xlu0 %2447
    %v2449 = vsel %vm690, %v2401, -inf
    %2450 = vmax.xlane.f32.xlu0 %v2449
    %v2451 = vpop.xlane.xlu0 %2450
    %v2452 = vsel %vm690, %v2404, -inf
    %2453 = vmax.xlane.f32.xlu0 %v2452
    %v2454 = vpop.xlane.xlu0 %2453
    %v2455 = vsub.f32 %v2272, %v2409
    %v2456 = vsub.f32 %v2275, %v2412
    %v2457 = vsub.f32 %v2280, %v2415
    %v2458 = vsub.f32 %v2283, %v2418
    %v2459 = vsub.f32 %v2288, %v2421
    %v2460 = vsub.f32 %v2291, %v2424
    %v2461 = vsub.f32 %v2296, %v2427
    %v2462 = vsub.f32 %v2299, %v2430
    %v2463 = vsub.f32 %v2377, %v2433
    %v2464 = vsub.f32 %v2380, %v2436
    %v2465 = vsub.f32 %v2385, %v2439
    %v2466 = vsub.f32 %v2388, %v2442
    %v2467 = vsub.f32 %v2393, %v2445
    %v2468 = vsub.f32 %v2396, %v2448
    %v2469 = vsub.f32 %v2401, %v2451
    %v2470 = vsub.f32 %v2404, %v2454
    %v2471 = vmul.f32 %v2455, 1.442695
    %v2472 = vpow.pop %v2471
    %v2473 = vmul.f32 %v2456, 1.442695
    %v2474 = vpow.pop %v2473
    %v2475 = vmul.f32 %v2457, 1.442695
    %v2476 = vpow.pop %v2475
    %v2477 = vmul.f32 %v2458, 1.442695
    %v2478 = vpow.pop %v2477
    %v2479 = vmul.f32 %v2459, 1.442695
    %v2480 = vpow.pop %v2479
    %v2481 = vmul.f32 %v2460, 1.442695
    %v2482 = vpow.pop %v2481
    %v2483 = vmul.f32 %v2461, 1.442695
    %v2484 = vpow.pop %v2483
    %v2485 = vmul.f32 %v2462, 1.442695
    %v2486 = vpow.pop %v2485
    %v2487 = vmul.f32 %v2463, 1.442695
    %v2488 = vpow.pop %v2487
    %v2489 = vmul.f32 %v2464, 1.442695
    %v2490 = vpow.pop %v2489
    %v2491 = vmul.f32 %v2465, 1.442695
    %v2492 = vpow.pop %v2491
    %v2493 = vmul.f32 %v2466, 1.442695
    %v2494 = vpow.pop %v2493
    %v2495 = vmul.f32 %v2467, 1.442695
    %v2496 = vpow.pop %v2495
    %v2497 = vmul.f32 %v2468, 1.442695
    %v2498 = vpow.pop %v2497
    %v2499 = vmul.f32 %v2469, 1.442695
    %v2500 = vpow.pop %v2499
    %v2501 = vmul.f32 %v2470, 1.442695
    %v2502 = vpow.pop %v2501
    %v2503 = vsel %vm690, %v2472, 0.0
    %2504 = vadd.xlane.f32.xlu0 %v2503
    %v2505 = vpop.xlane.xlu0 %2504
    %v2506 = vsel %vm690, %v2474, 0.0
    %2507 = vadd.xlane.f32.xlu0 %v2506
    %v2508 = vpop.xlane.xlu0 %2507
    %v2509 = vsel %vm690, %v2476, 0.0
    %2510 = vadd.xlane.f32.xlu0 %v2509
    %v2511 = vpop.xlane.xlu0 %2510
    %v2512 = vsel %vm690, %v2478, 0.0
    %2513 = vadd.xlane.f32.xlu0 %v2512
    %v2514 = vpop.xlane.xlu0 %2513
    %v2515 = vsel %vm690, %v2480, 0.0
    %2516 = vadd.xlane.f32.xlu0 %v2515
    %v2517 = vpop.xlane.xlu0 %2516
    %v2518 = vsel %vm690, %v2482, 0.0
    %2519 = vadd.xlane.f32.xlu0 %v2518
    %v2520 = vpop.xlane.xlu0 %2519
    %v2521 = vsel %vm690, %v2484, 0.0
    %2522 = vadd.xlane.f32.xlu0 %v2521
    %v2523 = vpop.xlane.xlu0 %2522
    %v2524 = vsel %vm690, %v2486, 0.0
    %2525 = vadd.xlane.f32.xlu0 %v2524
    %v2526 = vpop.xlane.xlu0 %2525
    %v2527 = vsel %vm690, %v2488, 0.0
    %2528 = vadd.xlane.f32.xlu0 %v2527
    %v2529 = vpop.xlane.xlu0 %2528
    %v2530 = vsel %vm690, %v2490, 0.0
    %2531 = vadd.xlane.f32.xlu0 %v2530
    %v2532 = vpop.xlane.xlu0 %2531
    %v2533 = vsel %vm690, %v2492, 0.0
    %2534 = vadd.xlane.f32.xlu0 %v2533
    %v2535 = vpop.xlane.xlu0 %2534
    %v2536 = vsel %vm690, %v2494, 0.0
    %2537 = vadd.xlane.f32.xlu0 %v2536
    %v2538 = vpop.xlane.xlu0 %2537
    %v2539 = vsel %vm690, %v2496, 0.0
    %2540 = vadd.xlane.f32.xlu0 %v2539
    %v2541 = vpop.xlane.xlu0 %2540
    %v2542 = vsel %vm690, %v2498, 0.0
    %2543 = vadd.xlane.f32.xlu0 %v2542
    %v2544 = vpop.xlane.xlu0 %2543
    %v2545 = vsel %vm690, %v2500, 0.0
    %2546 = vadd.xlane.f32.xlu0 %v2545
    %v2547 = vpop.xlane.xlu0 %2546
    %v2548 = vsel %vm690, %v2502, 0.0
    %2549 = vadd.xlane.f32.xlu0 %v2548
    %v2550 = vpop.xlane.xlu0 %2549
    %v2551 = vrcp.pop %v2505
    %v2552 = vrcp.pop %v2508
    %v2553 = vrcp.pop %v2511
    %v2554 = vrcp.pop %v2514
    %v2555 = vrcp.pop %v2517
    %v2556 = vrcp.pop %v2520
    %v2557 = vrcp.pop %v2523
    %v2558 = vrcp.pop %v2526
    %v2559 = vrcp.pop %v2529
    %v2560 = vrcp.pop %v2532
    %v2561 = vrcp.pop %v2535
    %v2562 = vrcp.pop %v2538
    %v2563 = vrcp.pop %v2541
    %v2564 = vrcp.pop %v2544
    %v2565 = vrcp.pop %v2547
    %v2566 = vrcp.pop %v2550
    %v2567 = vmul.f32 %v2472, %v2551
    %v2568 = vmul.f32 %v2474, %v2552
    %v2569 = vmul.f32 %v2476, %v2553
    %v2570 = vmul.f32 %v2478, %v2554
    %v2571 = vmul.f32 %v2480, %v2555
    %v2572 = vmul.f32 %v2482, %v2556
    %v2573 = vmul.f32 %v2484, %v2557
    %v2574 = vmul.f32 %v2486, %v2558
    %v2575 = vmul.f32 %v2488, %v2559
    %v2576 = vmul.f32 %v2490, %v2560
    %v2577 = vmul.f32 %v2492, %v2561
    %v2578 = vmul.f32 %v2494, %v2562
    %v2579 = vmul.f32 %v2496, %v2563
    %v2580 = vmul.f32 %v2498, %v2564
    %v2581 = vmul.f32 %v2500, %v2565
    %v2582 = vmul.f32 %v2502, %v2566
    %v2583 = vpack.c.bf16 %v2568, %v2567
    %v2584 = vpack.c.bf16 %v2570, %v2569
    %v2585 = vpack.c.bf16 %v2572, %v2571
    %v2586 = vpack.c.bf16 %v2574, %v2573
    %v2587 = vpack.c.bf16 %v2576, %v2575
    %v2588 = vpack.c.bf16 %v2578, %v2577
    %v2589 = vpack.c.bf16 %v2580, %v2579
    %v2590 = vpack.c.bf16 %v2582, %v2581
    %2591 = vrot.lane.b32.xlu0 %v503, 80
    %v2592 = vpop.permute.xlu0 %2591
    %2593 = vrot.lane.b32.xlu0 %v504, 80
    %v2594 = vpop.permute.xlu0 %2593
    %2595 = vrot.lane.b32.xlu0 %v505, 80
    %v2596 = vpop.permute.xlu0 %2595
    %2597 = vrot.lane.b32.xlu0 %v506, 80
    %v2598 = vpop.permute.xlu0 %2597
    %v2604 = vsel %vm690, %v2583, 0
    %v2607 = vsel %vm690, %v2584, 0
    %v2610 = vsel %vm690, %v2585, 0
    %v2613 = vsel %vm690, %v2586, 0
    %2615 = vmatprep.subr.bf16.mxu0 0
    %2616 = vmatpush1.bf16.msra.mxu0 %v2592
    %2617 = vmatprep.subr.bf16.mxu0 0
    %2618 = vmatpush1.bf16.msra.mxu0 %v2594
    %2619 = vmatprep.subr.bf16.mxu0 0
    %2620 = vmatpush1.bf16.msra.mxu0 %v2596
    %2621 = vmatprep.subr.bf16.mxu0 0
    %2622 = vmatpush1.bf16.msra.mxu0 %v2598
    %2623 = vmatprep.subr.bf16.mxu0 0
    %2624 = vmatpush1.bf16.msra.mxu0 0
    %2625 = vmatprep.subr.bf16.mxu0 0
    %2626 = vmatpush1.bf16.msra.mxu0 0
    %2627 = vmatprep.subr.bf16.mxu0 0
    %2628 = vmatpush1.bf16.msra.mxu0 0
    %2629 = vmatprep.subr.bf16.mxu0 0
    %2630 = vmatpush1.bf16.msra.mxu0 0
    %2631 = vmatprep.subr.bf16.mxu0 0
    %2632 = vmatpush1.bf16.msra.mxu0 0
    %2633 = vmatprep.subr.bf16.mxu0 0
    %2634 = vmatpush1.bf16.msra.mxu0 0
    %2635 = vmatprep.subr.bf16.mxu0 0
    %2636 = vmatpush1.bf16.msra.mxu0 0
    %2637 = vmatprep.subr.bf16.mxu0 0
    %2638 = vmatpush1.bf16.msra.mxu0 0
    %2639 = vmatprep.subr.bf16.mxu0 0
    %2640 = vmatpush1.bf16.msra.mxu0 0
    %2641 = vmatprep.subr.bf16.mxu0 0
    %2642 = vmatpush1.bf16.msra.mxu0 0
    %2643 = vmatprep.subr.bf16.mxu0 0
    %2644 = vmatpush1.bf16.msra.mxu0 0
    %2645 = vmatprep.subr.bf16.mxu0 0
    %2646 = vmatpush1.bf16.msra.mxu0 0
    %2647 = vmatprep.mubr.bf16.mxu0 0
    %2648 = vmatmul.mubr.bf16.gmra.mrb[0].mxu0 %v2604
    %v2649 = vpop.f32.mrb[0].mxu0
    %v2650 = vadd.f32 0.0, %v2649
    %v2651 = vpop.f32.mrb[0].mxu0
    %v2652 = vpop.f32.mrb[0].mxu0
    %v2653 = vadd.f32 0.0, %v2652
    %v2654 = vpop.f32.mrb[0].mxu0
    %2655 = vmatprep.mubr.bf16.mxu0 0
    %2656 = vmatmul.mubr.bf16.gmra.mrb[0].mxu0 %v2607
    %v2657 = vpop.f32.mrb[0].mxu0
    %v2658 = vadd.f32 0.0, %v2657
    %v2659 = vpop.f32.mrb[0].mxu0
    %v2660 = vpop.f32.mrb[0].mxu0
    %v2661 = vadd.f32 0.0, %v2660
    %v2662 = vpop.f32.mrb[0].mxu0
    %2663 = vmatprep.mubr.bf16.mxu0 0
    %2664 = vmatmul.mubr.bf16.gmra.mrb[0].mxu0 %v2610
    %v2665 = vpop.f32.mrb[0].mxu0
    %v2666 = vadd.f32 0.0, %v2665
    %v2667 = vpop.f32.mrb[0].mxu0
    %v2668 = vpop.f32.mrb[0].mxu0
    %v2669 = vadd.f32 0.0, %v2668
    %v2670 = vpop.f32.mrb[0].mxu0
    %2671 = vmatprep.mubr.bf16.mxu0 0
    %2672 = vmatmul.mubr.bf16.gmra.mrb[0].mxu0 %v2613
    %v2673 = vpop.f32.mrb[0].mxu0
    %v2674 = vadd.f32 0.0, %v2673
    %v2675 = vpop.f32.mrb[0].mxu0
    %v2676 = vpop.f32.mrb[0].mxu0
    %v2677 = vadd.f32 0.0, %v2676
    %v2678 = vpop.f32.mrb[0].mxu0
    %2679 = vdwg.mxu0
    %2680 = vrot.lane.b32.xlu0 %v507, 80
    %v2681 = vpop.permute.xlu0 %2680
    %2682 = vrot.lane.b32.xlu0 %v508, 80
    %v2683 = vpop.permute.xlu0 %2682
    %2684 = vrot.lane.b32.xlu0 %v509, 80
    %v2685 = vpop.permute.xlu0 %2684
    %2686 = vrot.lane.b32.xlu0 %v510, 80
    %v2687 = vpop.permute.xlu0 %2686
    %v2693 = vsel %vm690, %v2587, 0
    %v2696 = vsel %vm690, %v2588, 0
    %v2699 = vsel %vm690, %v2589, 0
    %v2702 = vsel %vm690, %v2590, 0
    %2704 = vmatprep.subr.bf16.mxu0 0
    %2705 = vmatpush1.bf16.msra.mxu0 %v2681
    %2706 = vmatprep.subr.bf16.mxu0 0
    %2707 = vmatpush1.bf16.msra.mxu0 %v2683
    %2708 = vmatprep.subr.bf16.mxu0 0
    %2709 = vmatpush1.bf16.msra.mxu0 %v2685
    %2710 = vmatprep.subr.bf16.mxu0 0
    %2711 = vmatpush1.bf16.msra.mxu0 %v2687
    %2712 = vmatprep.subr.bf16.mxu0 0
    %2713 = vmatpush1.bf16.msra.mxu0 0
    %2714 = vmatprep.subr.bf16.mxu0 0
    %2715 = vmatpush1.bf16.msra.mxu0 0
    %2716 = vmatprep.subr.bf16.mxu0 0
    %2717 = vmatpush1.bf16.msra.mxu0 0
    %2718 = vmatprep.subr.bf16.mxu0 0
    %2719 = vmatpush1.bf16.msra.mxu0 0
    %2720 = vmatprep.subr.bf16.mxu0 0
    %2721 = vmatpush1.bf16.msra.mxu0 0
    %2722 = vmatprep.subr.bf16.mxu0 0
    %2723 = vmatpush1.bf16.msra.mxu0 0
    %2724 = vmatprep.subr.bf16.mxu0 0
    %2725 = vmatpush1.bf16.msra.mxu0 0
    %2726 = vmatprep.subr.bf16.mxu0 0
    %2727 = vmatpush1.bf16.msra.mxu0 0
    %2728 = vmatprep.subr.bf16.mxu0 0
    %2729 = vmatpush1.bf16.msra.mxu0 0
    %2730 = vmatprep.subr.bf16.mxu0 0
    %2731 = vmatpush1.bf16.msra.mxu0 0
    %2732 = vmatprep.subr.bf16.mxu0 0
    %2733 = vmatpush1.bf16.msra.mxu0 0
    %2734 = vmatprep.subr.bf16.mxu0 0
    %2735 = vmatpush1.bf16.msra.mxu0 0
    %2736 = vmatprep.mubr.bf16.mxu0 0
    %2737 = vmatmul.mubr.bf16.gmra.mrb[0].mxu0 %v2693
    %v2738 = vpop.f32.mrb[0].mxu0
    %v2739 = vadd.f32 0.0, %v2738
    %v2740 = vpop.f32.mrb[0].mxu0
    %v2741 = vpop.f32.mrb[0].mxu0
    %v2742 = vadd.f32 0.0, %v2741
    %v2743 = vpop.f32.mrb[0].mxu0
    %2744 = vmatprep.mubr.bf16.mxu0 0
    %2745 = vmatmul.mubr.bf16.gmra.mrb[0].mxu0 %v2696
    %v2746 = vpop.f32.mrb[0].mxu0
    %v2747 = vadd.f32 0.0, %v2746
    %v2748 = vpop.f32.mrb[0].mxu0
    %v2749 = vpop.f32.mrb[0].mxu0
    %v2750 = vadd.f32 0.0, %v2749
    %v2751 = vpop.f32.mrb[0].mxu0
    %2752 = vmatprep.mubr.bf16.mxu0 0
    %2753 = vmatmul.mubr.bf16.gmra.mrb[0].mxu0 %v2699
    %v2754 = vpop.f32.mrb[0].mxu0
    %v2755 = vadd.f32 0.0, %v2754
    %v2756 = vpop.f32.mrb[0].mxu0
    %v2757 = vpop.f32.mrb[0].mxu0
    %v2758 = vadd.f32 0.0, %v2757
    %v2759 = vpop.f32.mrb[0].mxu0
    %2760 = vmatprep.mubr.bf16.mxu0 0
    %2761 = vmatmul.mubr.bf16.gmra.mrb[0].mxu0 %v2702
    %v2762 = vpop.f32.mrb[0].mxu0
    %v2763 = vadd.f32 0.0, %v2762
    %v2764 = vpop.f32.mrb[0].mxu0
    %v2765 = vpop.f32.mrb[0].mxu0
    %v2766 = vadd.f32 0.0, %v2765
    %v2767 = vpop.f32.mrb[0].mxu0
    %2768 = vdwg.mxu0
    %2769 = vrot.lane.b32.xlu0 %v487, 64
    %v2770 = vpop.permute.xlu0 %2769
    %2771 = vrot.lane.b32.xlu0 %v488, 64
    %v2772 = vpop.permute.xlu0 %2771
    %2773 = vrot.lane.b32.xlu0 %v489, 64
    %v2774 = vpop.permute.xlu0 %2773
    %2775 = vrot.lane.b32.xlu0 %v490, 64
    %v2776 = vpop.permute.xlu0 %2775
    %2777 = vrot.lane.b32.xlu0 %v495, 64
    %v2778 = vpop.permute.xlu0 %2777
    %2779 = vrot.lane.b32.xlu0 %v496, 64
    %v2780 = vpop.permute.xlu0 %2779
    %2781 = vrot.lane.b32.xlu0 %v497, 64
    %v2782 = vpop.permute.xlu0 %2781
    %2783 = vrot.lane.b32.xlu0 %v498, 64
    %v2784 = vpop.permute.xlu0 %2783
    %v2786 = vsel %vm511, %v2770, 0
    %v2789 = vsel %vm511, %v2772, 0
    %v2792 = vsel %vm511, %v2774, 0
    %v2795 = vsel %vm511, %v2776, 0
    %v2798 = vsel %vm511, %v2778, 0
    %v2801 = vsel %vm511, %v2780, 0
    %v2804 = vsel %vm511, %v2782, 0
    %v2807 = vsel %vm511, %v2784, 0
    %2809 = vmatprep.subr.bf16.mxu0 0
    %2810 = vmatpush1.bf16.xpose.msra.mxu0 %v2798
    %2811 = vmatprep.subr.bf16.mxu0 0
    %2812 = vmatpush1.bf16.xpose.msra.mxu0 %v2801
    %2813 = vmatprep.subr.bf16.mxu0 0
    %2814 = vmatpush1.bf16.xpose.msra.mxu0 %v2804
    %2815 = vmatprep.subr.bf16.mxu0 0
    %2816 = vmatpush1.bf16.xpose.msra.mxu0 %v2807
    %2817 = vmatprep.subr.bf16.mxu0 0
    %2818 = vmatpush1.bf16.xpose.msra.mxu0 0
    %2819 = vmatprep.subr.bf16.mxu0 0
    %2820 = vmatpush1.bf16.xpose.msra.mxu0 0
    %2821 = vmatprep.subr.bf16.mxu0 0
    %2822 = vmatpush1.bf16.xpose.msra.mxu0 0
    %2823 = vmatprep.subr.bf16.mxu0 0
    %2824 = vmatpush1.bf16.xpose.msra.mxu0 0
    %2825 = vmatprep.subr.bf16.mxu0 0
    %2826 = vmatpush1.bf16.xpose.msra.mxu0 0
    %2827 = vmatprep.subr.bf16.mxu0 0
    %2828 = vmatpush1.bf16.xpose.msra.mxu0 0
    %2829 = vmatprep.subr.bf16.mxu0 0
    %2830 = vmatpush1.bf16.xpose.msra.mxu0 0
    %2831 = vmatprep.subr.bf16.mxu0 0
    %2832 = vmatpush1.bf16.xpose.msra.mxu0 0
    %2833 = vmatprep.subr.bf16.mxu0 0
    %2834 = vmatpush1.bf16.xpose.msra.mxu0 0
    %2835 = vmatprep.subr.bf16.mxu0 0
    %2836 = vmatpush1.bf16.xpose.msra.mxu0 0
    %2837 = vmatprep.subr.bf16.mxu0 0
    %2838 = vmatpush1.bf16.xpose.msra.mxu0 0
    %2839 = vmatprep.subr.bf16.mxu0 0
    %2840 = vmatpush1.bf16.xpose.msra.mxu0 0
    %2841 = vmatprep.mubr.bf16.mxu0 0
    %2842 = vmatmul.mubr.bf16.gmra.mrb[0].mxu0 %v2786
    %v2843 = vpop.f32.mrb[0].mxu0
    %v2844 = vadd.f32 0.0, %v2843
    %v2845 = vpop.f32.mrb[0].mxu0
    %v2846 = vpop.f32.mrb[0].mxu0
    %v2847 = vadd.f32 0.0, %v2846
    %v2848 = vpop.f32.mrb[0].mxu0
    %2849 = vmatprep.mubr.bf16.mxu0 0
    %2850 = vmatmul.mubr.bf16.gmra.mrb[0].mxu0 %v2789
    %v2851 = vpop.f32.mrb[0].mxu0
    %v2852 = vadd.f32 0.0, %v2851
    %v2853 = vpop.f32.mrb[0].mxu0
    %v2854 = vpop.f32.mrb[0].mxu0
    %v2855 = vadd.f32 0.0, %v2854
    %v2856 = vpop.f32.mrb[0].mxu0
    %2857 = vmatprep.mubr.bf16.mxu0 0
    %2858 = vmatmul.mubr.bf16.gmra.mrb[0].mxu0 %v2792
    %v2859 = vpop.f32.mrb[0].mxu0
    %v2860 = vadd.f32 0.0, %v2859
    %v2861 = vpop.f32.mrb[0].mxu0
    %v2862 = vpop.f32.mrb[0].mxu0
    %v2863 = vadd.f32 0.0, %v2862
    %v2864 = vpop.f32.mrb[0].mxu0
    %2865 = vmatprep.mubr.bf16.mxu0 0
    %2866 = vmatmul.mubr.bf16.gmra.mrb[0].mxu0 %v2795
    %v2867 = vpop.f32.mrb[0].mxu0
    %v2868 = vadd.f32 0.0, %v2867
    %v2869 = vpop.f32.mrb[0].mxu0
    %v2870 = vpop.f32.mrb[0].mxu0
    %v2871 = vadd.f32 0.0, %v2870
    %v2872 = vpop.f32.mrb[0].mxu0
    %2873 = vdwg.mxu0
    %2874 = vrot.lane.b32.xlu0 %v491, 64
    %v2875 = vpop.permute.xlu0 %2874
    %2876 = vrot.lane.b32.xlu0 %v492, 64
    %v2877 = vpop.permute.xlu0 %2876
    %2878 = vrot.lane.b32.xlu0 %v493, 64
    %v2879 = vpop.permute.xlu0 %2878
    %2880 = vrot.lane.b32.xlu0 %v494, 64
    %v2881 = vpop.permute.xlu0 %2880
    %2882 = vrot.lane.b32.xlu0 %v499, 64
    %v2883 = vpop.permute.xlu0 %2882
    %2884 = vrot.lane.b32.xlu0 %v500, 64
    %v2885 = vpop.permute.xlu0 %2884
    %2886 = vrot.lane.b32.xlu0 %v501, 64
    %v2887 = vpop.permute.xlu0 %2886
    %2888 = vrot.lane.b32.xlu0 %v502, 64
    %v2889 = vpop.permute.xlu0 %2888
    %v2891 = vsel %vm511, %v2875, 0
    %v2894 = vsel %vm511, %v2877, 0
    %v2897 = vsel %vm511, %v2879, 0
    %v2900 = vsel %vm511, %v2881, 0
    %v2903 = vsel %vm511, %v2883, 0
    %v2906 = vsel %vm511, %v2885, 0
    %v2909 = vsel %vm511, %v2887, 0
    %v2912 = vsel %vm511, %v2889, 0
    %2914 = vmatprep.subr.bf16.mxu0 0
    %2915 = vmatpush1.bf16.xpose.msra.mxu0 %v2903
    %2916 = vmatprep.subr.bf16.mxu0 0
    %2917 = vmatpush1.bf16.xpose.msra.mxu0 %v2906
    %2918 = vmatprep.subr.bf16.mxu0 0
    %2919 = vmatpush1.bf16.xpose.msra.mxu0 %v2909
    %2920 = vmatprep.subr.bf16.mxu0 0
    %2921 = vmatpush1.bf16.xpose.msra.mxu0 %v2912
    %2922 = vmatprep.subr.bf16.mxu0 0
    %2923 = vmatpush1.bf16.xpose.msra.mxu0 0
    %2924 = vmatprep.subr.bf16.mxu0 0
    %2925 = vmatpush1.bf16.xpose.msra.mxu0 0
    %2926 = vmatprep.subr.bf16.mxu0 0
    %2927 = vmatpush1.bf16.xpose.msra.mxu0 0
    %2928 = vmatprep.subr.bf16.mxu0 0
    %2929 = vmatpush1.bf16.xpose.msra.mxu0 0
    %2930 = vmatprep.subr.bf16.mxu0 0
    %2931 = vmatpush1.bf16.xpose.msra.mxu0 0
    %2932 = vmatprep.subr.bf16.mxu0 0
    %2933 = vmatpush1.bf16.xpose.msra.mxu0 0
    %2934 = vmatprep.subr.bf16.mxu0 0
    %2935 = vmatpush1.bf16.xpose.msra.mxu0 0
    %2936 = vmatprep.subr.bf16.mxu0 0
    %2937 = vmatpush1.bf16.xpose.msra.mxu0 0
    %2938 = vmatprep.subr.bf16.mxu0 0
    %2939 = vmatpush1.bf16.xpose.msra.mxu0 0
    %2940 = vmatprep.subr.bf16.mxu0 0
    %2941 = vmatpush1.bf16.xpose.msra.mxu0 0
    %2942 = vmatprep.subr.bf16.mxu0 0
    %2943 = vmatpush1.bf16.xpose.msra.mxu0 0
    %2944 = vmatprep.subr.bf16.mxu0 0
    %2945 = vmatpush1.bf16.xpose.msra.mxu0 0
    %2946 = vmatprep.mubr.bf16.mxu0 0
    %2947 = vmatmul.mubr.bf16.gmra.mrb[0].mxu0 %v2891
    %v2948 = vpop.f32.mrb[0].mxu0
    %v2949 = vadd.f32 0.0, %v2948
    %v2950 = vpop.f32.mrb[0].mxu0
    %v2951 = vpop.f32.mrb[0].mxu0
    %v2952 = vadd.f32 0.0, %v2951
    %v2953 = vpop.f32.mrb[0].mxu0
    %2954 = vmatprep.mubr.bf16.mxu0 0
    %2955 = vmatmul.mubr.bf16.gmra.mrb[0].mxu0 %v2894
    %v2956 = vpop.f32.mrb[0].mxu0
    %v2957 = vadd.f32 0.0, %v2956
    %v2958 = vpop.f32.mrb[0].mxu0
    %v2959 = vpop.f32.mrb[0].mxu0
    %v2960 = vadd.f32 0.0, %v2959
    %v2961 = vpop.f32.mrb[0].mxu0
    %2962 = vmatprep.mubr.bf16.mxu0 0
    %2963 = vmatmul.mubr.bf16.gmra.mrb[0].mxu0 %v2897
    %v2964 = vpop.f32.mrb[0].mxu0
    %v2965 = vadd.f32 0.0, %v2964
    %v2966 = vpop.f32.mrb[0].mxu0
    %v2967 = vpop.f32.mrb[0].mxu0
    %v2968 = vadd.f32 0.0, %v2967
    %v2969 = vpop.f32.mrb[0].mxu0
    %2970 = vmatprep.mubr.bf16.mxu0 0
    %2971 = vmatmul.mubr.bf16.gmra.mrb[0].mxu0 %v2900
    %v2972 = vpop.f32.mrb[0].mxu0
    %v2973 = vadd.f32 0.0, %v2972
    %v2974 = vpop.f32.mrb[0].mxu0
    %v2975 = vpop.f32.mrb[0].mxu0
    %v2976 = vadd.f32 0.0, %v2975
    %v2977 = vpop.f32.mrb[0].mxu0
    %2978 = vdwg.mxu0
    %v2979 = vsel %vm690, %v2844, -inf
    %2980 = vmax.xlane.f32.xlu0 %v2979
    %v2981 = vpop.xlane.xlu0 %2980
    %v2982 = vsel %vm690, %v2847, -inf
    %2983 = vmax.xlane.f32.xlu0 %v2982
    %v2984 = vpop.xlane.xlu0 %2983
    %v2985 = vsel %vm690, %v2852, -inf
    %2986 = vmax.xlane.f32.xlu0 %v2985
    %v2987 = vpop.xlane.xlu0 %2986
    %v2988 = vsel %vm690, %v2855, -inf
    %2989 = vmax.xlane.f32.xlu0 %v2988
    %v2990 = vpop.xlane.xlu0 %2989
    %v2991 = vsel %vm690, %v2860, -inf
    %2992 = vmax.xlane.f32.xlu0 %v2991
    %v2993 = vpop.xlane.xlu0 %2992
    %v2994 = vsel %vm690, %v2863, -inf
    %2995 = vmax.xlane.f32.xlu0 %v2994
    %v2996 = vpop.xlane.xlu0 %2995
    %v2997 = vsel %vm690, %v2868, -inf
    %2998 = vmax.xlane.f32.xlu0 %v2997
    %v2999 = vpop.xlane.xlu0 %2998
    %v3000 = vsel %vm690, %v2871, -inf
    %3001 = vmax.xlane.f32.xlu0 %v3000
    %v3002 = vpop.xlane.xlu0 %3001
    %v3003 = vsel %vm690, %v2949, -inf
    %3004 = vmax.xlane.f32.xlu0 %v3003
    %v3005 = vpop.xlane.xlu0 %3004
    %v3006 = vsel %vm690, %v2952, -inf
    %3007 = vmax.xlane.f32.xlu0 %v3006
    %v3008 = vpop.xlane.xlu0 %3007
    %v3009 = vsel %vm690, %v2957, -inf
    %3010 = vmax.xlane.f32.xlu0 %v3009
    %v3011 = vpop.xlane.xlu0 %3010
    %v3012 = vsel %vm690, %v2960, -inf
    %3013 = vmax.xlane.f32.xlu0 %v3012
    %v3014 = vpop.xlane.xlu0 %3013
    %v3015 = vsel %vm690, %v2965, -inf
    %3016 = vmax.xlane.f32.xlu0 %v3015
    %v3017 = vpop.xlane.xlu0 %3016
    %v3018 = vsel %vm690, %v2968, -inf
    %3019 = vmax.xlane.f32.xlu0 %v3018
    %v3020 = vpop.xlane.xlu0 %3019
    %v3021 = vsel %vm690, %v2973, -inf
    %3022 = vmax.xlane.f32.xlu0 %v3021
    %v3023 = vpop.xlane.xlu0 %3022
    %v3024 = vsel %vm690, %v2976, -inf
    %3025 = vmax.xlane.f32.xlu0 %v3024
    %v3026 = vpop.xlane.xlu0 %3025
    %v3027 = vsub.f32 %v2844, %v2981
    %v3028 = vsub.f32 %v2847, %v2984
    %v3029 = vsub.f32 %v2852, %v2987
    %v3030 = vsub.f32 %v2855, %v2990
    %v3031 = vsub.f32 %v2860, %v2993
    %v3032 = vsub.f32 %v2863, %v2996
    %v3033 = vsub.f32 %v2868, %v2999
    %v3034 = vsub.f32 %v2871, %v3002
    %v3035 = vsub.f32 %v2949, %v3005
    %v3036 = vsub.f32 %v2952, %v3008
    %v3037 = vsub.f32 %v2957, %v3011
    %v3038 = vsub.f32 %v2960, %v3014
    %v3039 = vsub.f32 %v2965, %v3017
    %v3040 = vsub.f32 %v2968, %v3020
    %v3041 = vsub.f32 %v2973, %v3023
    %v3042 = vsub.f32 %v2976, %v3026
    %v3043 = vmul.f32 %v3027, 1.442695
    %v3044 = vpow.pop %v3043
    %v3045 = vmul.f32 %v3028, 1.442695
    %v3046 = vpow.pop %v3045
    %v3047 = vmul.f32 %v3029, 1.442695
    %v3048 = vpow.pop %v3047
    %v3049 = vmul.f32 %v3030, 1.442695
    %v3050 = vpow.pop %v3049
    %v3051 = vmul.f32 %v3031, 1.442695
    %v3052 = vpow.pop %v3051
    %v3053 = vmul.f32 %v3032, 1.442695
    %v3054 = vpow.pop %v3053
    %v3055 = vmul.f32 %v3033, 1.442695
    %v3056 = vpow.pop %v3055
    %v3057 = vmul.f32 %v3034, 1.442695
    %v3058 = vpow.pop %v3057
    %v3059 = vmul.f32 %v3035, 1.442695
    %v3060 = vpow.pop %v3059
    %v3061 = vmul.f32 %v3036, 1.442695
    %v3062 = vpow.pop %v3061
    %v3063 = vmul.f32 %v3037, 1.442695
    %v3064 = vpow.pop %v3063
    %v3065 = vmul.f32 %v3038, 1.442695
    %v3066 = vpow.pop %v3065
    %v3067 = vmul.f32 %v3039, 1.442695
    %v3068 = vpow.pop %v3067
    %v3069 = vmul.f32 %v3040, 1.442695
    %v3070 = vpow.pop %v3069
    %v3071 = vmul.f32 %v3041, 1.442695
    %v3072 = vpow.pop %v3071
    %v3073 = vmul.f32 %v3042, 1.442695
    %v3074 = vpow.pop %v3073
    %v3075 = vsel %vm690, %v3044, 0.0
    %3076 = vadd.xlane.f32.xlu0 %v3075
    %v3077 = vpop.xlane.xlu0 %3076
    %v3078 = vsel %vm690, %v3046, 0.0
    %3079 = vadd.xlane.f32.xlu0 %v3078
    %v3080 = vpop.xlane.xlu0 %3079
    %v3081 = vsel %vm690, %v3048, 0.0
    %3082 = vadd.xlane.f32.xlu0 %v3081
    %v3083 = vpop.xlane.xlu0 %3082
    %v3084 = vsel %vm690, %v3050, 0.0
    %3085 = vadd.xlane.f32.xlu0 %v3084
    %v3086 = vpop.xlane.xlu0 %3085
    %v3087 = vsel %vm690, %v3052, 0.0
    %3088 = vadd.xlane.f32.xlu0 %v3087
    %v3089 = vpop.xlane.xlu0 %3088
    %v3090 = vsel %vm690, %v3054, 0.0
    %3091 = vadd.xlane.f32.xlu0 %v3090
    %v3092 = vpop.xlane.xlu0 %3091
    %v3093 = vsel %vm690, %v3056, 0.0
    %3094 = vadd.xlane.f32.xlu0 %v3093
    %v3095 = vpop.xlane.xlu0 %3094
    %v3096 = vsel %vm690, %v3058, 0.0
    %3097 = vadd.xlane.f32.xlu0 %v3096
    %v3098 = vpop.xlane.xlu0 %3097
    %v3099 = vsel %vm690, %v3060, 0.0
    %3100 = vadd.xlane.f32.xlu0 %v3099
    %v3101 = vpop.xlane.xlu0 %3100
    %v3102 = vsel %vm690, %v3062, 0.0
    %3103 = vadd.xlane.f32.xlu0 %v3102
    %v3104 = vpop.xlane.xlu0 %3103
    %v3105 = vsel %vm690, %v3064, 0.0
    %3106 = vadd.xlane.f32.xlu0 %v3105
    %v3107 = vpop.xlane.xlu0 %3106
    %v3108 = vsel %vm690, %v3066, 0.0
    %3109 = vadd.xlane.f32.xlu0 %v3108
    %v3110 = vpop.xlane.xlu0 %3109
    %v3111 = vsel %vm690, %v3068, 0.0
    %3112 = vadd.xlane.f32.xlu0 %v3111
    %v3113 = vpop.xlane.xlu0 %3112
    %v3114 = vsel %vm690, %v3070, 0.0
    %3115 = vadd.xlane.f32.xlu0 %v3114
    %v3116 = vpop.xlane.xlu0 %3115
    %v3117 = vsel %vm690, %v3072, 0.0
    %3118 = vadd.xlane.f32.xlu0 %v3117
    %v3119 = vpop.xlane.xlu0 %3118
    %v3120 = vsel %vm690, %v3074, 0.0
    %3121 = vadd.xlane.f32.xlu0 %v3120
    %v3122 = vpop.xlane.xlu0 %3121
    %v3123 = vrcp.pop %v3077
    %v3124 = vrcp.pop %v3080
    %v3125 = vrcp.pop %v3083
    %v3126 = vrcp.pop %v3086
    %v3127 = vrcp.pop %v3089
    %v3128 = vrcp.pop %v3092
    %v3129 = vrcp.pop %v3095
    %v3130 = vrcp.pop %v3098
    %v3131 = vrcp.pop %v3101
    %v3132 = vrcp.pop %v3104
    %v3133 = vrcp.pop %v3107
    %v3134 = vrcp.pop %v3110
    %v3135 = vrcp.pop %v3113
    %v3136 = vrcp.pop %v3116
    %v3137 = vrcp.pop %v3119
    %v3138 = vrcp.pop %v3122
    %v3139 = vmul.f32 %v3044, %v3123
    %v3140 = vmul.f32 %v3046, %v3124
    %v3141 = vmul.f32 %v3048, %v3125
    %v3142 = vmul.f32 %v3050, %v3126
    %v3143 = vmul.f32 %v3052, %v3127
    %v3144 = vmul.f32 %v3054, %v3128
    %v3145 = vmul.f32 %v3056, %v3129
    %v3146 = vmul.f32 %v3058, %v3130
    %v3147 = vmul.f32 %v3060, %v3131
    %v3148 = vmul.f32 %v3062, %v3132
    %v3149 = vmul.f32 %v3064, %v3133
    %v3150 = vmul.f32 %v3066, %v3134
    %v3151 = vmul.f32 %v3068, %v3135
    %v3152 = vmul.f32 %v3070, %v3136
    %v3153 = vmul.f32 %v3072, %v3137
    %v3154 = vmul.f32 %v3074, %v3138
    %v3155 = vpack.c.bf16 %v3140, %v3139
    %v3156 = vpack.c.bf16 %v3142, %v3141
    %v3157 = vpack.c.bf16 %v3144, %v3143
    %v3158 = vpack.c.bf16 %v3146, %v3145
    %v3159 = vpack.c.bf16 %v3148, %v3147
    %v3160 = vpack.c.bf16 %v3150, %v3149
    %v3161 = vpack.c.bf16 %v3152, %v3151
    %v3162 = vpack.c.bf16 %v3154, %v3153
    %3163 = vrot.lane.b32.xlu0 %v503, 64
    %v3164 = vpop.permute.xlu0 %3163
    %3165 = vrot.lane.b32.xlu0 %v504, 64
    %v3166 = vpop.permute.xlu0 %3165
    %3167 = vrot.lane.b32.xlu0 %v505, 64
    %v3168 = vpop.permute.xlu0 %3167
    %3169 = vrot.lane.b32.xlu0 %v506, 64
    %v3170 = vpop.permute.xlu0 %3169
    %v3176 = vsel %vm690, %v3155, 0
    %v3179 = vsel %vm690, %v3156, 0
    %v3182 = vsel %vm690, %v3157, 0
    %v3185 = vsel %vm690, %v3158, 0
    %3187 = vmatprep.subr.bf16.mxu0 0
    %3188 = vmatpush1.bf16.msra.mxu0 %v3164
    %3189 = vmatprep.subr.bf16.mxu0 0
    %3190 = vmatpush1.bf16.msra.mxu0 %v3166
    %3191 = vmatprep.subr.bf16.mxu0 0
    %3192 = vmatpush1.bf16.msra.mxu0 %v3168
    %3193 = vmatprep.subr.bf16.mxu0 0
    %3194 = vmatpush1.bf16.msra.mxu0 %v3170
    %3195 = vmatprep.subr.bf16.mxu0 0
    %3196 = vmatpush1.bf16.msra.mxu0 0
    %3197 = vmatprep.subr.bf16.mxu0 0
    %3198 = vmatpush1.bf16.msra.mxu0 0
    %3199 = vmatprep.subr.bf16.mxu0 0
    %3200 = vmatpush1.bf16.msra.mxu0 0
    %3201 = vmatprep.subr.bf16.mxu0 0
    %3202 = vmatpush1.bf16.msra.mxu0 0
    %3203 = vmatprep.subr.bf16.mxu0 0
    %3204 = vmatpush1.bf16.msra.mxu0 0
    %3205 = vmatprep.subr.bf16.mxu0 0
    %3206 = vmatpush1.bf16.msra.mxu0 0
    %3207 = vmatprep.subr.bf16.mxu0 0
    %3208 = vmatpush1.bf16.msra.mxu0 0
    %3209 = vmatprep.subr.bf16.mxu0 0
    %3210 = vmatpush1.bf16.msra.mxu0 0
    %3211 = vmatprep.subr.bf16.mxu0 0
    %3212 = vmatpush1.bf16.msra.mxu0 0
    %3213 = vmatprep.subr.bf16.mxu0 0
    %3214 = vmatpush1.bf16.msra.mxu0 0
    %3215 = vmatprep.subr.bf16.mxu0 0
    %3216 = vmatpush1.bf16.msra.mxu0 0
    %3217 = vmatprep.subr.bf16.mxu0 0
    %3218 = vmatpush1.bf16.msra.mxu0 0
    %3219 = vmatprep.mubr.bf16.mxu0 0
    %3220 = vmatmul.mubr.bf16.gmra.mrb[0].mxu0 %v3176
    %v3221 = vpop.f32.mrb[0].mxu0
    %v3222 = vadd.f32 0.0, %v3221
    %v3223 = vpop.f32.mrb[0].mxu0
    %v3224 = vpop.f32.mrb[0].mxu0
    %v3225 = vadd.f32 0.0, %v3224
    %v3226 = vpop.f32.mrb[0].mxu0
    %3227 = vmatprep.mubr.bf16.mxu0 0
    %3228 = vmatmul.mubr.bf16.gmra.mrb[0].mxu0 %v3179
    %v3229 = vpop.f32.mrb[0].mxu0
    %v3230 = vadd.f32 0.0, %v3229
    %v3231 = vpop.f32.mrb[0].mxu0
    %v3232 = vpop.f32.mrb[0].mxu0
    %v3233 = vadd.f32 0.0, %v3232
    %v3234 = vpop.f32.mrb[0].mxu0
    %3235 = vmatprep.mubr.bf16.mxu0 0
    %3236 = vmatmul.mubr.bf16.gmra.mrb[0].mxu0 %v3182
    %v3237 = vpop.f32.mrb[0].mxu0
    %v3238 = vadd.f32 0.0, %v3237
    %v3239 = vpop.f32.mrb[0].mxu0
    %v3240 = vpop.f32.mrb[0].mxu0
    %v3241 = vadd.f32 0.0, %v3240
    %v3242 = vpop.f32.mrb[0].mxu0
    %3243 = vmatprep.mubr.bf16.mxu0 0
    %3244 = vmatmul.mubr.bf16.gmra.mrb[0].mxu0 %v3185
    %v3245 = vpop.f32.mrb[0].mxu0
    %v3246 = vadd.f32 0.0, %v3245
    %v3247 = vpop.f32.mrb[0].mxu0
    %v3248 = vpop.f32.mrb[0].mxu0
    %v3249 = vadd.f32 0.0, %v3248
    %v3250 = vpop.f32.mrb[0].mxu0
    %3251 = vdwg.mxu0
    %3252 = vrot.lane.b32.xlu0 %v507, 64
    %v3253 = vpop.permute.xlu0 %3252
    %3254 = vrot.lane.b32.xlu0 %v508, 64
    %v3255 = vpop.permute.xlu0 %3254
    %3256 = vrot.lane.b32.xlu0 %v509, 64
    %v3257 = vpop.permute.xlu0 %3256
    %3258 = vrot.lane.b32.xlu0 %v510, 64
    %v3259 = vpop.permute.xlu0 %3258
    %v3265 = vsel %vm690, %v3159, 0
    %v3268 = vsel %vm690, %v3160, 0
    %v3271 = vsel %vm690, %v3161, 0
    %v3274 = vsel %vm690, %v3162, 0
    %3276 = vmatprep.subr.bf16.mxu0 0
    %3277 = vmatpush1.bf16.msra.mxu0 %v3253
    %3278 = vmatprep.subr.bf16.mxu0 0
    %3279 = vmatpush1.bf16.msra.mxu0 %v3255
    %3280 = vmatprep.subr.bf16.mxu0 0
    %3281 = vmatpush1.bf16.msra.mxu0 %v3257
    %3282 = vmatprep.subr.bf16.mxu0 0
    %3283 = vmatpush1.bf16.msra.mxu0 %v3259
    %3284 = vmatprep.subr.bf16.mxu0 0
    %3285 = vmatpush1.bf16.msra.mxu0 0
    %3286 = vmatprep.subr.bf16.mxu0 0
    %3287 = vmatpush1.bf16.msra.mxu0 0
    %3288 = vmatprep.subr.bf16.mxu0 0
    %3289 = vmatpush1.bf16.msra.mxu0 0
    %3290 = vmatprep.subr.bf16.mxu0 0
    %3291 = vmatpush1.bf16.msra.mxu0 0
    %3292 = vmatprep.subr.bf16.mxu0 0
    %3293 = vmatpush1.bf16.msra.mxu0 0
    %3294 = vmatprep.subr.bf16.mxu0 0
    %3295 = vmatpush1.bf16.msra.mxu0 0
    %3296 = vmatprep.subr.bf16.mxu0 0
    %3297 = vmatpush1.bf16.msra.mxu0 0
    %3298 = vmatprep.subr.bf16.mxu0 0
    %3299 = vmatpush1.bf16.msra.mxu0 0
    %3300 = vmatprep.subr.bf16.mxu0 0
    %3301 = vmatpush1.bf16.msra.mxu0 0
    %3302 = vmatprep.subr.bf16.mxu0 0
    %3303 = vmatpush1.bf16.msra.mxu0 0
    %3304 = vmatprep.subr.bf16.mxu0 0
    %3305 = vmatpush1.bf16.msra.mxu0 0
    %3306 = vmatprep.subr.bf16.mxu0 0
    %3307 = vmatpush1.bf16.msra.mxu0 0
    %3308 = vmatprep.mubr.bf16.mxu0 0
    %3309 = vmatmul.mubr.bf16.gmra.mrb[0].mxu0 %v3265
    %v3310 = vpop.f32.mrb[0].mxu0
    %v3311 = vadd.f32 0.0, %v3310
    %v3312 = vpop.f32.mrb[0].mxu0
    %v3313 = vpop.f32.mrb[0].mxu0
    %v3314 = vadd.f32 0.0, %v3313
    %v3315 = vpop.f32.mrb[0].mxu0
    %3316 = vmatprep.mubr.bf16.mxu0 0
    %3317 = vmatmul.mubr.bf16.gmra.mrb[0].mxu0 %v3268
    %v3318 = vpop.f32.mrb[0].mxu0
    %v3319 = vadd.f32 0.0, %v3318
    %v3320 = vpop.f32.mrb[0].mxu0
    %v3321 = vpop.f32.mrb[0].mxu0
    %v3322 = vadd.f32 0.0, %v3321
    %v3323 = vpop.f32.mrb[0].mxu0
    %3324 = vmatprep.mubr.bf16.mxu0 0
    %3325 = vmatmul.mubr.bf16.gmra.mrb[0].mxu0 %v3271
    %v3326 = vpop.f32.mrb[0].mxu0
    %v3327 = vadd.f32 0.0, %v3326
    %v3328 = vpop.f32.mrb[0].mxu0
    %v3329 = vpop.f32.mrb[0].mxu0
    %v3330 = vadd.f32 0.0, %v3329
    %v3331 = vpop.f32.mrb[0].mxu0
    %3332 = vmatprep.mubr.bf16.mxu0 0
    %3333 = vmatmul.mubr.bf16.gmra.mrb[0].mxu0 %v3274
    %v3334 = vpop.f32.mrb[0].mxu0
    %v3335 = vadd.f32 0.0, %v3334
    %v3336 = vpop.f32.mrb[0].mxu0
    %v3337 = vpop.f32.mrb[0].mxu0
    %v3338 = vadd.f32 0.0, %v3337
    %v3339 = vpop.f32.mrb[0].mxu0
    %3340 = vdwg.mxu0
    %3341 = vrot.lane.b32.xlu0 %v487, 48
    %v3342 = vpop.permute.xlu0 %3341
    %3343 = vrot.lane.b32.xlu0 %v488, 48
    %v3344 = vpop.permute.xlu0 %3343
    %3345 = vrot.lane.b32.xlu0 %v489, 48
    %v3346 = vpop.permute.xlu0 %3345
    %3347 = vrot.lane.b32.xlu0 %v490, 48
    %v3348 = vpop.permute.xlu0 %3347
    %3349 = vrot.lane.b32.xlu0 %v495, 48
    %v3350 = vpop.permute.xlu0 %3349
    %3351 = vrot.lane.b32.xlu0 %v496, 48
    %v3352 = vpop.permute.xlu0 %3351
    %3353 = vrot.lane.b32.xlu0 %v497, 48
    %v3354 = vpop.permute.xlu0 %3353
    %3355 = vrot.lane.b32.xlu0 %v498, 48
    %v3356 = vpop.permute.xlu0 %3355
    %v3358 = vsel %vm511, %v3342, 0
    %v3361 = vsel %vm511, %v3344, 0
    %v3364 = vsel %vm511, %v3346, 0
    %v3367 = vsel %vm511, %v3348, 0
    %v3370 = vsel %vm511, %v3350, 0
    %v3373 = vsel %vm511, %v3352, 0
    %v3376 = vsel %vm511, %v3354, 0
    %v3379 = vsel %vm511, %v3356, 0
    %3381 = vmatprep.subr.bf16.mxu0 0
    %3382 = vmatpush1.bf16.xpose.msra.mxu0 %v3370
    %3383 = vmatprep.subr.bf16.mxu0 0
    %3384 = vmatpush1.bf16.xpose.msra.mxu0 %v3373
    %3385 = vmatprep.subr.bf16.mxu0 0
    %3386 = vmatpush1.bf16.xpose.msra.mxu0 %v3376
    %3387 = vmatprep.subr.bf16.mxu0 0
    %3388 = vmatpush1.bf16.xpose.msra.mxu0 %v3379
    %3389 = vmatprep.subr.bf16.mxu0 0
    %3390 = vmatpush1.bf16.xpose.msra.mxu0 0
    %3391 = vmatprep.subr.bf16.mxu0 0
    %3392 = vmatpush1.bf16.xpose.msra.mxu0 0
    %3393 = vmatprep.subr.bf16.mxu0 0
    %3394 = vmatpush1.bf16.xpose.msra.mxu0 0
    %3395 = vmatprep.subr.bf16.mxu0 0
    %3396 = vmatpush1.bf16.xpose.msra.mxu0 0
    %3397 = vmatprep.subr.bf16.mxu0 0
    %3398 = vmatpush1.bf16.xpose.msra.mxu0 0
    %3399 = vmatprep.subr.bf16.mxu0 0
    %3400 = vmatpush1.bf16.xpose.msra.mxu0 0
    %3401 = vmatprep.subr.bf16.mxu0 0
    %3402 = vmatpush1.bf16.xpose.msra.mxu0 0
    %3403 = vmatprep.subr.bf16.mxu0 0
    %3404 = vmatpush1.bf16.xpose.msra.mxu0 0
    %3405 = vmatprep.subr.bf16.mxu0 0
    %3406 = vmatpush1.bf16.xpose.msra.mxu0 0
    %3407 = vmatprep.subr.bf16.mxu0 0
    %3408 = vmatpush1.bf16.xpose.msra.mxu0 0
    %3409 = vmatprep.subr.bf16.mxu0 0
    %3410 = vmatpush1.bf16.xpose.msra.mxu0 0
    %3411 = vmatprep.subr.bf16.mxu0 0
    %3412 = vmatpush1.bf16.xpose.msra.mxu0 0
    %3413 = vmatprep.mubr.bf16.mxu0 0
    %3414 = vmatmul.mubr.bf16.gmra.mrb[0].mxu0 %v3358
    %v3415 = vpop.f32.mrb[0].mxu0
    %v3416 = vadd.f32 0.0, %v3415
    %v3417 = vpop.f32.mrb[0].mxu0
    %v3418 = vpop.f32.mrb[0].mxu0
    %v3419 = vadd.f32 0.0, %v3418
    %v3420 = vpop.f32.mrb[0].mxu0
    %3421 = vmatprep.mubr.bf16.mxu0 0
    %3422 = vmatmul.mubr.bf16.gmra.mrb[0].mxu0 %v3361
    %v3423 = vpop.f32.mrb[0].mxu0
    %v3424 = vadd.f32 0.0, %v3423
    %v3425 = vpop.f32.mrb[0].mxu0
    %v3426 = vpop.f32.mrb[0].mxu0
    %v3427 = vadd.f32 0.0, %v3426
    %v3428 = vpop.f32.mrb[0].mxu0
    %3429 = vmatprep.mubr.bf16.mxu0 0
    %3430 = vmatmul.mubr.bf16.gmra.mrb[0].mxu0 %v3364
    %v3431 = vpop.f32.mrb[0].mxu0
    %v3432 = vadd.f32 0.0, %v3431
    %v3433 = vpop.f32.mrb[0].mxu0
    %v3434 = vpop.f32.mrb[0].mxu0
    %v3435 = vadd.f32 0.0, %v3434
    %v3436 = vpop.f32.mrb[0].mxu0
    %3437 = vmatprep.mubr.bf16.mxu0 0
    %3438 = vmatmul.mubr.bf16.gmra.mrb[0].mxu0 %v3367
    %v3439 = vpop.f32.mrb[0].mxu0
    %v3440 = vadd.f32 0.0, %v3439
    %v3441 = vpop.f32.mrb[0].mxu0
    %v3442 = vpop.f32.mrb[0].mxu0
    %v3443 = vadd.f32 0.0, %v3442
    %v3444 = vpop.f32.mrb[0].mxu0
    %3445 = vdwg.mxu0
    %3446 = vrot.lane.b32.xlu0 %v491, 48
    %v3447 = vpop.permute.xlu0 %3446
    %3448 = vrot.lane.b32.xlu0 %v492, 48
    %v3449 = vpop.permute.xlu0 %3448
    %3450 = vrot.lane.b32.xlu0 %v493, 48
    %v3451 = vpop.permute.xlu0 %3450
    %3452 = vrot.lane.b32.xlu0 %v494, 48
    %v3453 = vpop.permute.xlu0 %3452
    %3454 = vrot.lane.b32.xlu0 %v499, 48
    %v3455 = vpop.permute.xlu0 %3454
    %3456 = vrot.lane.b32.xlu0 %v500, 48
    %v3457 = vpop.permute.xlu0 %3456
    %3458 = vrot.lane.b32.xlu0 %v501, 48
    %v3459 = vpop.permute.xlu0 %3458
    %3460 = vrot.lane.b32.xlu0 %v502, 48
    %v3461 = vpop.permute.xlu0 %3460
    %v3463 = vsel %vm511, %v3447, 0
    %v3466 = vsel %vm511, %v3449, 0
    %v3469 = vsel %vm511, %v3451, 0
    %v3472 = vsel %vm511, %v3453, 0
    %v3475 = vsel %vm511, %v3455, 0
    %v3478 = vsel %vm511, %v3457, 0
    %v3481 = vsel %vm511, %v3459, 0
    %v3484 = vsel %vm511, %v3461, 0
    %3486 = vmatprep.subr.bf16.mxu0 0
    %3487 = vmatpush1.bf16.xpose.msra.mxu0 %v3475
    %3488 = vmatprep.subr.bf16.mxu0 0
    %3489 = vmatpush1.bf16.xpose.msra.mxu0 %v3478
    %3490 = vmatprep.subr.bf16.mxu0 0
    %3491 = vmatpush1.bf16.xpose.msra.mxu0 %v3481
    %3492 = vmatprep.subr.bf16.mxu0 0
    %3493 = vmatpush1.bf16.xpose.msra.mxu0 %v3484
    %3494 = vmatprep.subr.bf16.mxu0 0
    %3495 = vmatpush1.bf16.xpose.msra.mxu0 0
    %3496 = vmatprep.subr.bf16.mxu0 0
    %3497 = vmatpush1.bf16.xpose.msra.mxu0 0
    %3498 = vmatprep.subr.bf16.mxu0 0
    %3499 = vmatpush1.bf16.xpose.msra.mxu0 0
    %3500 = vmatprep.subr.bf16.mxu0 0
    %3501 = vmatpush1.bf16.xpose.msra.mxu0 0
    %3502 = vmatprep.subr.bf16.mxu0 0
    %3503 = vmatpush1.bf16.xpose.msra.mxu0 0
    %3504 = vmatprep.subr.bf16.mxu0 0
    %3505 = vmatpush1.bf16.xpose.msra.mxu0 0
    %3506 = vmatprep.subr.bf16.mxu0 0
    %3507 = vmatpush1.bf16.xpose.msra.mxu0 0
    %3508 = vmatprep.subr.bf16.mxu0 0
    %3509 = vmatpush1.bf16.xpose.msra.mxu0 0
    %3510 = vmatprep.subr.bf16.mxu0 0
    %3511 = vmatpush1.bf16.xpose.msra.mxu0 0
    %3512 = vmatprep.subr.bf16.mxu0 0
    %3513 = vmatpush1.bf16.xpose.msra.mxu0 0
    %3514 = vmatprep.subr.bf16.mxu0 0
    %3515 = vmatpush1.bf16.xpose.msra.mxu0 0
    %3516 = vmatprep.subr.bf16.mxu0 0
    %3517 = vmatpush1.bf16.xpose.msra.mxu0 0
    %3518 = vmatprep.mubr.bf16.mxu0 0
    %3519 = vmatmul.mubr.bf16.gmra.mrb[0].mxu0 %v3463
    %v3520 = vpop.f32.mrb[0].mxu0
    %v3521 = vadd.f32 0.0, %v3520
    %v3522 = vpop.f32.mrb[0].mxu0
    %v3523 = vpop.f32.mrb[0].mxu0
    %v3524 = vadd.f32 0.0, %v3523
    %v3525 = vpop.f32.mrb[0].mxu0
    %3526 = vmatprep.mubr.bf16.mxu0 0
    %3527 = vmatmul.mubr.bf16.gmra.mrb[0].mxu0 %v3466
    %v3528 = vpop.f32.mrb[0].mxu0
    %v3529 = vadd.f32 0.0, %v3528
    %v3530 = vpop.f32.mrb[0].mxu0
    %v3531 = vpop.f32.mrb[0].mxu0
    %v3532 = vadd.f32 0.0, %v3531
    %v3533 = vpop.f32.mrb[0].mxu0
    %3534 = vmatprep.mubr.bf16.mxu0 0
    %3535 = vmatmul.mubr.bf16.gmra.mrb[0].mxu0 %v3469
    %v3536 = vpop.f32.mrb[0].mxu0
    %v3537 = vadd.f32 0.0, %v3536
    %v3538 = vpop.f32.mrb[0].mxu0
    %v3539 = vpop.f32.mrb[0].mxu0
    %v3540 = vadd.f32 0.0, %v3539
    %v3541 = vpop.f32.mrb[0].mxu0
    %3542 = vmatprep.mubr.bf16.mxu0 0
    %3543 = vmatmul.mubr.bf16.gmra.mrb[0].mxu0 %v3472
    %v3544 = vpop.f32.mrb[0].mxu0
    %v3545 = vadd.f32 0.0, %v3544
    %v3546 = vpop.f32.mrb[0].mxu0
    %v3547 = vpop.f32.mrb[0].mxu0
    %v3548 = vadd.f32 0.0, %v3547
    %v3549 = vpop.f32.mrb[0].mxu0
    %3550 = vdwg.mxu0
    %v3551 = vsel %vm690, %v3416, -inf
    %3552 = vmax.xlane.f32.xlu0 %v3551
    %v3553 = vpop.xlane.xlu0 %3552
    %v3554 = vsel %vm690, %v3419, -inf
    %3555 = vmax.xlane.f32.xlu0 %v3554
    %v3556 = vpop.xlane.xlu0 %3555
    %v3557 = vsel %vm690, %v3424, -inf
    %3558 = vmax.xlane.f32.xlu0 %v3557
    %v3559 = vpop.xlane.xlu0 %3558
    %v3560 = vsel %vm690, %v3427, -inf
    %3561 = vmax.xlane.f32.xlu0 %v3560
    %v3562 = vpop.xlane.xlu0 %3561
    %v3563 = vsel %vm690, %v3432, -inf
    %3564 = vmax.xlane.f32.xlu0 %v3563
    %v3565 = vpop.xlane.xlu0 %3564
    %v3566 = vsel %vm690, %v3435, -inf
    %3567 = vmax.xlane.f32.xlu0 %v3566
    %v3568 = vpop.xlane.xlu0 %3567
    %v3569 = vsel %vm690, %v3440, -inf
    %3570 = vmax.xlane.f32.xlu0 %v3569
    %v3571 = vpop.xlane.xlu0 %3570
    %v3572 = vsel %vm690, %v3443, -inf
    %3573 = vmax.xlane.f32.xlu0 %v3572
    %v3574 = vpop.xlane.xlu0 %3573
    %v3575 = vsel %vm690, %v3521, -inf
    %3576 = vmax.xlane.f32.xlu0 %v3575
    %v3577 = vpop.xlane.xlu0 %3576
    %v3578 = vsel %vm690, %v3524, -inf
    %3579 = vmax.xlane.f32.xlu0 %v3578
    %v3580 = vpop.xlane.xlu0 %3579
    %v3581 = vsel %vm690, %v3529, -inf
    %3582 = vmax.xlane.f32.xlu0 %v3581
    %v3583 = vpop.xlane.xlu0 %3582
    %v3584 = vsel %vm690, %v3532, -inf
    %3585 = vmax.xlane.f32.xlu0 %v3584
    %v3586 = vpop.xlane.xlu0 %3585
    %v3587 = vsel %vm690, %v3537, -inf
    %3588 = vmax.xlane.f32.xlu0 %v3587
    %v3589 = vpop.xlane.xlu0 %3588
    %v3590 = vsel %vm690, %v3540, -inf
    %3591 = vmax.xlane.f32.xlu0 %v3590
    %v3592 = vpop.xlane.xlu0 %3591
    %v3593 = vsel %vm690, %v3545, -inf
    %3594 = vmax.xlane.f32.xlu0 %v3593
    %v3595 = vpop.xlane.xlu0 %3594
    %v3596 = vsel %vm690, %v3548, -inf
    %3597 = vmax.xlane.f32.xlu0 %v3596
    %v3598 = vpop.xlane.xlu0 %3597
    %v3599 = vsub.f32 %v3416, %v3553
    %v3600 = vsub.f32 %v3419, %v3556
    %v3601 = vsub.f32 %v3424, %v3559
    %v3602 = vsub.f32 %v3427, %v3562
    %v3603 = vsub.f32 %v3432, %v3565
    %v3604 = vsub.f32 %v3435, %v3568
    %v3605 = vsub.f32 %v3440, %v3571
    %v3606 = vsub.f32 %v3443, %v3574
    %v3607 = vsub.f32 %v3521, %v3577
    %v3608 = vsub.f32 %v3524, %v3580
    %v3609 = vsub.f32 %v3529, %v3583
    %v3610 = vsub.f32 %v3532, %v3586
    %v3611 = vsub.f32 %v3537, %v3589
    %v3612 = vsub.f32 %v3540, %v3592
    %v3613 = vsub.f32 %v3545, %v3595
    %v3614 = vsub.f32 %v3548, %v3598
    %v3615 = vmul.f32 %v3599, 1.442695
    %v3616 = vpow.pop %v3615
    %v3617 = vmul.f32 %v3600, 1.442695
    %v3618 = vpow.pop %v3617
    %v3619 = vmul.f32 %v3601, 1.442695
    %v3620 = vpow.pop %v3619
    %v3621 = vmul.f32 %v3602, 1.442695
    %v3622 = vpow.pop %v3621
    %v3623 = vmul.f32 %v3603, 1.442695
    %v3624 = vpow.pop %v3623
    %v3625 = vmul.f32 %v3604, 1.442695
    %v3626 = vpow.pop %v3625
    %v3627 = vmul.f32 %v3605, 1.442695
    %v3628 = vpow.pop %v3627
    %v3629 = vmul.f32 %v3606, 1.442695
    %v3630 = vpow.pop %v3629
    %v3631 = vmul.f32 %v3607, 1.442695
    %v3632 = vpow.pop %v3631
    %v3633 = vmul.f32 %v3608, 1.442695
    %v3634 = vpow.pop %v3633
    %v3635 = vmul.f32 %v3609, 1.442695
    %v3636 = vpow.pop %v3635
    %v3637 = vmul.f32 %v3610, 1.442695
    %v3638 = vpow.pop %v3637
    %v3639 = vmul.f32 %v3611, 1.442695
    %v3640 = vpow.pop %v3639
    %v3641 = vmul.f32 %v3612, 1.442695
    %v3642 = vpow.pop %v3641
    %v3643 = vmul.f32 %v3613, 1.442695
    %v3644 = vpow.pop %v3643
    %v3645 = vmul.f32 %v3614, 1.442695
    %v3646 = vpow.pop %v3645
    %v3647 = vsel %vm690, %v3616, 0.0
    %3648 = vadd.xlane.f32.xlu0 %v3647
    %v3649 = vpop.xlane.xlu0 %3648
    %v3650 = vsel %vm690, %v3618, 0.0
    %3651 = vadd.xlane.f32.xlu0 %v3650
    %v3652 = vpop.xlane.xlu0 %3651
    %v3653 = vsel %vm690, %v3620, 0.0
    %3654 = vadd.xlane.f32.xlu0 %v3653
    %v3655 = vpop.xlane.xlu0 %3654
    %v3656 = vsel %vm690, %v3622, 0.0
    %3657 = vadd.xlane.f32.xlu0 %v3656
    %v3658 = vpop.xlane.xlu0 %3657
    %v3659 = vsel %vm690, %v3624, 0.0
    %3660 = vadd.xlane.f32.xlu0 %v3659
    %v3661 = vpop.xlane.xlu0 %3660
    %v3662 = vsel %vm690, %v3626, 0.0
    %3663 = vadd.xlane.f32.xlu0 %v3662
    %v3664 = vpop.xlane.xlu0 %3663
    %v3665 = vsel %vm690, %v3628, 0.0
    %3666 = vadd.xlane.f32.xlu0 %v3665
    %v3667 = vpop.xlane.xlu0 %3666
    %v3668 = vsel %vm690, %v3630, 0.0
    %3669 = vadd.xlane.f32.xlu0 %v3668
    %v3670 = vpop.xlane.xlu0 %3669
    %v3671 = vsel %vm690, %v3632, 0.0
    %3672 = vadd.xlane.f32.xlu0 %v3671
    %v3673 = vpop.xlane.xlu0 %3672
    %v3674 = vsel %vm690, %v3634, 0.0
    %3675 = vadd.xlane.f32.xlu0 %v3674
    %v3676 = vpop.xlane.xlu0 %3675
    %v3677 = vsel %vm690, %v3636, 0.0
    %3678 = vadd.xlane.f32.xlu0 %v3677
    %v3679 = vpop.xlane.xlu0 %3678
    %v3680 = vsel %vm690, %v3638, 0.0
    %3681 = vadd.xlane.f32.xlu0 %v3680
    %v3682 = vpop.xlane.xlu0 %3681
    %v3683 = vsel %vm690, %v3640, 0.0
    %3684 = vadd.xlane.f32.xlu0 %v3683
    %v3685 = vpop.xlane.xlu0 %3684
    %v3686 = vsel %vm690, %v3642, 0.0
    %3687 = vadd.xlane.f32.xlu0 %v3686
    %v3688 = vpop.xlane.xlu0 %3687
    %v3689 = vsel %vm690, %v3644, 0.0
    %3690 = vadd.xlane.f32.xlu0 %v3689
    %v3691 = vpop.xlane.xlu0 %3690
    %v3692 = vsel %vm690, %v3646, 0.0
    %3693 = vadd.xlane.f32.xlu0 %v3692
    %v3694 = vpop.xlane.xlu0 %3693
    %v3695 = vrcp.pop %v3649
    %v3696 = vrcp.pop %v3652
    %v3697 = vrcp.pop %v3655
    %v3698 = vrcp.pop %v3658
    %v3699 = vrcp.pop %v3661
    %v3700 = vrcp.pop %v3664
    %v3701 = vrcp.pop %v3667
    %v3702 = vrcp.pop %v3670
    %v3703 = vrcp.pop %v3673
    %v3704 = vrcp.pop %v3676
    %v3705 = vrcp.pop %v3679
    %v3706 = vrcp.pop %v3682
    %v3707 = vrcp.pop %v3685
    %v3708 = vrcp.pop %v3688
    %v3709 = vrcp.pop %v3691
    %v3710 = vrcp.pop %v3694
    %v3711 = vmul.f32 %v3616, %v3695
    %v3712 = vmul.f32 %v3618, %v3696
    %v3713 = vmul.f32 %v3620, %v3697
    %v3714 = vmul.f32 %v3622, %v3698
    %v3715 = vmul.f32 %v3624, %v3699
    %v3716 = vmul.f32 %v3626, %v3700
    %v3717 = vmul.f32 %v3628, %v3701
    %v3718 = vmul.f32 %v3630, %v3702
    %v3719 = vmul.f32 %v3632, %v3703
    %v3720 = vmul.f32 %v3634, %v3704
    %v3721 = vmul.f32 %v3636, %v3705
    %v3722 = vmul.f32 %v3638, %v3706
    %v3723 = vmul.f32 %v3640, %v3707
    %v3724 = vmul.f32 %v3642, %v3708
    %v3725 = vmul.f32 %v3644, %v3709
    %v3726 = vmul.f32 %v3646, %v3710
    %v3727 = vpack.c.bf16 %v3712, %v3711
    %v3728 = vpack.c.bf16 %v3714, %v3713
    %v3729 = vpack.c.bf16 %v3716, %v3715
    %v3730 = vpack.c.bf16 %v3718, %v3717
    %v3731 = vpack.c.bf16 %v3720, %v3719
    %v3732 = vpack.c.bf16 %v3722, %v3721
    %v3733 = vpack.c.bf16 %v3724, %v3723
    %v3734 = vpack.c.bf16 %v3726, %v3725
    %3735 = vrot.lane.b32.xlu0 %v503, 48
    %v3736 = vpop.permute.xlu0 %3735
    %3737 = vrot.lane.b32.xlu0 %v504, 48
    %v3738 = vpop.permute.xlu0 %3737
    %3739 = vrot.lane.b32.xlu0 %v505, 48
    %v3740 = vpop.permute.xlu0 %3739
    %3741 = vrot.lane.b32.xlu0 %v506, 48
    %v3742 = vpop.permute.xlu0 %3741
    %v3748 = vsel %vm690, %v3727, 0
    %v3751 = vsel %vm690, %v3728, 0
    %v3754 = vsel %vm690, %v3729, 0
    %v3757 = vsel %vm690, %v3730, 0
    %3759 = vmatprep.subr.bf16.mxu0 0
    %3760 = vmatpush1.bf16.msra.mxu0 %v3736
    %3761 = vmatprep.subr.bf16.mxu0 0
    %3762 = vmatpush1.bf16.msra.mxu0 %v3738
    %3763 = vmatprep.subr.bf16.mxu0 0
    %3764 = vmatpush1.bf16.msra.mxu0 %v3740
    %3765 = vmatprep.subr.bf16.mxu0 0
    %3766 = vmatpush1.bf16.msra.mxu0 %v3742
    %3767 = vmatprep.subr.bf16.mxu0 0
    %3768 = vmatpush1.bf16.msra.mxu0 0
    %3769 = vmatprep.subr.bf16.mxu0 0
    %3770 = vmatpush1.bf16.msra.mxu0 0
    %3771 = vmatprep.subr.bf16.mxu0 0
    %3772 = vmatpush1.bf16.msra.mxu0 0
    %3773 = vmatprep.subr.bf16.mxu0 0
    %3774 = vmatpush1.bf16.msra.mxu0 0
    %3775 = vmatprep.subr.bf16.mxu0 0
    %3776 = vmatpush1.bf16.msra.mxu0 0
    %3777 = vmatprep.subr.bf16.mxu0 0
    %3778 = vmatpush1.bf16.msra.mxu0 0
    %3779 = vmatprep.subr.bf16.mxu0 0
    %3780 = vmatpush1.bf16.msra.mxu0 0
    %3781 = vmatprep.subr.bf16.mxu0 0
    %3782 = vmatpush1.bf16.msra.mxu0 0
    %3783 = vmatprep.subr.bf16.mxu0 0
    %3784 = vmatpush1.bf16.msra.mxu0 0
    %3785 = vmatprep.subr.bf16.mxu0 0
    %3786 = vmatpush1.bf16.msra.mxu0 0
    %3787 = vmatprep.subr.bf16.mxu0 0
    %3788 = vmatpush1.bf16.msra.mxu0 0
    %3789 = vmatprep.subr.bf16.mxu0 0
    %3790 = vmatpush1.bf16.msra.mxu0 0
    %3791 = vmatprep.mubr.bf16.mxu0 0
    %3792 = vmatmul.mubr.bf16.gmra.mrb[0].mxu0 %v3748
    %v3793 = vpop.f32.mrb[0].mxu0
    %v3794 = vadd.f32 0.0, %v3793
    %v3795 = vpop.f32.mrb[0].mxu0
    %v3796 = vpop.f32.mrb[0].mxu0
    %v3797 = vadd.f32 0.0, %v3796
    %v3798 = vpop.f32.mrb[0].mxu0
    %3799 = vmatprep.mubr.bf16.mxu0 0
    %3800 = vmatmul.mubr.bf16.gmra.mrb[0].mxu0 %v3751
    %v3801 = vpop.f32.mrb[0].mxu0
    %v3802 = vadd.f32 0.0, %v3801
    %v3803 = vpop.f32.mrb[0].mxu0
    %v3804 = vpop.f32.mrb[0].mxu0
    %v3805 = vadd.f32 0.0, %v3804
    %v3806 = vpop.f32.mrb[0].mxu0
    %3807 = vmatprep.mubr.bf16.mxu0 0
    %3808 = vmatmul.mubr.bf16.gmra.mrb[0].mxu0 %v3754
    %v3809 = vpop.f32.mrb[0].mxu0
    %v3810 = vadd.f32 0.0, %v3809
    %v3811 = vpop.f32.mrb[0].mxu0
    %v3812 = vpop.f32.mrb[0].mxu0
    %v3813 = vadd.f32 0.0, %v3812
    %v3814 = vpop.f32.mrb[0].mxu0
    %3815 = vmatprep.mubr.bf16.mxu0 0
    %3816 = vmatmul.mubr.bf16.gmra.mrb[0].mxu0 %v3757
    %v3817 = vpop.f32.mrb[0].mxu0
    %v3818 = vadd.f32 0.0, %v3817
    %v3819 = vpop.f32.mrb[0].mxu0
    %v3820 = vpop.f32.mrb[0].mxu0
    %v3821 = vadd.f32 0.0, %v3820
    %v3822 = vpop.f32.mrb[0].mxu0
    %3823 = vdwg.mxu0
    %3824 = vrot.lane.b32.xlu0 %v507, 48
    %v3825 = vpop.permute.xlu0 %3824
    %3826 = vrot.lane.b32.xlu0 %v508, 48
    %v3827 = vpop.permute.xlu0 %3826
    %3828 = vrot.lane.b32.xlu0 %v509, 48
    %v3829 = vpop.permute.xlu0 %3828
    %3830 = vrot.lane.b32.xlu0 %v510, 48
    %v3831 = vpop.permute.xlu0 %3830
    %v3837 = vsel %vm690, %v3731, 0
    %v3840 = vsel %vm690, %v3732, 0
    %v3843 = vsel %vm690, %v3733, 0
    %v3846 = vsel %vm690, %v3734, 0
    %3848 = vmatprep.subr.bf16.mxu0 0
    %3849 = vmatpush1.bf16.msra.mxu0 %v3825
    %3850 = vmatprep.subr.bf16.mxu0 0
    %3851 = vmatpush1.bf16.msra.mxu0 %v3827
    %3852 = vmatprep.subr.bf16.mxu0 0
    %3853 = vmatpush1.bf16.msra.mxu0 %v3829
    %3854 = vmatprep.subr.bf16.mxu0 0
    %3855 = vmatpush1.bf16.msra.mxu0 %v3831
    %3856 = vmatprep.subr.bf16.mxu0 0
    %3857 = vmatpush1.bf16.msra.mxu0 0
    %3858 = vmatprep.subr.bf16.mxu0 0
    %3859 = vmatpush1.bf16.msra.mxu0 0
    %3860 = vmatprep.subr.bf16.mxu0 0
    %3861 = vmatpush1.bf16.msra.mxu0 0
    %3862 = vmatprep.subr.bf16.mxu0 0
    %3863 = vmatpush1.bf16.msra.mxu0 0
    %3864 = vmatprep.subr.bf16.mxu0 0
    %3865 = vmatpush1.bf16.msra.mxu0 0
    %3866 = vmatprep.subr.bf16.mxu0 0
    %3867 = vmatpush1.bf16.msra.mxu0 0
    %3868 = vmatprep.subr.bf16.mxu0 0
    %3869 = vmatpush1.bf16.msra.mxu0 0
    %3870 = vmatprep.subr.bf16.mxu0 0
    %3871 = vmatpush1.bf16.msra.mxu0 0
    %3872 = vmatprep.subr.bf16.mxu0 0
    %3873 = vmatpush1.bf16.msra.mxu0 0
    %3874 = vmatprep.subr.bf16.mxu0 0
    %3875 = vmatpush1.bf16.msra.mxu0 0
    %3876 = vmatprep.subr.bf16.mxu0 0
    %3877 = vmatpush1.bf16.msra.mxu0 0
    %3878 = vmatprep.subr.bf16.mxu0 0
    %3879 = vmatpush1.bf16.msra.mxu0 0
    %3880 = vmatprep.mubr.bf16.mxu0 0
    %3881 = vmatmul.mubr.bf16.gmra.mrb[0].mxu0 %v3837
    %v3882 = vpop.f32.mrb[0].mxu0
    %v3883 = vadd.f32 0.0, %v3882
    %v3884 = vpop.f32.mrb[0].mxu0
    %v3885 = vpop.f32.mrb[0].mxu0
    %v3886 = vadd.f32 0.0, %v3885
    %v3887 = vpop.f32.mrb[0].mxu0
    %3888 = vmatprep.mubr.bf16.mxu0 0
    %3889 = vmatmul.mubr.bf16.gmra.mrb[0].mxu0 %v3840
    %v3890 = vpop.f32.mrb[0].mxu0
    %v3891 = vadd.f32 0.0, %v3890
    %v3892 = vpop.f32.mrb[0].mxu0
    %v3893 = vpop.f32.mrb[0].mxu0
    %v3894 = vadd.f32 0.0, %v3893
    %v3895 = vpop.f32.mrb[0].mxu0
    %3896 = vmatprep.mubr.bf16.mxu0 0
    %3897 = vmatmul.mubr.bf16.gmra.mrb[0].mxu0 %v3843
    %v3898 = vpop.f32.mrb[0].mxu0
    %v3899 = vadd.f32 0.0, %v3898
    %v3900 = vpop.f32.mrb[0].mxu0
    %v3901 = vpop.f32.mrb[0].mxu0
    %v3902 = vadd.f32 0.0, %v3901
    %v3903 = vpop.f32.mrb[0].mxu0
    %3904 = vmatprep.mubr.bf16.mxu0 0
    %3905 = vmatmul.mubr.bf16.gmra.mrb[0].mxu0 %v3846
    %v3906 = vpop.f32.mrb[0].mxu0
    %v3907 = vadd.f32 0.0, %v3906
    %v3908 = vpop.f32.mrb[0].mxu0
    %v3909 = vpop.f32.mrb[0].mxu0
    %v3910 = vadd.f32 0.0, %v3909
    %v3911 = vpop.f32.mrb[0].mxu0
    %3912 = vdwg.mxu0
    %3913 = vrot.lane.b32.xlu0 %v487, 32
    %v3914 = vpop.permute.xlu0 %3913
    %3915 = vrot.lane.b32.xlu0 %v488, 32
    %v3916 = vpop.permute.xlu0 %3915
    %3917 = vrot.lane.b32.xlu0 %v489, 32
    %v3918 = vpop.permute.xlu0 %3917
    %3919 = vrot.lane.b32.xlu0 %v490, 32
    %v3920 = vpop.permute.xlu0 %3919
    %3921 = vrot.lane.b32.xlu0 %v495, 32
    %v3922 = vpop.permute.xlu0 %3921
    %3923 = vrot.lane.b32.xlu0 %v496, 32
    %v3924 = vpop.permute.xlu0 %3923
    %3925 = vrot.lane.b32.xlu0 %v497, 32
    %v3926 = vpop.permute.xlu0 %3925
    %3927 = vrot.lane.b32.xlu0 %v498, 32
    %v3928 = vpop.permute.xlu0 %3927
    %v3930 = vsel %vm511, %v3914, 0
    %v3933 = vsel %vm511, %v3916, 0
    %v3936 = vsel %vm511, %v3918, 0
    %v3939 = vsel %vm511, %v3920, 0
    %v3942 = vsel %vm511, %v3922, 0
    %v3945 = vsel %vm511, %v3924, 0
    %v3948 = vsel %vm511, %v3926, 0
    %v3951 = vsel %vm511, %v3928, 0
    %3953 = vmatprep.subr.bf16.mxu0 0
    %3954 = vmatpush1.bf16.xpose.msra.mxu0 %v3942
    %3955 = vmatprep.subr.bf16.mxu0 0
    %3956 = vmatpush1.bf16.xpose.msra.mxu0 %v3945
    %3957 = vmatprep.subr.bf16.mxu0 0
    %3958 = vmatpush1.bf16.xpose.msra.mxu0 %v3948
    %3959 = vmatprep.subr.bf16.mxu0 0
    %3960 = vmatpush1.bf16.xpose.msra.mxu0 %v3951
    %3961 = vmatprep.subr.bf16.mxu0 0
    %3962 = vmatpush1.bf16.xpose.msra.mxu0 0
    %3963 = vmatprep.subr.bf16.mxu0 0
    %3964 = vmatpush1.bf16.xpose.msra.mxu0 0
    %3965 = vmatprep.subr.bf16.mxu0 0
    %3966 = vmatpush1.bf16.xpose.msra.mxu0 0
    %3967 = vmatprep.subr.bf16.mxu0 0
    %3968 = vmatpush1.bf16.xpose.msra.mxu0 0
    %3969 = vmatprep.subr.bf16.mxu0 0
    %3970 = vmatpush1.bf16.xpose.msra.mxu0 0
    %3971 = vmatprep.subr.bf16.mxu0 0
    %3972 = vmatpush1.bf16.xpose.msra.mxu0 0
    %3973 = vmatprep.subr.bf16.mxu0 0
    %3974 = vmatpush1.bf16.xpose.msra.mxu0 0
    %3975 = vmatprep.subr.bf16.mxu0 0
    %3976 = vmatpush1.bf16.xpose.msra.mxu0 0
    %3977 = vmatprep.subr.bf16.mxu0 0
    %3978 = vmatpush1.bf16.xpose.msra.mxu0 0
    %3979 = vmatprep.subr.bf16.mxu0 0
    %3980 = vmatpush1.bf16.xpose.msra.mxu0 0
    %3981 = vmatprep.subr.bf16.mxu0 0
    %3982 = vmatpush1.bf16.xpose.msra.mxu0 0
    %3983 = vmatprep.subr.bf16.mxu0 0
    %3984 = vmatpush1.bf16.xpose.msra.mxu0 0
    %3985 = vmatprep.mubr.bf16.mxu0 0
    %3986 = vmatmul.mubr.bf16.gmra.mrb[0].mxu0 %v3930
    %v3987 = vpop.f32.mrb[0].mxu0
    %v3988 = vadd.f32 0.0, %v3987
    %v3989 = vpop.f32.mrb[0].mxu0
    %v3990 = vpop.f32.mrb[0].mxu0
    %v3991 = vadd.f32 0.0, %v3990
    %v3992 = vpop.f32.mrb[0].mxu0
    %3993 = vmatprep.mubr.bf16.mxu0 0
    %3994 = vmatmul.mubr.bf16.gmra.mrb[0].mxu0 %v3933
    %v3995 = vpop.f32.mrb[0].mxu0
    %v3996 = vadd.f32 0.0, %v3995
    %v3997 = vpop.f32.mrb[0].mxu0
    %v3998 = vpop.f32.mrb[0].mxu0
    %v3999 = vadd.f32 0.0, %v3998
    %v4000 = vpop.f32.mrb[0].mxu0
    %4001 = vmatprep.mubr.bf16.mxu0 0
    %4002 = vmatmul.mubr.bf16.gmra.mrb[0].mxu0 %v3936
    %v4003 = vpop.f32.mrb[0].mxu0
    %v4004 = vadd.f32 0.0, %v4003
    %v4005 = vpop.f32.mrb[0].mxu0
    %v4006 = vpop.f32.mrb[0].mxu0
    %v4007 = vadd.f32 0.0, %v4006
    %v4008 = vpop.f32.mrb[0].mxu0
    %4009 = vmatprep.mubr.bf16.mxu0 0
    %4010 = vmatmul.mubr.bf16.gmra.mrb[0].mxu0 %v3939
    %v4011 = vpop.f32.mrb[0].mxu0
    %v4012 = vadd.f32 0.0, %v4011
    %v4013 = vpop.f32.mrb[0].mxu0
    %v4014 = vpop.f32.mrb[0].mxu0
    %v4015 = vadd.f32 0.0, %v4014
    %v4016 = vpop.f32.mrb[0].mxu0
    %4017 = vdwg.mxu0
    %4018 = vrot.lane.b32.xlu0 %v491, 32
    %v4019 = vpop.permute.xlu0 %4018
    %4020 = vrot.lane.b32.xlu0 %v492, 32
    %v4021 = vpop.permute.xlu0 %4020
    %4022 = vrot.lane.b32.xlu0 %v493, 32
    %v4023 = vpop.permute.xlu0 %4022
    %4024 = vrot.lane.b32.xlu0 %v494, 32
    %v4025 = vpop.permute.xlu0 %4024
    %4026 = vrot.lane.b32.xlu0 %v499, 32
    %v4027 = vpop.permute.xlu0 %4026
    %4028 = vrot.lane.b32.xlu0 %v500, 32
    %v4029 = vpop.permute.xlu0 %4028
    %4030 = vrot.lane.b32.xlu0 %v501, 32
    %v4031 = vpop.permute.xlu0 %4030
    %4032 = vrot.lane.b32.xlu0 %v502, 32
    %v4033 = vpop.permute.xlu0 %4032
    %v4035 = vsel %vm511, %v4019, 0
    %v4038 = vsel %vm511, %v4021, 0
    %v4041 = vsel %vm511, %v4023, 0
    %v4044 = vsel %vm511, %v4025, 0
    %v4047 = vsel %vm511, %v4027, 0
    %v4050 = vsel %vm511, %v4029, 0
    %v4053 = vsel %vm511, %v4031, 0
    %v4056 = vsel %vm511, %v4033, 0
    %4058 = vmatprep.subr.bf16.mxu0 0
    %4059 = vmatpush1.bf16.xpose.msra.mxu0 %v4047
    %4060 = vmatprep.subr.bf16.mxu0 0
    %4061 = vmatpush1.bf16.xpose.msra.mxu0 %v4050
    %4062 = vmatprep.subr.bf16.mxu0 0
    %4063 = vmatpush1.bf16.xpose.msra.mxu0 %v4053
    %4064 = vmatprep.subr.bf16.mxu0 0
    %4065 = vmatpush1.bf16.xpose.msra.mxu0 %v4056
    %4066 = vmatprep.subr.bf16.mxu0 0
    %4067 = vmatpush1.bf16.xpose.msra.mxu0 0
    %4068 = vmatprep.subr.bf16.mxu0 0
    %4069 = vmatpush1.bf16.xpose.msra.mxu0 0
    %4070 = vmatprep.subr.bf16.mxu0 0
    %4071 = vmatpush1.bf16.xpose.msra.mxu0 0
    %4072 = vmatprep.subr.bf16.mxu0 0
    %4073 = vmatpush1.bf16.xpose.msra.mxu0 0
    %4074 = vmatprep.subr.bf16.mxu0 0
    %4075 = vmatpush1.bf16.xpose.msra.mxu0 0
    %4076 = vmatprep.subr.bf16.mxu0 0
    %4077 = vmatpush1.bf16.xpose.msra.mxu0 0
    %4078 = vmatprep.subr.bf16.mxu0 0
    %4079 = vmatpush1.bf16.xpose.msra.mxu0 0
    %4080 = vmatprep.subr.bf16.mxu0 0
    %4081 = vmatpush1.bf16.xpose.msra.mxu0 0
    %4082 = vmatprep.subr.bf16.mxu0 0
    %4083 = vmatpush1.bf16.xpose.msra.mxu0 0
    %4084 = vmatprep.subr.bf16.mxu0 0
    %4085 = vmatpush1.bf16.xpose.msra.mxu0 0
    %4086 = vmatprep.subr.bf16.mxu0 0
    %4087 = vmatpush1.bf16.xpose.msra.mxu0 0
    %4088 = vmatprep.subr.bf16.mxu0 0
    %4089 = vmatpush1.bf16.xpose.msra.mxu0 0
    %4090 = vmatprep.mubr.bf16.mxu0 0
    %4091 = vmatmul.mubr.bf16.gmra.mrb[0].mxu0 %v4035
    %v4092 = vpop.f32.mrb[0].mxu0
    %v4093 = vadd.f32 0.0, %v4092
    %v4094 = vpop.f32.mrb[0].mxu0
    %v4095 = vpop.f32.mrb[0].mxu0
    %v4096 = vadd.f32 0.0, %v4095
    %v4097 = vpop.f32.mrb[0].mxu0
    %4098 = vmatprep.mubr.bf16.mxu0 0
    %4099 = vmatmul.mubr.bf16.gmra.mrb[0].mxu0 %v4038
    %v4100 = vpop.f32.mrb[0].mxu0
    %v4101 = vadd.f32 0.0, %v4100
    %v4102 = vpop.f32.mrb[0].mxu0
    %v4103 = vpop.f32.mrb[0].mxu0
    %v4104 = vadd.f32 0.0, %v4103
    %v4105 = vpop.f32.mrb[0].mxu0
    %4106 = vmatprep.mubr.bf16.mxu0 0
    %4107 = vmatmul.mubr.bf16.gmra.mrb[0].mxu0 %v4041
    %v4108 = vpop.f32.mrb[0].mxu0
    %v4109 = vadd.f32 0.0, %v4108
    %v4110 = vpop.f32.mrb[0].mxu0
    %v4111 = vpop.f32.mrb[0].mxu0
    %v4112 = vadd.f32 0.0, %v4111
    %v4113 = vpop.f32.mrb[0].mxu0
    %4114 = vmatprep.mubr.bf16.mxu0 0
    %4115 = vmatmul.mubr.bf16.gmra.mrb[0].mxu0 %v4044
    %v4116 = vpop.f32.mrb[0].mxu0
    %v4117 = vadd.f32 0.0, %v4116
    %v4118 = vpop.f32.mrb[0].mxu0
    %v4119 = vpop.f32.mrb[0].mxu0
    %v4120 = vadd.f32 0.0, %v4119
    %v4121 = vpop.f32.mrb[0].mxu0
    %4122 = vdwg.mxu0
    %v4123 = vsel %vm690, %v3988, -inf
    %4124 = vmax.xlane.f32.xlu0 %v4123
    %v4125 = vpop.xlane.xlu0 %4124
    %v4126 = vsel %vm690, %v3991, -inf
    %4127 = vmax.xlane.f32.xlu0 %v4126
    %v4128 = vpop.xlane.xlu0 %4127
    %v4129 = vsel %vm690, %v3996, -inf
    %4130 = vmax.xlane.f32.xlu0 %v4129
    %v4131 = vpop.xlane.xlu0 %4130
    %v4132 = vsel %vm690, %v3999, -inf
    %4133 = vmax.xlane.f32.xlu0 %v4132
    %v4134 = vpop.xlane.xlu0 %4133
    %v4135 = vsel %vm690, %v4004, -inf
    %4136 = vmax.xlane.f32.xlu0 %v4135
    %v4137 = vpop.xlane.xlu0 %4136
    %v4138 = vsel %vm690, %v4007, -inf
    %4139 = vmax.xlane.f32.xlu0 %v4138
    %v4140 = vpop.xlane.xlu0 %4139
    %v4141 = vsel %vm690, %v4012, -inf
    %4142 = vmax.xlane.f32.xlu0 %v4141
    %v4143 = vpop.xlane.xlu0 %4142
    %v4144 = vsel %vm690, %v4015, -inf
    %4145 = vmax.xlane.f32.xlu0 %v4144
    %v4146 = vpop.xlane.xlu0 %4145
    %v4147 = vsel %vm690, %v4093, -inf
    %4148 = vmax.xlane.f32.xlu0 %v4147
    %v4149 = vpop.xlane.xlu0 %4148
    %v4150 = vsel %vm690, %v4096, -inf
    %4151 = vmax.xlane.f32.xlu0 %v4150
    %v4152 = vpop.xlane.xlu0 %4151
    %v4153 = vsel %vm690, %v4101, -inf
    %4154 = vmax.xlane.f32.xlu0 %v4153
    %v4155 = vpop.xlane.xlu0 %4154
    %v4156 = vsel %vm690, %v4104, -inf
    %4157 = vmax.xlane.f32.xlu0 %v4156
    %v4158 = vpop.xlane.xlu0 %4157
    %v4159 = vsel %vm690, %v4109, -inf
    %4160 = vmax.xlane.f32.xlu0 %v4159
    %v4161 = vpop.xlane.xlu0 %4160
    %v4162 = vsel %vm690, %v4112, -inf
    %4163 = vmax.xlane.f32.xlu0 %v4162
    %v4164 = vpop.xlane.xlu0 %4163
    %v4165 = vsel %vm690, %v4117, -inf
    %4166 = vmax.xlane.f32.xlu0 %v4165
    %v4167 = vpop.xlane.xlu0 %4166
    %v4168 = vsel %vm690, %v4120, -inf
    %4169 = vmax.xlane.f32.xlu0 %v4168
    %v4170 = vpop.xlane.xlu0 %4169
    %v4171 = vsub.f32 %v3988, %v4125
    %v4172 = vsub.f32 %v3991, %v4128
    %v4173 = vsub.f32 %v3996, %v4131
    %v4174 = vsub.f32 %v3999, %v4134
    %v4175 = vsub.f32 %v4004, %v4137
    %v4176 = vsub.f32 %v4007, %v4140
    %v4177 = vsub.f32 %v4012, %v4143
    %v4178 = vsub.f32 %v4015, %v4146
    %v4179 = vsub.f32 %v4093, %v4149
    %v4180 = vsub.f32 %v4096, %v4152
    %v4181 = vsub.f32 %v4101, %v4155
    %v4182 = vsub.f32 %v4104, %v4158
    %v4183 = vsub.f32 %v4109, %v4161
    %v4184 = vsub.f32 %v4112, %v4164
    %v4185 = vsub.f32 %v4117, %v4167
    %v4186 = vsub.f32 %v4120, %v4170
    %v4187 = vmul.f32 %v4171, 1.442695
    %v4188 = vpow.pop %v4187
    %v4189 = vmul.f32 %v4172, 1.442695
    %v4190 = vpow.pop %v4189
    %v4191 = vmul.f32 %v4173, 1.442695
    %v4192 = vpow.pop %v4191
    %v4193 = vmul.f32 %v4174, 1.442695
    %v4194 = vpow.pop %v4193
    %v4195 = vmul.f32 %v4175, 1.442695
    %v4196 = vpow.pop %v4195
    %v4197 = vmul.f32 %v4176, 1.442695
    %v4198 = vpow.pop %v4197
    %v4199 = vmul.f32 %v4177, 1.442695
    %v4200 = vpow.pop %v4199
    %v4201 = vmul.f32 %v4178, 1.442695
    %v4202 = vpow.pop %v4201
    %v4203 = vmul.f32 %v4179, 1.442695
    %v4204 = vpow.pop %v4203
    %v4205 = vmul.f32 %v4180, 1.442695
    %v4206 = vpow.pop %v4205
    %v4207 = vmul.f32 %v4181, 1.442695
    %v4208 = vpow.pop %v4207
    %v4209 = vmul.f32 %v4182, 1.442695
    %v4210 = vpow.pop %v4209
    %v4211 = vmul.f32 %v4183, 1.442695
    %v4212 = vpow.pop %v4211
    %v4213 = vmul.f32 %v4184, 1.442695
    %v4214 = vpow.pop %v4213
    %v4215 = vmul.f32 %v4185, 1.442695
    %v4216 = vpow.pop %v4215
    %v4217 = vmul.f32 %v4186, 1.442695
    %v4218 = vpow.pop %v4217
    %v4219 = vsel %vm690, %v4188, 0.0
    %4220 = vadd.xlane.f32.xlu0 %v4219
    %v4221 = vpop.xlane.xlu0 %4220
    %v4222 = vsel %vm690, %v4190, 0.0
    %4223 = vadd.xlane.f32.xlu0 %v4222
    %v4224 = vpop.xlane.xlu0 %4223
    %v4225 = vsel %vm690, %v4192, 0.0
    %4226 = vadd.xlane.f32.xlu0 %v4225
    %v4227 = vpop.xlane.xlu0 %4226
    %v4228 = vsel %vm690, %v4194, 0.0
    %4229 = vadd.xlane.f32.xlu0 %v4228
    %v4230 = vpop.xlane.xlu0 %4229
    %v4231 = vsel %vm690, %v4196, 0.0
    %4232 = vadd.xlane.f32.xlu0 %v4231
    %v4233 = vpop.xlane.xlu0 %4232
    %v4234 = vsel %vm690, %v4198, 0.0
    %4235 = vadd.xlane.f32.xlu0 %v4234
    %v4236 = vpop.xlane.xlu0 %4235
    %v4237 = vsel %vm690, %v4200, 0.0
    %4238 = vadd.xlane.f32.xlu0 %v4237
    %v4239 = vpop.xlane.xlu0 %4238
    %v4240 = vsel %vm690, %v4202, 0.0
    %4241 = vadd.xlane.f32.xlu0 %v4240
    %v4242 = vpop.xlane.xlu0 %4241
    %v4243 = vsel %vm690, %v4204, 0.0
    %4244 = vadd.xlane.f32.xlu0 %v4243
    %v4245 = vpop.xlane.xlu0 %4244
    %v4246 = vsel %vm690, %v4206, 0.0
    %4247 = vadd.xlane.f32.xlu0 %v4246
    %v4248 = vpop.xlane.xlu0 %4247
    %v4249 = vsel %vm690, %v4208, 0.0
    %4250 = vadd.xlane.f32.xlu0 %v4249
    %v4251 = vpop.xlane.xlu0 %4250
    %v4252 = vsel %vm690, %v4210, 0.0
    %4253 = vadd.xlane.f32.xlu0 %v4252
    %v4254 = vpop.xlane.xlu0 %4253
    %v4255 = vsel %vm690, %v4212, 0.0
    %4256 = vadd.xlane.f32.xlu0 %v4255
    %v4257 = vpop.xlane.xlu0 %4256
    %v4258 = vsel %vm690, %v4214, 0.0
    %4259 = vadd.xlane.f32.xlu0 %v4258
    %v4260 = vpop.xlane.xlu0 %4259
    %v4261 = vsel %vm690, %v4216, 0.0
    %4262 = vadd.xlane.f32.xlu0 %v4261
    %v4263 = vpop.xlane.xlu0 %4262
    %v4264 = vsel %vm690, %v4218, 0.0
    %4265 = vadd.xlane.f32.xlu0 %v4264
    %v4266 = vpop.xlane.xlu0 %4265
    %v4267 = vrcp.pop %v4221
    %v4268 = vrcp.pop %v4224
    %v4269 = vrcp.pop %v4227
    %v4270 = vrcp.pop %v4230
    %v4271 = vrcp.pop %v4233
    %v4272 = vrcp.pop %v4236
    %v4273 = vrcp.pop %v4239
    %v4274 = vrcp.pop %v4242
    %v4275 = vrcp.pop %v4245
    %v4276 = vrcp.pop %v4248
    %v4277 = vrcp.pop %v4251
    %v4278 = vrcp.pop %v4254
    %v4279 = vrcp.pop %v4257
    %v4280 = vrcp.pop %v4260
    %v4281 = vrcp.pop %v4263
    %v4282 = vrcp.pop %v4266
    %v4283 = vmul.f32 %v4188, %v4267
    %v4284 = vmul.f32 %v4190, %v4268
    %v4285 = vmul.f32 %v4192, %v4269
    %v4286 = vmul.f32 %v4194, %v4270
    %v4287 = vmul.f32 %v4196, %v4271
    %v4288 = vmul.f32 %v4198, %v4272
    %v4289 = vmul.f32 %v4200, %v4273
    %v4290 = vmul.f32 %v4202, %v4274
    %v4291 = vmul.f32 %v4204, %v4275
    %v4292 = vmul.f32 %v4206, %v4276
    %v4293 = vmul.f32 %v4208, %v4277
    %v4294 = vmul.f32 %v4210, %v4278
    %v4295 = vmul.f32 %v4212, %v4279
    %v4296 = vmul.f32 %v4214, %v4280
    %v4297 = vmul.f32 %v4216, %v4281
    %v4298 = vmul.f32 %v4218, %v4282
    %v4299 = vpack.c.bf16 %v4284, %v4283
    %v4300 = vpack.c.bf16 %v4286, %v4285
    %v4301 = vpack.c.bf16 %v4288, %v4287
    %v4302 = vpack.c.bf16 %v4290, %v4289
    %v4303 = vpack.c.bf16 %v4292, %v4291
    %v4304 = vpack.c.bf16 %v4294, %v4293
    %v4305 = vpack.c.bf16 %v4296, %v4295
    %v4306 = vpack.c.bf16 %v4298, %v4297
    %4307 = vrot.lane.b32.xlu0 %v503, 32
    %v4308 = vpop.permute.xlu0 %4307
    %4309 = vrot.lane.b32.xlu0 %v504, 32
    %v4310 = vpop.permute.xlu0 %4309
    %4311 = vrot.lane.b32.xlu0 %v505, 32
    %v4312 = vpop.permute.xlu0 %4311
    %4313 = vrot.lane.b32.xlu0 %v506, 32
    %v4314 = vpop.permute.xlu0 %4313
    %v4320 = vsel %vm690, %v4299, 0
    %v4323 = vsel %vm690, %v4300, 0
    %v4326 = vsel %vm690, %v4301, 0
    %v4329 = vsel %vm690, %v4302, 0
    %4331 = vmatprep.subr.bf16.mxu0 0
    %4332 = vmatpush1.bf16.msra.mxu0 %v4308
    %4333 = vmatprep.subr.bf16.mxu0 0
    %4334 = vmatpush1.bf16.msra.mxu0 %v4310
    %4335 = vmatprep.subr.bf16.mxu0 0
    %4336 = vmatpush1.bf16.msra.mxu0 %v4312
    %4337 = vmatprep.subr.bf16.mxu0 0
    %4338 = vmatpush1.bf16.msra.mxu0 %v4314
    %4339 = vmatprep.subr.bf16.mxu0 0
    %4340 = vmatpush1.bf16.msra.mxu0 0
    %4341 = vmatprep.subr.bf16.mxu0 0
    %4342 = vmatpush1.bf16.msra.mxu0 0
    %4343 = vmatprep.subr.bf16.mxu0 0
    %4344 = vmatpush1.bf16.msra.mxu0 0
    %4345 = vmatprep.subr.bf16.mxu0 0
    %4346 = vmatpush1.bf16.msra.mxu0 0
    %4347 = vmatprep.subr.bf16.mxu0 0
    %4348 = vmatpush1.bf16.msra.mxu0 0
    %4349 = vmatprep.subr.bf16.mxu0 0
    %4350 = vmatpush1.bf16.msra.mxu0 0
    %4351 = vmatprep.subr.bf16.mxu0 0
    %4352 = vmatpush1.bf16.msra.mxu0 0
    %4353 = vmatprep.subr.bf16.mxu0 0
    %4354 = vmatpush1.bf16.msra.mxu0 0
    %4355 = vmatprep.subr.bf16.mxu0 0
    %4356 = vmatpush1.bf16.msra.mxu0 0
    %4357 = vmatprep.subr.bf16.mxu0 0
    %4358 = vmatpush1.bf16.msra.mxu0 0
    %4359 = vmatprep.subr.bf16.mxu0 0
    %4360 = vmatpush1.bf16.msra.mxu0 0
    %4361 = vmatprep.subr.bf16.mxu0 0
    %4362 = vmatpush1.bf16.msra.mxu0 0
    %4363 = vmatprep.mubr.bf16.mxu0 0
    %4364 = vmatmul.mubr.bf16.gmra.mrb[0].mxu0 %v4320
    %v4365 = vpop.f32.mrb[0].mxu0
    %v4366 = vadd.f32 0.0, %v4365
    %v4367 = vpop.f32.mrb[0].mxu0
    %v4368 = vpop.f32.mrb[0].mxu0
    %v4369 = vadd.f32 0.0, %v4368
    %v4370 = vpop.f32.mrb[0].mxu0
    %4371 = vmatprep.mubr.bf16.mxu0 0
    %4372 = vmatmul.mubr.bf16.gmra.mrb[0].mxu0 %v4323
    %v4373 = vpop.f32.mrb[0].mxu0
    %v4374 = vadd.f32 0.0, %v4373
    %v4375 = vpop.f32.mrb[0].mxu0
    %v4376 = vpop.f32.mrb[0].mxu0
    %v4377 = vadd.f32 0.0, %v4376
    %v4378 = vpop.f32.mrb[0].mxu0
    %4379 = vmatprep.mubr.bf16.mxu0 0
    %4380 = vmatmul.mubr.bf16.gmra.mrb[0].mxu0 %v4326
    %v4381 = vpop.f32.mrb[0].mxu0
    %v4382 = vadd.f32 0.0, %v4381
    %v4383 = vpop.f32.mrb[0].mxu0
    %v4384 = vpop.f32.mrb[0].mxu0
    %v4385 = vadd.f32 0.0, %v4384
    %v4386 = vpop.f32.mrb[0].mxu0
    %4387 = vmatprep.mubr.bf16.mxu0 0
    %4388 = vmatmul.mubr.bf16.gmra.mrb[0].mxu0 %v4329
    %v4389 = vpop.f32.mrb[0].mxu0
    %v4390 = vadd.f32 0.0, %v4389
    %v4391 = vpop.f32.mrb[0].mxu0
    %v4392 = vpop.f32.mrb[0].mxu0
    %v4393 = vadd.f32 0.0, %v4392
    %v4394 = vpop.f32.mrb[0].mxu0
    %4395 = vdwg.mxu0
    %4396 = vrot.lane.b32.xlu0 %v507, 32
    %v4397 = vpop.permute.xlu0 %4396
    %4398 = vrot.lane.b32.xlu0 %v508, 32
    %v4399 = vpop.permute.xlu0 %4398
    %4400 = vrot.lane.b32.xlu0 %v509, 32
    %v4401 = vpop.permute.xlu0 %4400
    %4402 = vrot.lane.b32.xlu0 %v510, 32
    %v4403 = vpop.permute.xlu0 %4402
    %v4409 = vsel %vm690, %v4303, 0
    %v4412 = vsel %vm690, %v4304, 0
    %v4415 = vsel %vm690, %v4305, 0
    %v4418 = vsel %vm690, %v4306, 0
    %4420 = vmatprep.subr.bf16.mxu0 0
    %4421 = vmatpush1.bf16.msra.mxu0 %v4397
    %4422 = vmatprep.subr.bf16.mxu0 0
    %4423 = vmatpush1.bf16.msra.mxu0 %v4399
    %4424 = vmatprep.subr.bf16.mxu0 0
    %4425 = vmatpush1.bf16.msra.mxu0 %v4401
    %4426 = vmatprep.subr.bf16.mxu0 0
    %4427 = vmatpush1.bf16.msra.mxu0 %v4403
    %4428 = vmatprep.subr.bf16.mxu0 0
    %4429 = vmatpush1.bf16.msra.mxu0 0
    %4430 = vmatprep.subr.bf16.mxu0 0
    %4431 = vmatpush1.bf16.msra.mxu0 0
    %4432 = vmatprep.subr.bf16.mxu0 0
    %4433 = vmatpush1.bf16.msra.mxu0 0
    %4434 = vmatprep.subr.bf16.mxu0 0
    %4435 = vmatpush1.bf16.msra.mxu0 0
    %4436 = vmatprep.subr.bf16.mxu0 0
    %4437 = vmatpush1.bf16.msra.mxu0 0
    %4438 = vmatprep.subr.bf16.mxu0 0
    %4439 = vmatpush1.bf16.msra.mxu0 0
    %4440 = vmatprep.subr.bf16.mxu0 0
    %4441 = vmatpush1.bf16.msra.mxu0 0
    %4442 = vmatprep.subr.bf16.mxu0 0
    %4443 = vmatpush1.bf16.msra.mxu0 0
    %4444 = vmatprep.subr.bf16.mxu0 0
    %4445 = vmatpush1.bf16.msra.mxu0 0
    %4446 = vmatprep.subr.bf16.mxu0 0
    %4447 = vmatpush1.bf16.msra.mxu0 0
    %4448 = vmatprep.subr.bf16.mxu0 0
    %4449 = vmatpush1.bf16.msra.mxu0 0
    %4450 = vmatprep.subr.bf16.mxu0 0
    %4451 = vmatpush1.bf16.msra.mxu0 0
    %4452 = vmatprep.mubr.bf16.mxu0 0
    %4453 = vmatmul.mubr.bf16.gmra.mrb[0].mxu0 %v4409
    %v4454 = vpop.f32.mrb[0].mxu0
    %v4455 = vadd.f32 0.0, %v4454
    %v4456 = vpop.f32.mrb[0].mxu0
    %v4457 = vpop.f32.mrb[0].mxu0
    %v4458 = vadd.f32 0.0, %v4457
    %v4459 = vpop.f32.mrb[0].mxu0
    %4460 = vmatprep.mubr.bf16.mxu0 0
    %4461 = vmatmul.mubr.bf16.gmra.mrb[0].mxu0 %v4412
    %v4462 = vpop.f32.mrb[0].mxu0
    %v4463 = vadd.f32 0.0, %v4462
    %v4464 = vpop.f32.mrb[0].mxu0
    %v4465 = vpop.f32.mrb[0].mxu0
    %v4466 = vadd.f32 0.0, %v4465
    %v4467 = vpop.f32.mrb[0].mxu0
    %4468 = vmatprep.mubr.bf16.mxu0 0
    %4469 = vmatmul.mubr.bf16.gmra.mrb[0].mxu0 %v4415
    %v4470 = vpop.f32.mrb[0].mxu0
    %v4471 = vadd.f32 0.0, %v4470
    %v4472 = vpop.f32.mrb[0].mxu0
    %v4473 = vpop.f32.mrb[0].mxu0
    %v4474 = vadd.f32 0.0, %v4473
    %v4475 = vpop.f32.mrb[0].mxu0
    %4476 = vmatprep.mubr.bf16.mxu0 0
    %4477 = vmatmul.mubr.bf16.gmra.mrb[0].mxu0 %v4418
    %v4478 = vpop.f32.mrb[0].mxu0
    %v4479 = vadd.f32 0.0, %v4478
    %v4480 = vpop.f32.mrb[0].mxu0
    %v4481 = vpop.f32.mrb[0].mxu0
    %v4482 = vadd.f32 0.0, %v4481
    %v4483 = vpop.f32.mrb[0].mxu0
    %4484 = vdwg.mxu0
    %4485 = vrot.lane.b32.xlu0 %v487, 16
    %v4486 = vpop.permute.xlu0 %4485
    %4487 = vrot.lane.b32.xlu0 %v488, 16
    %v4488 = vpop.permute.xlu0 %4487
    %4489 = vrot.lane.b32.xlu0 %v489, 16
    %v4490 = vpop.permute.xlu0 %4489
    %4491 = vrot.lane.b32.xlu0 %v490, 16
    %v4492 = vpop.permute.xlu0 %4491
    %4493 = vrot.lane.b32.xlu0 %v495, 16
    %v4494 = vpop.permute.xlu0 %4493
    %4495 = vrot.lane.b32.xlu0 %v496, 16
    %v4496 = vpop.permute.xlu0 %4495
    %4497 = vrot.lane.b32.xlu0 %v497, 16
    %v4498 = vpop.permute.xlu0 %4497
    %4499 = vrot.lane.b32.xlu0 %v498, 16
    %v4500 = vpop.permute.xlu0 %4499
    %v4502 = vsel %vm511, %v4486, 0
    %v4505 = vsel %vm511, %v4488, 0
    %v4508 = vsel %vm511, %v4490, 0
    %v4511 = vsel %vm511, %v4492, 0
    %v4514 = vsel %vm511, %v4494, 0
    %v4517 = vsel %vm511, %v4496, 0
    %v4520 = vsel %vm511, %v4498, 0
    %v4523 = vsel %vm511, %v4500, 0
    %4525 = vmatprep.subr.bf16.mxu0 0
    %4526 = vmatpush1.bf16.xpose.msra.mxu0 %v4514
    %4527 = vmatprep.subr.bf16.mxu0 0
    %4528 = vmatpush1.bf16.xpose.msra.mxu0 %v4517
    %4529 = vmatprep.subr.bf16.mxu0 0
    %4530 = vmatpush1.bf16.xpose.msra.mxu0 %v4520
    %4531 = vmatprep.subr.bf16.mxu0 0
    %4532 = vmatpush1.bf16.xpose.msra.mxu0 %v4523
    %4533 = vmatprep.subr.bf16.mxu0 0
    %4534 = vmatpush1.bf16.xpose.msra.mxu0 0
    %4535 = vmatprep.subr.bf16.mxu0 0
    %4536 = vmatpush1.bf16.xpose.msra.mxu0 0
    %4537 = vmatprep.subr.bf16.mxu0 0
    %4538 = vmatpush1.bf16.xpose.msra.mxu0 0
    %4539 = vmatprep.subr.bf16.mxu0 0
    %4540 = vmatpush1.bf16.xpose.msra.mxu0 0
    %4541 = vmatprep.subr.bf16.mxu0 0
    %4542 = vmatpush1.bf16.xpose.msra.mxu0 0
    %4543 = vmatprep.subr.bf16.mxu0 0
    %4544 = vmatpush1.bf16.xpose.msra.mxu0 0
    %4545 = vmatprep.subr.bf16.mxu0 0
    %4546 = vmatpush1.bf16.xpose.msra.mxu0 0
    %4547 = vmatprep.subr.bf16.mxu0 0
    %4548 = vmatpush1.bf16.xpose.msra.mxu0 0
    %4549 = vmatprep.subr.bf16.mxu0 0
    %4550 = vmatpush1.bf16.xpose.msra.mxu0 0
    %4551 = vmatprep.subr.bf16.mxu0 0
    %4552 = vmatpush1.bf16.xpose.msra.mxu0 0
    %4553 = vmatprep.subr.bf16.mxu0 0
    %4554 = vmatpush1.bf16.xpose.msra.mxu0 0
    %4555 = vmatprep.subr.bf16.mxu0 0
    %4556 = vmatpush1.bf16.xpose.msra.mxu0 0
    %4557 = vmatprep.mubr.bf16.mxu0 0
    %4558 = vmatmul.mubr.bf16.gmra.mrb[0].mxu0 %v4502
    %v4559 = vpop.f32.mrb[0].mxu0
    %v4560 = vadd.f32 0.0, %v4559
    %v4561 = vpop.f32.mrb[0].mxu0
    %v4562 = vpop.f32.mrb[0].mxu0
    %v4563 = vadd.f32 0.0, %v4562
    %v4564 = vpop.f32.mrb[0].mxu0
    %4565 = vmatprep.mubr.bf16.mxu0 0
    %4566 = vmatmul.mubr.bf16.gmra.mrb[0].mxu0 %v4505
    %v4567 = vpop.f32.mrb[0].mxu0
    %v4568 = vadd.f32 0.0, %v4567
    %v4569 = vpop.f32.mrb[0].mxu0
    %v4570 = vpop.f32.mrb[0].mxu0
    %v4571 = vadd.f32 0.0, %v4570
    %v4572 = vpop.f32.mrb[0].mxu0
    %4573 = vmatprep.mubr.bf16.mxu0 0
    %4574 = vmatmul.mubr.bf16.gmra.mrb[0].mxu0 %v4508
    %v4575 = vpop.f32.mrb[0].mxu0
    %v4576 = vadd.f32 0.0, %v4575
    %v4577 = vpop.f32.mrb[0].mxu0
    %v4578 = vpop.f32.mrb[0].mxu0
    %v4579 = vadd.f32 0.0, %v4578
    %v4580 = vpop.f32.mrb[0].mxu0
    %4581 = vmatprep.mubr.bf16.mxu0 0
    %4582 = vmatmul.mubr.bf16.gmra.mrb[0].mxu0 %v4511
    %v4583 = vpop.f32.mrb[0].mxu0
    %v4584 = vadd.f32 0.0, %v4583
    %v4585 = vpop.f32.mrb[0].mxu0
    %v4586 = vpop.f32.mrb[0].mxu0
    %v4587 = vadd.f32 0.0, %v4586
    %v4588 = vpop.f32.mrb[0].mxu0
    %4589 = vdwg.mxu0
    %4590 = vrot.lane.b32.xlu0 %v491, 16
    %v4591 = vpop.permute.xlu0 %4590
    %4592 = vrot.lane.b32.xlu0 %v492, 16
    %v4593 = vpop.permute.xlu0 %4592
    %4594 = vrot.lane.b32.xlu0 %v493, 16
    %v4595 = vpop.permute.xlu0 %4594
    %4596 = vrot.lane.b32.xlu0 %v494, 16
    %v4597 = vpop.permute.xlu0 %4596
    %4598 = vrot.lane.b32.xlu0 %v499, 16
    %v4599 = vpop.permute.xlu0 %4598
    %4600 = vrot.lane.b32.xlu0 %v500, 16
    %v4601 = vpop.permute.xlu0 %4600
    %4602 = vrot.lane.b32.xlu0 %v501, 16
    %v4603 = vpop.permute.xlu0 %4602
    %4604 = vrot.lane.b32.xlu0 %v502, 16
    %v4605 = vpop.permute.xlu0 %4604
    %v4607 = vsel %vm511, %v4591, 0
    %v4610 = vsel %vm511, %v4593, 0
    %v4613 = vsel %vm511, %v4595, 0
    %v4616 = vsel %vm511, %v4597, 0
    %v4619 = vsel %vm511, %v4599, 0
    %v4622 = vsel %vm511, %v4601, 0
    %v4625 = vsel %vm511, %v4603, 0
    %v4628 = vsel %vm511, %v4605, 0
    %4630 = vmatprep.subr.bf16.mxu0 0
    %4631 = vmatpush1.bf16.xpose.msra.mxu0 %v4619
    %4632 = vmatprep.subr.bf16.mxu0 0
    %4633 = vmatpush1.bf16.xpose.msra.mxu0 %v4622
    %4634 = vmatprep.subr.bf16.mxu0 0
    %4635 = vmatpush1.bf16.xpose.msra.mxu0 %v4625
    %4636 = vmatprep.subr.bf16.mxu0 0
    %4637 = vmatpush1.bf16.xpose.msra.mxu0 %v4628
    %4638 = vmatprep.subr.bf16.mxu0 0
    %4639 = vmatpush1.bf16.xpose.msra.mxu0 0
    %4640 = vmatprep.subr.bf16.mxu0 0
    %4641 = vmatpush1.bf16.xpose.msra.mxu0 0
    %4642 = vmatprep.subr.bf16.mxu0 0
    %4643 = vmatpush1.bf16.xpose.msra.mxu0 0
    %4644 = vmatprep.subr.bf16.mxu0 0
    %4645 = vmatpush1.bf16.xpose.msra.mxu0 0
    %4646 = vmatprep.subr.bf16.mxu0 0
    %4647 = vmatpush1.bf16.xpose.msra.mxu0 0
    %4648 = vmatprep.subr.bf16.mxu0 0
    %4649 = vmatpush1.bf16.xpose.msra.mxu0 0
    %4650 = vmatprep.subr.bf16.mxu0 0
    %4651 = vmatpush1.bf16.xpose.msra.mxu0 0
    %4652 = vmatprep.subr.bf16.mxu0 0
    %4653 = vmatpush1.bf16.xpose.msra.mxu0 0
    %4654 = vmatprep.subr.bf16.mxu0 0
    %4655 = vmatpush1.bf16.xpose.msra.mxu0 0
    %4656 = vmatprep.subr.bf16.mxu0 0
    %4657 = vmatpush1.bf16.xpose.msra.mxu0 0
    %4658 = vmatprep.subr.bf16.mxu0 0
    %4659 = vmatpush1.bf16.xpose.msra.mxu0 0
    %4660 = vmatprep.subr.bf16.mxu0 0
    %4661 = vmatpush1.bf16.xpose.msra.mxu0 0
    %4662 = vmatprep.mubr.bf16.mxu0 0
    %4663 = vmatmul.mubr.bf16.gmra.mrb[0].mxu0 %v4607
    %v4664 = vpop.f32.mrb[0].mxu0
    %v4665 = vadd.f32 0.0, %v4664
    %v4666 = vpop.f32.mrb[0].mxu0
    %v4667 = vpop.f32.mrb[0].mxu0
    %v4668 = vadd.f32 0.0, %v4667
    %v4669 = vpop.f32.mrb[0].mxu0
    %4670 = vmatprep.mubr.bf16.mxu0 0
    %4671 = vmatmul.mubr.bf16.gmra.mrb[0].mxu0 %v4610
    %v4672 = vpop.f32.mrb[0].mxu0
    %v4673 = vadd.f32 0.0, %v4672
    %v4674 = vpop.f32.mrb[0].mxu0
    %v4675 = vpop.f32.mrb[0].mxu0
    %v4676 = vadd.f32 0.0, %v4675
    %v4677 = vpop.f32.mrb[0].mxu0
    %4678 = vmatprep.mubr.bf16.mxu0 0
    %4679 = vmatmul.mubr.bf16.gmra.mrb[0].mxu0 %v4613
    %v4680 = vpop.f32.mrb[0].mxu0
    %v4681 = vadd.f32 0.0, %v4680
    %v4682 = vpop.f32.mrb[0].mxu0
    %v4683 = vpop.f32.mrb[0].mxu0
    %v4684 = vadd.f32 0.0, %v4683
    %v4685 = vpop.f32.mrb[0].mxu0
    %4686 = vmatprep.mubr.bf16.mxu0 0
    %4687 = vmatmul.mubr.bf16.gmra.mrb[0].mxu0 %v4616
    %v4688 = vpop.f32.mrb[0].mxu0
    %v4689 = vadd.f32 0.0, %v4688
    %v4690 = vpop.f32.mrb[0].mxu0
    %v4691 = vpop.f32.mrb[0].mxu0
    %v4692 = vadd.f32 0.0, %v4691
    %v4693 = vpop.f32.mrb[0].mxu0
    %4694 = vdwg.mxu0
    %v4695 = vsel %vm690, %v4560, -inf
    %4696 = vmax.xlane.f32.xlu0 %v4695
    %v4697 = vpop.xlane.xlu0 %4696
    %v4698 = vsel %vm690, %v4563, -inf
    %4699 = vmax.xlane.f32.xlu0 %v4698
    %v4700 = vpop.xlane.xlu0 %4699
    %v4701 = vsel %vm690, %v4568, -inf
    %4702 = vmax.xlane.f32.xlu0 %v4701
    %v4703 = vpop.xlane.xlu0 %4702
    %v4704 = vsel %vm690, %v4571, -inf
    %4705 = vmax.xlane.f32.xlu0 %v4704
    %v4706 = vpop.xlane.xlu0 %4705
    %v4707 = vsel %vm690, %v4576, -inf
    %4708 = vmax.xlane.f32.xlu0 %v4707
    %v4709 = vpop.xlane.xlu0 %4708
    %v4710 = vsel %vm690, %v4579, -inf
    %4711 = vmax.xlane.f32.xlu0 %v4710
    %v4712 = vpop.xlane.xlu0 %4711
    %v4713 = vsel %vm690, %v4584, -inf
    %4714 = vmax.xlane.f32.xlu0 %v4713
    %v4715 = vpop.xlane.xlu0 %4714
    %v4716 = vsel %vm690, %v4587, -inf
    %4717 = vmax.xlane.f32.xlu0 %v4716
    %v4718 = vpop.xlane.xlu0 %4717
    %v4719 = vsel %vm690, %v4665, -inf
    %4720 = vmax.xlane.f32.xlu0 %v4719
    %v4721 = vpop.xlane.xlu0 %4720
    %v4722 = vsel %vm690, %v4668, -inf
    %4723 = vmax.xlane.f32.xlu0 %v4722
    %v4724 = vpop.xlane.xlu0 %4723
    %v4725 = vsel %vm690, %v4673, -inf
    %4726 = vmax.xlane.f32.xlu0 %v4725
    %v4727 = vpop.xlane.xlu0 %4726
    %v4728 = vsel %vm690, %v4676, -inf
    %4729 = vmax.xlane.f32.xlu0 %v4728
    %v4730 = vpop.xlane.xlu0 %4729
    %v4731 = vsel %vm690, %v4681, -inf
    %4732 = vmax.xlane.f32.xlu0 %v4731
    %v4733 = vpop.xlane.xlu0 %4732
    %v4734 = vsel %vm690, %v4684, -inf
    %4735 = vmax.xlane.f32.xlu0 %v4734
    %v4736 = vpop.xlane.xlu0 %4735
    %v4737 = vsel %vm690, %v4689, -inf
    %4738 = vmax.xlane.f32.xlu0 %v4737
    %v4739 = vpop.xlane.xlu0 %4738
    %v4740 = vsel %vm690, %v4692, -inf
    %4741 = vmax.xlane.f32.xlu0 %v4740
    %v4742 = vpop.xlane.xlu0 %4741
    %v4743 = vsub.f32 %v4560, %v4697
    %v4744 = vsub.f32 %v4563, %v4700
    %v4745 = vsub.f32 %v4568, %v4703
    %v4746 = vsub.f32 %v4571, %v4706
    %v4747 = vsub.f32 %v4576, %v4709
    %v4748 = vsub.f32 %v4579, %v4712
    %v4749 = vsub.f32 %v4584, %v4715
    %v4750 = vsub.f32 %v4587, %v4718
    %v4751 = vsub.f32 %v4665, %v4721
    %v4752 = vsub.f32 %v4668, %v4724
    %v4753 = vsub.f32 %v4673, %v4727
    %v4754 = vsub.f32 %v4676, %v4730
    %v4755 = vsub.f32 %v4681, %v4733
    %v4756 = vsub.f32 %v4684, %v4736
    %v4757 = vsub.f32 %v4689, %v4739
    %v4758 = vsub.f32 %v4692, %v4742
    %v4759 = vmul.f32 %v4743, 1.442695
    %v4760 = vpow.pop %v4759
    %v4761 = vmul.f32 %v4744, 1.442695
    %v4762 = vpow.pop %v4761
    %v4763 = vmul.f32 %v4745, 1.442695
    %v4764 = vpow.pop %v4763
    %v4765 = vmul.f32 %v4746, 1.442695
    %v4766 = vpow.pop %v4765
    %v4767 = vmul.f32 %v4747, 1.442695
    %v4768 = vpow.pop %v4767
    %v4769 = vmul.f32 %v4748, 1.442695
    %v4770 = vpow.pop %v4769
    %v4771 = vmul.f32 %v4749, 1.442695
    %v4772 = vpow.pop %v4771
    %v4773 = vmul.f32 %v4750, 1.442695
    %v4774 = vpow.pop %v4773
    %v4775 = vmul.f32 %v4751, 1.442695
    %v4776 = vpow.pop %v4775
    %v4777 = vmul.f32 %v4752, 1.442695
    %v4778 = vpow.pop %v4777
    %v4779 = vmul.f32 %v4753, 1.442695
    %v4780 = vpow.pop %v4779
    %v4781 = vmul.f32 %v4754, 1.442695
    %v4782 = vpow.pop %v4781
    %v4783 = vmul.f32 %v4755, 1.442695
    %v4784 = vpow.pop %v4783
    %v4785 = vmul.f32 %v4756, 1.442695
    %v4786 = vpow.pop %v4785
    %v4787 = vmul.f32 %v4757, 1.442695
    %v4788 = vpow.pop %v4787
    %v4789 = vmul.f32 %v4758, 1.442695
    %v4790 = vpow.pop %v4789
    %v4791 = vsel %vm690, %v4760, 0.0
    %4792 = vadd.xlane.f32.xlu0 %v4791
    %v4793 = vpop.xlane.xlu0 %4792
    %v4794 = vsel %vm690, %v4762, 0.0
    %4795 = vadd.xlane.f32.xlu0 %v4794
    %v4796 = vpop.xlane.xlu0 %4795
    %v4797 = vsel %vm690, %v4764, 0.0
    %4798 = vadd.xlane.f32.xlu0 %v4797
    %v4799 = vpop.xlane.xlu0 %4798
    %v4800 = vsel %vm690, %v4766, 0.0
    %4801 = vadd.xlane.f32.xlu0 %v4800
    %v4802 = vpop.xlane.xlu0 %4801
    %v4803 = vsel %vm690, %v4768, 0.0
    %4804 = vadd.xlane.f32.xlu0 %v4803
    %v4805 = vpop.xlane.xlu0 %4804
    %v4806 = vsel %vm690, %v4770, 0.0
    %4807 = vadd.xlane.f32.xlu0 %v4806
    %v4808 = vpop.xlane.xlu0 %4807
    %v4809 = vsel %vm690, %v4772, 0.0
    %4810 = vadd.xlane.f32.xlu0 %v4809
    %v4811 = vpop.xlane.xlu0 %4810
    %v4812 = vsel %vm690, %v4774, 0.0
    %4813 = vadd.xlane.f32.xlu0 %v4812
    %v4814 = vpop.xlane.xlu0 %4813
    %v4815 = vsel %vm690, %v4776, 0.0
    %4816 = vadd.xlane.f32.xlu0 %v4815
    %v4817 = vpop.xlane.xlu0 %4816
    %v4818 = vsel %vm690, %v4778, 0.0
    %4819 = vadd.xlane.f32.xlu0 %v4818
    %v4820 = vpop.xlane.xlu0 %4819
    %v4821 = vsel %vm690, %v4780, 0.0
    %4822 = vadd.xlane.f32.xlu0 %v4821
    %v4823 = vpop.xlane.xlu0 %4822
    %v4824 = vsel %vm690, %v4782, 0.0
    %4825 = vadd.xlane.f32.xlu0 %v4824
    %v4826 = vpop.xlane.xlu0 %4825
    %v4827 = vsel %vm690, %v4784, 0.0
    %4828 = vadd.xlane.f32.xlu0 %v4827
    %v4829 = vpop.xlane.xlu0 %4828
    %v4830 = vsel %vm690, %v4786, 0.0
    %4831 = vadd.xlane.f32.xlu0 %v4830
    %v4832 = vpop.xlane.xlu0 %4831
    %v4833 = vsel %vm690, %v4788, 0.0
    %4834 = vadd.xlane.f32.xlu0 %v4833
    %v4835 = vpop.xlane.xlu0 %4834
    %v4836 = vsel %vm690, %v4790, 0.0
    %4837 = vadd.xlane.f32.xlu0 %v4836
    %v4838 = vpop.xlane.xlu0 %4837
    %v4839 = vrcp.pop %v4793
    %v4840 = vrcp.pop %v4796
    %v4841 = vrcp.pop %v4799
    %v4842 = vrcp.pop %v4802
    %v4843 = vrcp.pop %v4805
    %v4844 = vrcp.pop %v4808
    %v4845 = vrcp.pop %v4811
    %v4846 = vrcp.pop %v4814
    %v4847 = vrcp.pop %v4817
    %v4848 = vrcp.pop %v4820
    %v4849 = vrcp.pop %v4823
    %v4850 = vrcp.pop %v4826
    %v4851 = vrcp.pop %v4829
    %v4852 = vrcp.pop %v4832
    %v4853 = vrcp.pop %v4835
    %v4854 = vrcp.pop %v4838
    %v4855 = vmul.f32 %v4760, %v4839
    %v4856 = vmul.f32 %v4762, %v4840
    %v4857 = vmul.f32 %v4764, %v4841
    %v4858 = vmul.f32 %v4766, %v4842
    %v4859 = vmul.f32 %v4768, %v4843
    %v4860 = vmul.f32 %v4770, %v4844
    %v4861 = vmul.f32 %v4772, %v4845
    %v4862 = vmul.f32 %v4774, %v4846
    %v4863 = vmul.f32 %v4776, %v4847
    %v4864 = vmul.f32 %v4778, %v4848
    %v4865 = vmul.f32 %v4780, %v4849
    %v4866 = vmul.f32 %v4782, %v4850
    %v4867 = vmul.f32 %v4784, %v4851
    %v4868 = vmul.f32 %v4786, %v4852
    %v4869 = vmul.f32 %v4788, %v4853
    %v4870 = vmul.f32 %v4790, %v4854
    %v4871 = vpack.c.bf16 %v4856, %v4855
    %v4872 = vpack.c.bf16 %v4858, %v4857
    %v4873 = vpack.c.bf16 %v4860, %v4859
    %v4874 = vpack.c.bf16 %v4862, %v4861
    %v4875 = vpack.c.bf16 %v4864, %v4863
    %v4876 = vpack.c.bf16 %v4866, %v4865
    %v4877 = vpack.c.bf16 %v4868, %v4867
    %v4878 = vpack.c.bf16 %v4870, %v4869
    %4879 = vrot.lane.b32.xlu0 %v503, 16
    %v4880 = vpop.permute.xlu0 %4879
    %4881 = vrot.lane.b32.xlu0 %v504, 16
    %v4882 = vpop.permute.xlu0 %4881
    %4883 = vrot.lane.b32.xlu0 %v505, 16
    %v4884 = vpop.permute.xlu0 %4883
    %4885 = vrot.lane.b32.xlu0 %v506, 16
    %v4886 = vpop.permute.xlu0 %4885
    %v4892 = vsel %vm690, %v4871, 0
    %v4895 = vsel %vm690, %v4872, 0
    %v4898 = vsel %vm690, %v4873, 0
    %v4901 = vsel %vm690, %v4874, 0
    %4903 = vmatprep.subr.bf16.mxu0 0
    %4904 = vmatpush1.bf16.msra.mxu0 %v4880
    %4905 = vmatprep.subr.bf16.mxu0 0
    %4906 = vmatpush1.bf16.msra.mxu0 %v4882
    %4907 = vmatprep.subr.bf16.mxu0 0
    %4908 = vmatpush1.bf16.msra.mxu0 %v4884
    %4909 = vmatprep.subr.bf16.mxu0 0
    %4910 = vmatpush1.bf16.msra.mxu0 %v4886
    %4911 = vmatprep.subr.bf16.mxu0 0
    %4912 = vmatpush1.bf16.msra.mxu0 0
    %4913 = vmatprep.subr.bf16.mxu0 0
    %4914 = vmatpush1.bf16.msra.mxu0 0
    %4915 = vmatprep.subr.bf16.mxu0 0
    %4916 = vmatpush1.bf16.msra.mxu0 0
    %4917 = vmatprep.subr.bf16.mxu0 0
    %4918 = vmatpush1.bf16.msra.mxu0 0
    %4919 = vmatprep.subr.bf16.mxu0 0
    %4920 = vmatpush1.bf16.msra.mxu0 0
    %4921 = vmatprep.subr.bf16.mxu0 0
    %4922 = vmatpush1.bf16.msra.mxu0 0
    %4923 = vmatprep.subr.bf16.mxu0 0
    %4924 = vmatpush1.bf16.msra.mxu0 0
    %4925 = vmatprep.subr.bf16.mxu0 0
    %4926 = vmatpush1.bf16.msra.mxu0 0
    %4927 = vmatprep.subr.bf16.mxu0 0
    %4928 = vmatpush1.bf16.msra.mxu0 0
    %4929 = vmatprep.subr.bf16.mxu0 0
    %4930 = vmatpush1.bf16.msra.mxu0 0
    %4931 = vmatprep.subr.bf16.mxu0 0
    %4932 = vmatpush1.bf16.msra.mxu0 0
    %4933 = vmatprep.subr.bf16.mxu0 0
    %4934 = vmatpush1.bf16.msra.mxu0 0
    %4935 = vmatprep.mubr.bf16.mxu0 0
    %4936 = vmatmul.mubr.bf16.gmra.mrb[0].mxu0 %v4892
    %v4937 = vpop.f32.mrb[0].mxu0
    %v4938 = vadd.f32 0.0, %v4937
    %v4939 = vpop.f32.mrb[0].mxu0
    %v4940 = vpop.f32.mrb[0].mxu0
    %v4941 = vadd.f32 0.0, %v4940
    %v4942 = vpop.f32.mrb[0].mxu0
    %4943 = vmatprep.mubr.bf16.mxu0 0
    %4944 = vmatmul.mubr.bf16.gmra.mrb[0].mxu0 %v4895
    %v4945 = vpop.f32.mrb[0].mxu0
    %v4946 = vadd.f32 0.0, %v4945
    %v4947 = vpop.f32.mrb[0].mxu0
    %v4948 = vpop.f32.mrb[0].mxu0
    %v4949 = vadd.f32 0.0, %v4948
    %v4950 = vpop.f32.mrb[0].mxu0
    %4951 = vmatprep.mubr.bf16.mxu0 0
    %4952 = vmatmul.mubr.bf16.gmra.mrb[0].mxu0 %v4898
    %v4953 = vpop.f32.mrb[0].mxu0
    %v4954 = vadd.f32 0.0, %v4953
    %v4955 = vpop.f32.mrb[0].mxu0
    %v4956 = vpop.f32.mrb[0].mxu0
    %v4957 = vadd.f32 0.0, %v4956
    %v4958 = vpop.f32.mrb[0].mxu0
    %4959 = vmatprep.mubr.bf16.mxu0 0
    %4960 = vmatmul.mubr.bf16.gmra.mrb[0].mxu0 %v4901
    %v4961 = vpop.f32.mrb[0].mxu0
    %v4962 = vadd.f32 0.0, %v4961
    %v4963 = vpop.f32.mrb[0].mxu0
    %v4964 = vpop.f32.mrb[0].mxu0
    %v4965 = vadd.f32 0.0, %v4964
    %v4966 = vpop.f32.mrb[0].mxu0
    %4967 = vdwg.mxu0
    %4968 = vrot.lane.b32.xlu0 %v507, 16
    %v4969 = vpop.permute.xlu0 %4968
    %4970 = vrot.lane.b32.xlu0 %v508, 16
    %v4971 = vpop.permute.xlu0 %4970
    %4972 = vrot.lane.b32.xlu0 %v509, 16
    %v4973 = vpop.permute.xlu0 %4972
    %4974 = vrot.lane.b32.xlu0 %v510, 16
    %v4975 = vpop.permute.xlu0 %4974
    %v4981 = vsel %vm690, %v4875, 0
    %v4984 = vsel %vm690, %v4876, 0
    %v4987 = vsel %vm690, %v4877, 0
    %v4990 = vsel %vm690, %v4878, 0
    %4992 = vmatprep.subr.bf16.mxu0 0
    %4993 = vmatpush1.bf16.msra.mxu0 %v4969
    %4994 = vmatprep.subr.bf16.mxu0 0
    %4995 = vmatpush1.bf16.msra.mxu0 %v4971
    %4996 = vmatprep.subr.bf16.mxu0 0
    %4997 = vmatpush1.bf16.msra.mxu0 %v4973
    %4998 = vmatprep.subr.bf16.mxu0 0
    %4999 = vmatpush1.bf16.msra.mxu0 %v4975
    %5000 = vmatprep.subr.bf16.mxu0 0
    %5001 = vmatpush1.bf16.msra.mxu0 0
    %5002 = vmatprep.subr.bf16.mxu0 0
    %5003 = vmatpush1.bf16.msra.mxu0 0
    %5004 = vmatprep.subr.bf16.mxu0 0
    %5005 = vmatpush1.bf16.msra.mxu0 0
    %5006 = vmatprep.subr.bf16.mxu0 0
    %5007 = vmatpush1.bf16.msra.mxu0 0
    %5008 = vmatprep.subr.bf16.mxu0 0
    %5009 = vmatpush1.bf16.msra.mxu0 0
    %5010 = vmatprep.subr.bf16.mxu0 0
    %5011 = vmatpush1.bf16.msra.mxu0 0
    %5012 = vmatprep.subr.bf16.mxu0 0
    %5013 = vmatpush1.bf16.msra.mxu0 0
    %5014 = vmatprep.subr.bf16.mxu0 0
    %5015 = vmatpush1.bf16.msra.mxu0 0
    %5016 = vmatprep.subr.bf16.mxu0 0
    %5017 = vmatpush1.bf16.msra.mxu0 0
    %5018 = vmatprep.subr.bf16.mxu0 0
    %5019 = vmatpush1.bf16.msra.mxu0 0
    %5020 = vmatprep.subr.bf16.mxu0 0
    %5021 = vmatpush1.bf16.msra.mxu0 0
    %5022 = vmatprep.subr.bf16.mxu0 0
    %5023 = vmatpush1.bf16.msra.mxu0 0
    %5024 = vmatprep.mubr.bf16.mxu0 0
    %5025 = vmatmul.mubr.bf16.gmra.mrb[0].mxu0 %v4981
    %v5026 = vpop.f32.mrb[0].mxu0
    %v5027 = vadd.f32 0.0, %v5026
    %v5028 = vpop.f32.mrb[0].mxu0
    %v5029 = vpop.f32.mrb[0].mxu0
    %v5030 = vadd.f32 0.0, %v5029
    %v5031 = vpop.f32.mrb[0].mxu0
    %5032 = vmatprep.mubr.bf16.mxu0 0
    %5033 = vmatmul.mubr.bf16.gmra.mrb[0].mxu0 %v4984
    %v5034 = vpop.f32.mrb[0].mxu0
    %v5035 = vadd.f32 0.0, %v5034
    %v5036 = vpop.f32.mrb[0].mxu0
    %v5037 = vpop.f32.mrb[0].mxu0
    %v5038 = vadd.f32 0.0, %v5037
    %v5039 = vpop.f32.mrb[0].mxu0
    %5040 = vmatprep.mubr.bf16.mxu0 0
    %5041 = vmatmul.mubr.bf16.gmra.mrb[0].mxu0 %v4987
    %v5042 = vpop.f32.mrb[0].mxu0
    %v5043 = vadd.f32 0.0, %v5042
    %v5044 = vpop.f32.mrb[0].mxu0
    %v5045 = vpop.f32.mrb[0].mxu0
    %v5046 = vadd.f32 0.0, %v5045
    %v5047 = vpop.f32.mrb[0].mxu0
    %5048 = vmatprep.mubr.bf16.mxu0 0
    %5049 = vmatmul.mubr.bf16.gmra.mrb[0].mxu0 %v4990
    %v5050 = vpop.f32.mrb[0].mxu0
    %v5051 = vadd.f32 0.0, %v5050
    %v5052 = vpop.f32.mrb[0].mxu0
    %v5053 = vpop.f32.mrb[0].mxu0
    %v5054 = vadd.f32 0.0, %v5053
    %v5055 = vpop.f32.mrb[0].mxu0
    %5056 = vdwg.mxu0
    %5073 = vrot.lane.b32.xlu0 %v1502, 16
    %v5074 = vpop.permute.xlu0 %5073
    %5075 = vrot.lane.b32.xlu0 %v1505, 16
    %v5076 = vpop.permute.xlu0 %5075
    %5077 = vrot.lane.b32.xlu0 %v1510, 16
    %v5078 = vpop.permute.xlu0 %5077
    %5079 = vrot.lane.b32.xlu0 %v1513, 16
    %v5080 = vpop.permute.xlu0 %5079
    %5081 = vrot.lane.b32.xlu0 %v1518, 16
    %v5082 = vpop.permute.xlu0 %5081
    %5083 = vrot.lane.b32.xlu0 %v1521, 16
    %v5084 = vpop.permute.xlu0 %5083
    %5085 = vrot.lane.b32.xlu0 %v1526, 16
    %v5086 = vpop.permute.xlu0 %5085
    %5087 = vrot.lane.b32.xlu0 %v1529, 16
    %v5088 = vpop.permute.xlu0 %5087
    %5089 = vrot.lane.b32.xlu0 %v1595, 16
    %v5090 = vpop.permute.xlu0 %5089
    %5091 = vrot.lane.b32.xlu0 %v1598, 16
    %v5092 = vpop.permute.xlu0 %5091
    %5093 = vrot.lane.b32.xlu0 %v1603, 16
    %v5094 = vpop.permute.xlu0 %5093
    %5095 = vrot.lane.b32.xlu0 %v1606, 16
    %v5096 = vpop.permute.xlu0 %5095
    %5097 = vrot.lane.b32.xlu0 %v1611, 16
    %v5098 = vpop.permute.xlu0 %5097
    %5099 = vrot.lane.b32.xlu0 %v1614, 16
    %v5100 = vpop.permute.xlu0 %5099
    %5101 = vrot.lane.b32.xlu0 %v1619, 16
    %v5102 = vpop.permute.xlu0 %5101
    %5103 = vrot.lane.b32.xlu0 %v1622, 16
    %v5104 = vpop.permute.xlu0 %5103
    %5137 = vrot.lane.b32.xlu0 %v2078, 32
    %v5138 = vpop.permute.xlu0 %5137
    %5139 = vrot.lane.b32.xlu0 %v2081, 32
    %v5140 = vpop.permute.xlu0 %5139
    %5141 = vrot.lane.b32.xlu0 %v2086, 32
    %v5142 = vpop.permute.xlu0 %5141
    %5143 = vrot.lane.b32.xlu0 %v2089, 32
    %v5144 = vpop.permute.xlu0 %5143
    %5145 = vrot.lane.b32.xlu0 %v2094, 32
    %v5146 = vpop.permute.xlu0 %5145
    %5147 = vrot.lane.b32.xlu0 %v2097, 32
    %v5148 = vpop.permute.xlu0 %5147
    %5149 = vrot.lane.b32.xlu0 %v2102, 32
    %v5150 = vpop.permute.xlu0 %5149
    %5151 = vrot.lane.b32.xlu0 %v2105, 32
    %v5152 = vpop.permute.xlu0 %5151
    %5153 = vrot.lane.b32.xlu0 %v2167, 32
    %v5154 = vpop.permute.xlu0 %5153
    %5155 = vrot.lane.b32.xlu0 %v2170, 32
    %v5156 = vpop.permute.xlu0 %5155
    %5157 = vrot.lane.b32.xlu0 %v2175, 32
    %v5158 = vpop.permute.xlu0 %5157
    %5159 = vrot.lane.b32.xlu0 %v2178, 32
    %v5160 = vpop.permute.xlu0 %5159
    %5161 = vrot.lane.b32.xlu0 %v2183, 32
    %v5162 = vpop.permute.xlu0 %5161
    %5163 = vrot.lane.b32.xlu0 %v2186, 32
    %v5164 = vpop.permute.xlu0 %5163
    %5165 = vrot.lane.b32.xlu0 %v2191, 32
    %v5166 = vpop.permute.xlu0 %5165
    %5167 = vrot.lane.b32.xlu0 %v2194, 32
    %v5168 = vpop.permute.xlu0 %5167
    %5201 = vrot.lane.b32.xlu0 %v2650, 48
    %v5202 = vpop.permute.xlu0 %5201
    %5203 = vrot.lane.b32.xlu0 %v2653, 48
    %v5204 = vpop.permute.xlu0 %5203
    %5205 = vrot.lane.b32.xlu0 %v2658, 48
    %v5206 = vpop.permute.xlu0 %5205
    %5207 = vrot.lane.b32.xlu0 %v2661, 48
    %v5208 = vpop.permute.xlu0 %5207
    %5209 = vrot.lane.b32.xlu0 %v2666, 48
    %v5210 = vpop.permute.xlu0 %5209
    %5211 = vrot.lane.b32.xlu0 %v2669, 48
    %v5212 = vpop.permute.xlu0 %5211
    %5213 = vrot.lane.b32.xlu0 %v2674, 48
    %v5214 = vpop.permute.xlu0 %5213
    %5215 = vrot.lane.b32.xlu0 %v2677, 48
    %v5216 = vpop.permute.xlu0 %5215
    %5217 = vrot.lane.b32.xlu0 %v2739, 48
    %v5218 = vpop.permute.xlu0 %5217
    %5219 = vrot.lane.b32.xlu0 %v2742, 48
    %v5220 = vpop.permute.xlu0 %5219
    %5221 = vrot.lane.b32.xlu0 %v2747, 48
    %v5222 = vpop.permute.xlu0 %5221
    %5223 = vrot.lane.b32.xlu0 %v2750, 48
    %v5224 = vpop.permute.xlu0 %5223
    %5225 = vrot.lane.b32.xlu0 %v2755, 48
    %v5226 = vpop.permute.xlu0 %5225
    %5227 = vrot.lane.b32.xlu0 %v2758, 48
    %v5228 = vpop.permute.xlu0 %5227
    %5229 = vrot.lane.b32.xlu0 %v2763, 48
    %v5230 = vpop.permute.xlu0 %5229
    %5231 = vrot.lane.b32.xlu0 %v2766, 48
    %v5232 = vpop.permute.xlu0 %5231
    %5265 = vrot.lane.b32.xlu0 %v3222, 64
    %v5266 = vpop.permute.xlu0 %5265
    %5267 = vrot.lane.b32.xlu0 %v3225, 64
    %v5268 = vpop.permute.xlu0 %5267
    %5269 = vrot.lane.b32.xlu0 %v3230, 64
    %v5270 = vpop.permute.xlu0 %5269
    %5271 = vrot.lane.b32.xlu0 %v3233, 64
    %v5272 = vpop.permute.xlu0 %5271
    %5273 = vrot.lane.b32.xlu0 %v3238, 64
    %v5274 = vpop.permute.xlu0 %5273
    %5275 = vrot.lane.b32.xlu0 %v3241, 64
    %v5276 = vpop.permute.xlu0 %5275
    %5277 = vrot.lane.b32.xlu0 %v3246, 64
    %v5278 = vpop.permute.xlu0 %5277
    %5279 = vrot.lane.b32.xlu0 %v3249, 64
    %v5280 = vpop.permute.xlu0 %5279
    %5281 = vrot.lane.b32.xlu0 %v3311, 64
    %v5282 = vpop.permute.xlu0 %5281
    %5283 = vrot.lane.b32.xlu0 %v3314, 64
    %v5284 = vpop.permute.xlu0 %5283
    %5285 = vrot.lane.b32.xlu0 %v3319, 64
    %v5286 = vpop.permute.xlu0 %5285
    %5287 = vrot.lane.b32.xlu0 %v3322, 64
    %v5288 = vpop.permute.xlu0 %5287
    %5289 = vrot.lane.b32.xlu0 %v3327, 64
    %v5290 = vpop.permute.xlu0 %5289
    %5291 = vrot.lane.b32.xlu0 %v3330, 64
    %v5292 = vpop.permute.xlu0 %5291
    %5293 = vrot.lane.b32.xlu0 %v3335, 64
    %v5294 = vpop.permute.xlu0 %5293
    %5295 = vrot.lane.b32.xlu0 %v3338, 64
    %v5296 = vpop.permute.xlu0 %5295
    %5329 = vrot.lane.b32.xlu0 %v3794, 80
    %v5330 = vpop.permute.xlu0 %5329
    %5331 = vrot.lane.b32.xlu0 %v3797, 80
    %v5332 = vpop.permute.xlu0 %5331
    %5333 = vrot.lane.b32.xlu0 %v3802, 80
    %v5334 = vpop.permute.xlu0 %5333
    %5335 = vrot.lane.b32.xlu0 %v3805, 80
    %v5336 = vpop.permute.xlu0 %5335
    %5337 = vrot.lane.b32.xlu0 %v3810, 80
    %v5338 = vpop.permute.xlu0 %5337
    %5339 = vrot.lane.b32.xlu0 %v3813, 80
    %v5340 = vpop.permute.xlu0 %5339
    %5341 = vrot.lane.b32.xlu0 %v3818, 80
    %v5342 = vpop.permute.xlu0 %5341
    %5343 = vrot.lane.b32.xlu0 %v3821, 80
    %v5344 = vpop.permute.xlu0 %5343
    %5345 = vrot.lane.b32.xlu0 %v3883, 80
    %v5346 = vpop.permute.xlu0 %5345
    %5347 = vrot.lane.b32.xlu0 %v3886, 80
    %v5348 = vpop.permute.xlu0 %5347
    %5349 = vrot.lane.b32.xlu0 %v3891, 80
    %v5350 = vpop.permute.xlu0 %5349
    %5351 = vrot.lane.b32.xlu0 %v3894, 80
    %v5352 = vpop.permute.xlu0 %5351
    %5353 = vrot.lane.b32.xlu0 %v3899, 80
    %v5354 = vpop.permute.xlu0 %5353
    %5355 = vrot.lane.b32.xlu0 %v3902, 80
    %v5356 = vpop.permute.xlu0 %5355
    %5357 = vrot.lane.b32.xlu0 %v3907, 80
    %v5358 = vpop.permute.xlu0 %5357
    %5359 = vrot.lane.b32.xlu0 %v3910, 80
    %v5360 = vpop.permute.xlu0 %5359
    %5393 = vrot.lane.b32.xlu0 %v4366, 96
    %v5394 = vpop.permute.xlu0 %5393
    %5395 = vrot.lane.b32.xlu0 %v4369, 96
    %v5396 = vpop.permute.xlu0 %5395
    %5397 = vrot.lane.b32.xlu0 %v4374, 96
    %v5398 = vpop.permute.xlu0 %5397
    %5399 = vrot.lane.b32.xlu0 %v4377, 96
    %v5400 = vpop.permute.xlu0 %5399
    %5401 = vrot.lane.b32.xlu0 %v4382, 96
    %v5402 = vpop.permute.xlu0 %5401
    %5403 = vrot.lane.b32.xlu0 %v4385, 96
    %v5404 = vpop.permute.xlu0 %5403
    %5405 = vrot.lane.b32.xlu0 %v4390, 96
    %v5406 = vpop.permute.xlu0 %5405
    %5407 = vrot.lane.b32.xlu0 %v4393, 96
    %v5408 = vpop.permute.xlu0 %5407
    %5409 = vrot.lane.b32.xlu0 %v4455, 96
    %v5410 = vpop.permute.xlu0 %5409
    %5411 = vrot.lane.b32.xlu0 %v4458, 96
    %v5412 = vpop.permute.xlu0 %5411
    %5413 = vrot.lane.b32.xlu0 %v4463, 96
    %v5414 = vpop.permute.xlu0 %5413
    %5415 = vrot.lane.b32.xlu0 %v4466, 96
    %v5416 = vpop.permute.xlu0 %5415
    %5417 = vrot.lane.b32.xlu0 %v4471, 96
    %v5418 = vpop.permute.xlu0 %5417
    %5419 = vrot.lane.b32.xlu0 %v4474, 96
    %v5420 = vpop.permute.xlu0 %5419
    %5421 = vrot.lane.b32.xlu0 %v4479, 96
    %v5422 = vpop.permute.xlu0 %5421
    %5423 = vrot.lane.b32.xlu0 %v4482, 96
    %v5424 = vpop.permute.xlu0 %5423
    %5457 = vrot.lane.b32.xlu0 %v4938, 112
    %v5458 = vpop.permute.xlu0 %5457
    %5459 = vrot.lane.b32.xlu0 %v4941, 112
    %v5460 = vpop.permute.xlu0 %5459
    %5461 = vrot.lane.b32.xlu0 %v4946, 112
    %v5462 = vpop.permute.xlu0 %5461
    %5463 = vrot.lane.b32.xlu0 %v4949, 112
    %v5464 = vpop.permute.xlu0 %5463
    %5465 = vrot.lane.b32.xlu0 %v4954, 112
    %v5466 = vpop.permute.xlu0 %5465
    %5467 = vrot.lane.b32.xlu0 %v4957, 112
    %v5468 = vpop.permute.xlu0 %5467
    %5469 = vrot.lane.b32.xlu0 %v4962, 112
    %v5470 = vpop.permute.xlu0 %5469
    %5471 = vrot.lane.b32.xlu0 %v4965, 112
    %v5472 = vpop.permute.xlu0 %5471
    %5473 = vrot.lane.b32.xlu0 %v5027, 112
    %v5474 = vpop.permute.xlu0 %5473
    %5475 = vrot.lane.b32.xlu0 %v5030, 112
    %v5476 = vpop.permute.xlu0 %5475
    %5477 = vrot.lane.b32.xlu0 %v5035, 112
    %v5478 = vpop.permute.xlu0 %5477
    %5479 = vrot.lane.b32.xlu0 %v5038, 112
    %v5480 = vpop.permute.xlu0 %5479
    %5481 = vrot.lane.b32.xlu0 %v5043, 112
    %v5482 = vpop.permute.xlu0 %5481
    %5483 = vrot.lane.b32.xlu0 %v5046, 112
    %v5484 = vpop.permute.xlu0 %5483
    %5485 = vrot.lane.b32.xlu0 %v5051, 112
    %v5486 = vpop.permute.xlu0 %5485
    %5487 = vrot.lane.b32.xlu0 %v5054, 112
    %v5488 = vpop.permute.xlu0 %5487
    %v5505 = vsel %vm511, %v922, %v5074
    %v5506 = vsel %vm511, %v925, %v5076
    %v5507 = vsel %vm511, %v930, %v5078
    %v5508 = vsel %vm511, %v933, %v5080
    %v5509 = vsel %vm511, %v938, %v5082
    %v5510 = vsel %vm511, %v941, %v5084
    %v5511 = vsel %vm511, %v946, %v5086
    %v5512 = vsel %vm511, %v949, %v5088
    %v5513 = vsel %vm511, %v999, %v5090
    %v5514 = vsel %vm511, %v1002, %v5092
    %v5515 = vsel %vm511, %v1007, %v5094
    %v5516 = vsel %vm511, %v1010, %v5096
    %v5517 = vsel %vm511, %v1015, %v5098
    %v5518 = vsel %vm511, %v1018, %v5100
    %v5519 = vsel %vm511, %v1023, %v5102
    %v5520 = vsel %vm511, %v1026, %v5104
    %vm5521 = vcmask 261120
    %v5522 = vsel %vm5521, %v5505, %v5138
    %v5523 = vsel %vm5521, %v5506, %v5140
    %v5524 = vsel %vm5521, %v5507, %v5142
    %v5525 = vsel %vm5521, %v5508, %v5144
    %v5526 = vsel %vm5521, %v5509, %v5146
    %v5527 = vsel %vm5521, %v5510, %v5148
    %v5528 = vsel %vm5521, %v5511, %v5150
    %v5529 = vsel %vm5521, %v5512, %v5152
    %v5530 = vsel %vm5521, %v5513, %v5154
    %v5531 = vsel %vm5521, %v5514, %v5156
    %v5532 = vsel %vm5521, %v5515, %v5158
    %v5533 = vsel %vm5521, %v5516, %v5160
    %v5534 = vsel %vm5521, %v5517, %v5162
    %v5535 = vsel %vm5521, %v5518, %v5164
    %v5536 = vsel %vm5521, %v5519, %v5166
    %v5537 = vsel %vm5521, %v5520, %v5168
    %vm5538 = vcmask 392192
    %v5539 = vsel %vm5538, %v5522, %v5202
    %v5540 = vsel %vm5538, %v5523, %v5204
    %v5541 = vsel %vm5538, %v5524, %v5206
    %v5542 = vsel %vm5538, %v5525, %v5208
    %v5543 = vsel %vm5538, %v5526, %v5210
    %v5544 = vsel %vm5538, %v5527, %v5212
    %v5545 = vsel %vm5538, %v5528, %v5214
    %v5546 = vsel %vm5538, %v5529, %v5216
    %v5547 = vsel %vm5538, %v5530, %v5218
    %v5548 = vsel %vm5538, %v5531, %v5220
    %v5549 = vsel %vm5538, %v5532, %v5222
    %v5550 = vsel %vm5538, %v5533, %v5224
    %v5551 = vsel %vm5538, %v5534, %v5226
    %v5552 = vsel %vm5538, %v5535, %v5228
    %v5553 = vsel %vm5538, %v5536, %v5230
    %v5554 = vsel %vm5538, %v5537, %v5232
    %v5555 = vsel %vm690, %v5539, %v5266
    %v5556 = vsel %vm690, %v5540, %v5268
    %v5557 = vsel %vm690, %v5541, %v5270
    %v5558 = vsel %vm690, %v5542, %v5272
    %v5559 = vsel %vm690, %v5543, %v5274
    %v5560 = vsel %vm690, %v5544, %v5276
    %v5561 = vsel %vm690, %v5545, %v5278
    %v5562 = vsel %vm690, %v5546, %v5280
    %v5563 = vsel %vm690, %v5547, %v5282
    %v5564 = vsel %vm690, %v5548, %v5284
    %v5565 = vsel %vm690, %v5549, %v5286
    %v5566 = vsel %vm690, %v5550, %v5288
    %v5567 = vsel %vm690, %v5551, %v5290
    %v5568 = vsel %vm690, %v5552, %v5292
    %v5569 = vsel %vm690, %v5553, %v5294
    %v5570 = vsel %vm690, %v5554, %v5296
    %vm5571 = vcmask 654336
    %v5572 = vsel %vm5571, %v5555, %v5330
    %v5573 = vsel %vm5571, %v5556, %v5332
    %v5574 = vsel %vm5571, %v5557, %v5334
    %v5575 = vsel %vm5571, %v5558, %v5336
    %v5576 = vsel %vm5571, %v5559, %v5338
    %v5577 = vsel %vm5571, %v5560, %v5340
    %v5578 = vsel %vm5571, %v5561, %v5342
    %v5579 = vsel %vm5571, %v5562, %v5344
    %v5580 = vsel %vm5571, %v5563, %v5346
    %v5581 = vsel %vm5571, %v5564, %v5348
    %v5582 = vsel %vm5571, %v5565, %v5350
    %v5583 = vsel %vm5571, %v5566, %v5352
    %v5584 = vsel %vm5571, %v5567, %v5354
    %v5585 = vsel %vm5571, %v5568, %v5356
    %v5586 = vsel %vm5571, %v5569, %v5358
    %v5587 = vsel %vm5571, %v5570, %v5360
    %vm5588 = vcmask 785408
    %v5589 = vsel %vm5588, %v5572, %v5394
    %v5590 = vsel %vm5588, %v5573, %v5396
    %v5591 = vsel %vm5588, %v5574, %v5398
    %v5592 = vsel %vm5588, %v5575, %v5400
    %v5593 = vsel %vm5588, %v5576, %v5402
    %v5594 = vsel %vm5588, %v5577, %v5404
    %v5595 = vsel %vm5588, %v5578, %v5406
    %v5596 = vsel %vm5588, %v5579, %v5408
    %v5597 = vsel %vm5588, %v5580, %v5410
    %v5598 = vsel %vm5588, %v5581, %v5412
    %v5599 = vsel %vm5588, %v5582, %v5414
    %v5600 = vsel %vm5588, %v5583, %v5416
    %v5601 = vsel %vm5588, %v5584, %v5418
    %v5602 = vsel %vm5588, %v5585, %v5420
    %v5603 = vsel %vm5588, %v5586, %v5422
    %v5604 = vsel %vm5588, %v5587, %v5424
    %vm5605 = vcmask 916480
    %v5606 = vsel %vm5605, %v5589, %v5458
    %v5607 = vsel %vm5605, %v5590, %v5460
    %v5608 = vsel %vm5605, %v5591, %v5462
    %v5609 = vsel %vm5605, %v5592, %v5464
    %v5610 = vsel %vm5605, %v5593, %v5466
    %v5611 = vsel %vm5605, %v5594, %v5468
    %v5612 = vsel %vm5605, %v5595, %v5470
    %v5613 = vsel %vm5605, %v5596, %v5472
    %v5614 = vsel %vm5605, %v5597, %v5474
    %v5615 = vsel %vm5605, %v5598, %v5476
    %v5616 = vsel %vm5605, %v5599, %v5478
    %v5617 = vsel %vm5605, %v5600, %v5480
    %v5618 = vsel %vm5605, %v5601, %v5482
    %v5619 = vsel %vm5605, %v5602, %v5484
    %v5620 = vsel %vm5605, %v5603, %v5486
    %v5621 = vsel %vm5605, %v5604, %v5488
    %v5622 = vpack.c.bf16 %v5607, %v5606
    %v5623 = vpack.c.bf16 %v5609, %v5608
    %v5624 = vpack.c.bf16 %v5611, %v5610
    %v5625 = vpack.c.bf16 %v5613, %v5612
    %v5626 = vpack.c.bf16 %v5615, %v5614
    %v5627 = vpack.c.bf16 %v5617, %v5616
    %v5628 = vpack.c.bf16 %v5619, %v5618
    %v5629 = vpack.c.bf16 %v5621, %v5620
    %v5630 = vld [vmem:[#allocation8] sm:$0xf]
    %v5631 = vld [vmem:[#allocation8 + $0x4] sm:$0xf]
    %v5632 = vld [vmem:[#allocation8 + $0x8] sm:$0xf]
    %v5633 = vld [vmem:[#allocation8 + $0xc] sm:$0xf]
    %v5634 = vld [vmem:[#allocation8 + $0x10] sm:$0xf]
    %v5635 = vld [vmem:[#allocation8 + $0x14] sm:$0xf]
    %v5636 = vld [vmem:[#allocation8 + $0x18] sm:$0xf]
    %v5637 = vld [vmem:[#allocation8 + $0x1c] sm:$0xf]
    %v5638 = vld [vmem:[#allocation8 + $0x20] sm:$0xf]
    %v5639 = vld [vmem:[#allocation8 + $0x24] sm:$0xf]
    %v5640 = vld [vmem:[#allocation8 + $0x28] sm:$0xf]
    %v5641 = vld [vmem:[#allocation8 + $0x2c] sm:$0xf]
    %v5642 = vld [vmem:[#allocation8 + $0x30] sm:$0xf]
    %v5643 = vld [vmem:[#allocation8 + $0x34] sm:$0xf]
    %v5644 = vld [vmem:[#allocation8 + $0x38] sm:$0xf]
    %v5645 = vld [vmem:[#allocation8 + $0x3c] sm:$0xf]
    %v5646 = vld [vmem:[%s4] sm:$0x1]
    %v5648 = vlaneseq
    %v5649 = vshrl.u32 %v5648, 7
    %v5650 = vsub.s32 0, %v5649
    %v5651 = vrot.slane %v5646, %v5650
    %v5669 = vunpack.c.l.b16 %v5630
    %v5670 = vunpack.c.l.b16 %v5631
    %v5671 = vunpack.c.l.b16 %v5632
    %v5672 = vunpack.c.l.b16 %v5633
    %v5673 = vunpack.c.l.b16 %v5634
    %v5674 = vunpack.c.l.b16 %v5635
    %v5675 = vunpack.c.l.b16 %v5636
    %v5676 = vunpack.c.l.b16 %v5637
    %v5677 = vunpack.c.l.b16 %v5638
    %v5678 = vunpack.c.l.b16 %v5639
    %v5679 = vunpack.c.l.b16 %v5640
    %v5680 = vunpack.c.l.b16 %v5641
    %v5681 = vunpack.c.l.b16 %v5642
    %v5682 = vunpack.c.l.b16 %v5643
    %v5683 = vunpack.c.l.b16 %v5644
    %v5684 = vunpack.c.l.b16 %v5645
    %v5685 = vpack.c.b16 %v5670, %v5669
    %v5686 = vpack.c.b16 %v5672, %v5671
    %v5687 = vpack.c.b16 %v5674, %v5673
    %v5688 = vpack.c.b16 %v5676, %v5675
    %v5689 = vpack.c.b16 %v5678, %v5677
    %v5690 = vpack.c.b16 %v5680, %v5679
    %v5691 = vpack.c.b16 %v5682, %v5681
    %v5692 = vpack.c.b16 %v5684, %v5683
    %5701 = vmatprep.subr.bf16.mxu0 0
    %5702 = vmatpush1.bf16.msra.mxu0 %v5685
    %5703 = vmatprep.subr.bf16.mxu0 0
    %5704 = vmatpush1.bf16.msra.mxu0 %v5686
    %5705 = vmatprep.subr.bf16.mxu0 0
    %5706 = vmatpush1.bf16.msra.mxu0 %v5687
    %5707 = vmatprep.subr.bf16.mxu0 0
    %5708 = vmatpush1.bf16.msra.mxu0 %v5688
    %5709 = vmatprep.subr.bf16.mxu0 0
    %5710 = vmatpush1.bf16.msra.mxu0 %v5689
    %5711 = vmatprep.subr.bf16.mxu0 0
    %5712 = vmatpush1.bf16.msra.mxu0 %v5690
    %5713 = vmatprep.subr.bf16.mxu0 0
    %5714 = vmatpush1.bf16.msra.mxu0 %v5691
    %5715 = vmatprep.subr.bf16.mxu0 0
    %5716 = vmatpush1.bf16.msra.mxu0 %v5692
    %5717 = vmatprep.subr.bf16.mxu0 0
    %5718 = vmatpush1.bf16.msra.mxu0 0
    %5719 = vmatprep.subr.bf16.mxu0 0
    %5720 = vmatpush1.bf16.msra.mxu0 0
    %5721 = vmatprep.subr.bf16.mxu0 0
    %5722 = vmatpush1.bf16.msra.mxu0 0
    %5723 = vmatprep.subr.bf16.mxu0 0
    %5724 = vmatpush1.bf16.msra.mxu0 0
    %5725 = vmatprep.subr.bf16.mxu0 0
    %5726 = vmatpush1.bf16.msra.mxu0 0
    %5727 = vmatprep.subr.bf16.mxu0 0
    %5728 = vmatpush1.bf16.msra.mxu0 0
    %5729 = vmatprep.subr.bf16.mxu0 0
    %5730 = vmatpush1.bf16.msra.mxu0 0
    %5731 = vmatprep.subr.bf16.mxu0 0
    %5732 = vmatpush1.bf16.msra.mxu0 0
    %5733 = vmatprep.mubr.bf16.mxu0 0
    %5734 = vmatmul.mubr.bf16.gmra.mrb[0].mxu0 %v5622
    %v5735 = vpop.f32.mrb[0].mxu0
    %v5736 = vadd.f32 %v5651, %v5735
    %v5737 = vpop.f32.mrb[0].mxu0
    %v5738 = vpop.f32.mrb[0].mxu0
    %v5739 = vadd.f32 %v5651, %v5738
    %v5740 = vpop.f32.mrb[0].mxu0
    %5741 = vmatprep.mubr.bf16.mxu0 0
    %5742 = vmatmul.mubr.bf16.gmra.mrb[0].mxu0 %v5623
    %v5743 = vpop.f32.mrb[0].mxu0
    %v5744 = vadd.f32 %v5651, %v5743
    %v5745 = vpop.f32.mrb[0].mxu0
    %v5746 = vpop.f32.mrb[0].mxu0
    %v5747 = vadd.f32 %v5651, %v5746
    %v5748 = vpop.f32.mrb[0].mxu0
    %5749 = vmatprep.mubr.bf16.mxu0 0
    %5750 = vmatmul.mubr.bf16.gmra.mrb[0].mxu0 %v5624
    %v5751 = vpop.f32.mrb[0].mxu0
    %v5752 = vadd.f32 %v5651, %v5751
    %v5753 = vpop.f32.mrb[0].mxu0
    %v5754 = vpop.f32.mrb[0].mxu0
    %v5755 = vadd.f32 %v5651, %v5754
    %v5756 = vpop.f32.mrb[0].mxu0
    %5757 = vmatprep.mubr.bf16.mxu0 0
    %5758 = vmatmul.mubr.bf16.gmra.mrb[0].mxu0 %v5625
    %v5759 = vpop.f32.mrb[0].mxu0
    %v5760 = vadd.f32 %v5651, %v5759
    %v5761 = vpop.f32.mrb[0].mxu0
    %v5762 = vpop.f32.mrb[0].mxu0
    %v5763 = vadd.f32 %v5651, %v5762
    %v5764 = vpop.f32.mrb[0].mxu0
    %5765 = vmatprep.mubr.bf16.mxu0 0
    %5766 = vmatmul.mubr.bf16.gmra.mrb[0].mxu0 %v5626
    %v5767 = vpop.f32.mrb[0].mxu0
    %v5768 = vadd.f32 %v5651, %v5767
    %v5769 = vpop.f32.mrb[0].mxu0
    %v5770 = vpop.f32.mrb[0].mxu0
    %v5771 = vadd.f32 %v5651, %v5770
    %v5772 = vpop.f32.mrb[0].mxu0
    %5773 = vmatprep.mubr.bf16.mxu0 0
    %5774 = vmatmul.mubr.bf16.gmra.mrb[0].mxu0 %v5627
    %v5775 = vpop.f32.mrb[0].mxu0
    %v5776 = vadd.f32 %v5651, %v5775
    %v5777 = vpop.f32.mrb[0].mxu0
    %v5778 = vpop.f32.mrb[0].mxu0
    %v5779 = vadd.f32 %v5651, %v5778
    %v5780 = vpop.f32.mrb[0].mxu0
    %5781 = vmatprep.mubr.bf16.mxu0 0
    %5782 = vmatmul.mubr.bf16.gmra.mrb[0].mxu0 %v5628
    %v5783 = vpop.f32.mrb[0].mxu0
    %v5784 = vadd.f32 %v5651, %v5783
    %v5785 = vpop.f32.mrb[0].mxu0
    %v5786 = vpop.f32.mrb[0].mxu0
    %v5787 = vadd.f32 %v5651, %v5786
    %v5788 = vpop.f32.mrb[0].mxu0
    %5789 = vmatprep.mubr.bf16.mxu0 0
    %5790 = vmatmul.mubr.bf16.gmra.mrb[0].mxu0 %v5629
    %v5791 = vpop.f32.mrb[0].mxu0
    %v5792 = vadd.f32 %v5651, %v5791
    %v5793 = vpop.f32.mrb[0].mxu0
    %v5794 = vpop.f32.mrb[0].mxu0
    %v5795 = vadd.f32 %v5651, %v5794
    %v5796 = vpop.f32.mrb[0].mxu0
    %5797 = vdwg.mxu0
    %5798 = vst [vmem:[#allocation10] sm:$0xff] %v5736
    %5799 = vst [vmem:[#allocation10 + $0x8] sm:$0xff] %v5739
    %5800 = vst [vmem:[#allocation10 + $0x10] sm:$0xff] %v5744
    %5801 = vst [vmem:[#allocation10 + $0x18] sm:$0xff] %v5747
    %5802 = vst [vmem:[#allocation10 + $0x20] sm:$0xff] %v5752
    %5803 = vst [vmem:[#allocation10 + $0x28] sm:$0xff] %v5755
    %5804 = vst [vmem:[#allocation10 + $0x30] sm:$0xff] %v5760
    %5805 = vst [vmem:[#allocation10 + $0x38] sm:$0xff] %v5763
    %5806 = vst [vmem:[#allocation10 + $0x40] sm:$0xff] %v5768
    %5807 = vst [vmem:[#allocation10 + $0x48] sm:$0xff] %v5771
    %5808 = vst [vmem:[#allocation10 + $0x50] sm:$0xff] %v5776
    %5809 = vst [vmem:[#allocation10 + $0x58] sm:$0xff] %v5779
    %5810 = vst [vmem:[#allocation10 + $0x60] sm:$0xff] %v5784
    %5811 = vst [vmem:[#allocation10 + $0x68] sm:$0xff] %v5787
    %5812 = vst [vmem:[#allocation10 + $0x70] sm:$0xff] %v5792
    %5813 = vst [vmem:[#allocation10 + $0x78] sm:$0xff] %v5795
    // Predicated region
    $region38: #{tpu_custom_call.1} parent=1 // pred_check
      _
    $region39: #{tpu_custom_call.1} parent=1 // pred_check_branch
      %5815 = sbr.rel (0) target = $region41
    $region40: #{tpu_custom_call.1} parent=1 // pred_region
      %s5817 = ssub.s32 2048, 2048
      %5818 = vsyncadd [#allocation4], %s5817
      %s5819 = sshll.u32 [#allocation10], 4
      %s5820 = int_to_ptr.vmem [resolvable:$true] %s5819
      %5825 = dma.vmem_to_hbm [thread:$0]  %s5820, 2048, %s5, [#allocation4], 128, 128, 8
    $region41: #{tpu_custom_call.1} parent=1 // pred_fallthru
      _
    // Predicated region
    $region42: #{tpu_custom_call.1} parent=1 // pred_check
      _
    $region43: #{tpu_custom_call.1} parent=1 // pred_check_branch
      %5827 = sbr.rel (0) target = $region45
    $region44: #{tpu_custom_call.1} parent=1 // pred_region
      %5828 = dma.done [#allocation4], 2048
    $region45: #{tpu_custom_call.1} parent=1 // pred_fallthru
      _
    %5829 = vsyncpa [#allocation3], 1
    %5830 = vsyncpa [#allocation6], 1
    %5831 = vsyncpa [#allocation9], 1
    %5832 = vsyncpa [#allocation4], 1

</llo_original>
